<compile_context>
chip_gen: v7x
topology: tpu7x:2x2x1
jax: 0.10.0
libtpu: 0.0.40
codegen_flags: <defaults>
</compile_context>

<pallas_src>
import math
import functools

import jax
import jax.numpy as jnp
from jax.experimental import pallas as pl
from jax.experimental.pallas import tpu as pltpu


# ---------------------------------------------------------------------------
# Generation-aware VMEM budget & tile selection
# ---------------------------------------------------------------------------
def _derive_vmem_limit():
    mib = 1024 * 1024
    try:
        cap = int(pltpu.get_tpu_info().vmem_capacity_bytes)
    except Exception:
        cap = 64 * mib          # detection failed -> assume smallest (v7x-safe)
    # leave headroom for compiler-internal scratch / semaphores / DMA buffers
    return max(32 * mib, min(cap - 16 * mib, 112 * mib))


_VMEM_LIMIT = _derive_vmem_limit()
# Fraction of the cap budgeted for kernel-visible buffers (accumulator + the
# double-buffered input/output blocks); the rest is pipeline headroom.
_TILE_BUDGET = int(_VMEM_LIMIT * 0.6)

_ROW_TILES = (1024, 512, 256, 128, 64, 32, 16, 8)
_COL_TILES = (2048, 1024, 512, 256, 128)
_SEQ_TILES = (512, 256, 128, 64, 32, 16, 8)


def _divisor_tiles(dim, candidates):
    """Candidates that evenly divide `dim`, largest first; fallback = full dim."""
    tiles = [c for c in candidates if c <= dim and dim % c == 0]
    return tiles if tiles else [dim]


def _mm_vmem_bytes(tm, tn, tk, *, has_res):
    acc = tm * tn * 4                 # f32 accumulator scratch
    xbuf = 2 * tm * tk * 2            # double-buffered bf16 x block
    wbuf = 2 * tk * tn * 2            # double-buffered bf16 w block
    obuf = 2 * tm * tn * 2            # double-buffered out block
    bias = 2 * tn * 4
    res = 2 * tm * tn * 2 if has_res else 0
    return acc + xbuf + wbuf + obuf + bias + res


def _matmul_tiles(R, N, K, *, has_res, budget=_TILE_BUDGET):
    for tm in _divisor_tiles(R, _ROW_TILES):
        for tn in _divisor_tiles(N, _COL_TILES):
            for tk in _divisor_tiles(K, _COL_TILES):
                if _mm_vmem_bytes(tm, tn, tk, has_res=has_res) <= budget:
                    return tm, tn, tk
    return (_divisor_tiles(R, _ROW_TILES)[-1],
            _divisor_tiles(N, _COL_TILES)[-1],
            _divisor_tiles(K, _COL_TILES)[-1])


def _fused_dense_ln_tiles(R, E, K, *, budget=_TILE_BUDGET):
    """tn is pinned to the full feature dim E (LayerNorm needs the whole row)."""
    for tm in _divisor_tiles(R, _ROW_TILES):
        for tk in _divisor_tiles(K, _COL_TILES):
            if _mm_vmem_bytes(tm, E, tk, has_res=True) + 4 * E * 4 <= budget:
                return tm, tk
    return _divisor_tiles(R, _ROW_TILES)[-1], _divisor_tiles(K, _COL_TILES)[-1]


def _attn_vmem_bytes(tq, tkv, E):
    acc = tq * E * 4 + 2 * tq * 4         # f32 acc + m/l scratch
    qbuf = 2 * tq * E * 2
    kvbuf = 2 * 2 * tkv * E * 2
    obuf = 2 * tq * E * 2
    return acc + qbuf + kvbuf + obuf


def _attn_tiles(S, E, *, budget=_TILE_BUDGET):
    for tq in _divisor_tiles(S, _SEQ_TILES):          # big tq cuts K/V re-streaming
        for tkv in _divisor_tiles(S, _SEQ_TILES):
            if _attn_vmem_bytes(tq, tkv, E) <= budget:
                return tq, tkv
    return _divisor_tiles(S, _SEQ_TILES)[-1], _divisor_tiles(S, _SEQ_TILES)[-1]


def _ln_tiles(R, E, *, budget=_TILE_BUDGET):
    for tr in _divisor_tiles(R, _ROW_TILES):
        if 2 * 2 * tr * E * 2 + tr * E * 4 <= budget:
            return tr
    return _divisor_tiles(R, _ROW_TILES)[-1]


def _gelu_exact(x):
    # Matches torch.nn.functional.gelu default (erf-based, exact), in f32.
    return 0.5 * x * (1.0 + jax.lax.erf(x * (1.0 / math.sqrt(2.0))))


# ---------------------------------------------------------------------------
# Tiled matmul kernels: out = act(x @ W + b [+ residual])
# grid = (rows//tm, N//tn, K//tk), f32 VMEM accumulator, K axis "arbitrary".
# ---------------------------------------------------------------------------
def _matmul_bias_kernel(x_ref, w_ref, b_ref, o_ref, acc_ref, *, act):
    @pl.when(pl.program_id(2) == 0)
    def _():
        acc_ref[...] = jnp.zeros_like(acc_ref)

    acc_ref[...] += jnp.dot(x_ref[...], w_ref[...],
                            preferred_element_type=jnp.float32)

    @pl.when(pl.program_id(2) == pl.num_programs(2) - 1)
    def _():
        y = acc_ref[...] + b_ref[...].astype(jnp.float32)
        if act == "gelu":
            y = _gelu_exact(y)
        o_ref[...] = y.astype(o_ref.dtype)


def _matmul_bias_res_kernel(x_ref, w_ref, b_ref, r_ref, o_ref, acc_ref):
    @pl.when(pl.program_id(2) == 0)
    def _():
        acc_ref[...] = jnp.zeros_like(acc_ref)

    acc_ref[...] += jnp.dot(x_ref[...], w_ref[...],
                            preferred_element_type=jnp.float32)

    @pl.when(pl.program_id(2) == pl.num_programs(2) - 1)
    def _():
        y = (acc_ref[...] + b_ref[...].astype(jnp.float32)
             + r_ref[...].astype(jnp.float32))
        o_ref[...] = y.astype(o_ref.dtype)


def matmul_bias(x, w, b, *, act=None, residual=None, out_dtype=None):
    R, K = x.shape
    Kw, N = w.shape
    assert K == Kw, (x.shape, w.shape)
    if out_dtype is None:
        out_dtype = x.dtype

    tm, tn, tk = _matmul_tiles(R, N, K, has_res=residual is not None)
    grid = (R // tm, N // tn, K // tk)

    x_spec = pl.BlockSpec((tm, tk), lambda i, j, k: (i, k))
    w_spec = pl.BlockSpec((tk, tn), lambda i, j, k: (k, j))
    b_spec = pl.BlockSpec((1, tn), lambda i, j, k: (0, j))
    o_spec = pl.BlockSpec((tm, tn), lambda i, j, k: (i, j))

    if residual is None:
        kernel = functools.partial(_matmul_bias_kernel, act=act)
        in_specs = [x_spec, w_spec, b_spec]
        args = (x, w, b)
    else:
        assert act is None
        kernel = _matmul_bias_res_kernel
        r_spec = pl.BlockSpec((tm, tn), lambda i, j, k: (i, j))
        in_specs = [x_spec, w_spec, b_spec, r_spec]
        args = (x, w, b, residual)

    return pl.pallas_call(
        kernel,
        out_shape=jax.ShapeDtypeStruct((R, N), out_dtype),
        grid=grid,
        in_specs=in_specs,
        out_specs=o_spec,
        scratch_shapes=[pltpu.VMEM((tm, tn), jnp.float32)],
        compiler_params=pltpu.CompilerParams(
            dimension_semantics=("parallel", "parallel", "arbitrary"),
            vmem_limit_bytes=_VMEM_LIMIT),
    )(*args)


# ---------------------------------------------------------------------------
# Dense projection + residual + LayerNorm fused into one kernel epilogue.
# tn == E (full feature row resident in the f32 accumulator), grid=(R//tm,K//tk).
# Output is LN(x @ W + b + residual); the pre-LN sum is never written to HBM.
# ---------------------------------------------------------------------------
def _matmul_bias_res_ln_kernel(x_ref, w_ref, b_ref, r_ref, g_ref, bb_ref,
                               o_ref, acc_ref, *, eps):
    @pl.when(pl.program_id(1) == 0)
    def _():
        acc_ref[...] = jnp.zeros_like(acc_ref)

    acc_ref[...] += jnp.dot(x_ref[...], w_ref[...],
                            preferred_element_type=jnp.float32)

    @pl.when(pl.program_id(1) == pl.num_programs(1) - 1)
    def _():
        y = (acc_ref[...] + b_ref[...].astype(jnp.float32)
             + r_ref[...].astype(jnp.float32))
        mean = jnp.mean(y, axis=-1, keepdims=True)
        yc = y - mean                                   # two-pass variance (stable)
        var = jnp.mean(yc * yc, axis=-1, keepdims=True)
        yn = yc * jax.lax.rsqrt(var + eps)
        yn = yn * g_ref[...].astype(jnp.float32) + bb_ref[...].astype(jnp.float32)
        o_ref[...] = yn.astype(o_ref.dtype)


def matmul_bias_res_layernorm(x, w, b, residual, gamma, beta, *,
                              eps=1e-5, out_dtype=None):
    R, K = x.shape
    Kw, E = w.shape
    assert K == Kw
    if out_dtype is None:
        out_dtype = x.dtype

    tm, tk = _fused_dense_ln_tiles(R, E, K)
    grid = (R // tm, K // tk)

    return pl.pallas_call(
        functools.partial(_matmul_bias_res_ln_kernel, eps=eps),
        out_shape=jax.ShapeDtypeStruct((R, E), out_dtype),
        grid=grid,
        in_specs=[pl.BlockSpec((tm, tk), lambda i, k: (i, k)),
                  pl.BlockSpec((tk, E), lambda i, k: (k, 0)),
                  pl.BlockSpec((1, E), lambda i, k: (0, 0)),
                  pl.BlockSpec((tm, E), lambda i, k: (i, 0)),
                  pl.BlockSpec((1, E), lambda i, k: (0, 0)),
                  pl.BlockSpec((1, E), lambda i, k: (0, 0))],
        out_specs=pl.BlockSpec((tm, E), lambda i, k: (i, 0)),
        scratch_shapes=[pltpu.VMEM((tm, E), jnp.float32)],
        compiler_params=pltpu.CompilerParams(
            dimension_semantics=("parallel", "arbitrary"),
            vmem_limit_bytes=_VMEM_LIMIT),
    )(x, w, b, residual, gamma, beta)


# ---------------------------------------------------------------------------
# Flash-style attention over a packed (B, S, 3E) qkv tensor.
# No causal mask and a single "head" over the full E dim — this is exactly what
# the reference PhiAttention does (rotary_emb is identity, scale 1/sqrt(E)).
# The 1/sqrt(E) scale is applied in f32 inside the kernel.
# ---------------------------------------------------------------------------
def _flash_attn_kernel(q_ref, k_ref, v_ref, o_ref, m_sc, l_sc, acc_sc, *, scale):
    ki = pl.program_id(2)

    @pl.when(ki == 0)
    def _():
        m_sc[...] = jnp.full_like(m_sc, -jnp.inf)
        l_sc[...] = jnp.zeros_like(l_sc)
        acc_sc[...] = jnp.zeros_like(acc_sc)

    q = q_ref[0]                                      # (tq, E)  bf16
    k = k_ref[0]                                      # (tkv, E) bf16
    s = jax.lax.dot_general(q, k, (((1,), (1,)), ((), ())),
                            preferred_element_type=jnp.float32) * scale

    m_prev = m_sc[...]
    m_new = jnp.maximum(m_prev, jnp.max(s, axis=-1, keepdims=True))
    alpha = jnp.exp(m_prev - m_new)
    p = jnp.exp(s - m_new)
    l_sc[...] = alpha * l_sc[...] + jnp.sum(p, axis=-1, keepdims=True)
    acc_sc[...] = alpha * acc_sc[...] + jnp.dot(
        p.astype(v_ref.dtype), v_ref[0], preferred_element_type=jnp.float32)
    m_sc[...] = m_new

    @pl.when(ki == pl.num_programs(2) - 1)
    def _():
        inv_l = pl.reciprocal(l_sc[...], approx=True)
        o_ref[0] = (acc_sc[...] * inv_l).astype(o_ref.dtype)


def flash_attention(qkv, *, scale):
    B, S, E3 = qkv.shape
    assert E3 % 3 == 0
    E = E3 // 3
    tq, tkv = _attn_tiles(S, E)
    grid = (B, S // tq, S // tkv)

    q_spec = pl.BlockSpec((1, tq, E), lambda b, qi, ki: (b, qi, 0))
    k_spec = pl.BlockSpec((1, tkv, E), lambda b, qi, ki: (b, ki, 1))
    v_spec = pl.BlockSpec((1, tkv, E), lambda b, qi, ki: (b, ki, 2))
    o_spec = pl.BlockSpec((1, tq, E), lambda b, qi, ki: (b, qi, 0))

    return pl.pallas_call(
        functools.partial(_flash_attn_kernel, scale=scale),
        out_shape=jax.ShapeDtypeStruct((B, S, E), qkv.dtype),
        grid=grid,
        in_specs=[q_spec, k_spec, v_spec],
        out_specs=o_spec,
        scratch_shapes=[pltpu.VMEM((tq, 1), jnp.float32),
                        pltpu.VMEM((tq, 1), jnp.float32),
                        pltpu.VMEM((tq, E), jnp.float32)],
        compiler_params=pltpu.CompilerParams(
            dimension_semantics=("parallel", "parallel", "arbitrary"),
            vmem_limit_bytes=_VMEM_LIMIT),
    )(qkv, qkv, qkv)


# ---------------------------------------------------------------------------
# Standalone LayerNorm (final layernorm only), f32 math, two-pass variance.
# ---------------------------------------------------------------------------
def _layernorm_kernel(x_ref, g_ref, b_ref, o_ref, *, eps):
    x = x_ref[...].astype(jnp.float32)                       # (tr, E)
    mean = jnp.mean(x, axis=-1, keepdims=True)
    xc = x - mean
    var = jnp.mean(xc * xc, axis=-1, keepdims=True)
    y = xc * jax.lax.rsqrt(var + eps)
    y = y * g_ref[...].astype(jnp.float32) + b_ref[...].astype(jnp.float32)
    o_ref[...] = y.astype(o_ref.dtype)


def layernorm(x, gamma, beta, *, eps=1e-5, out_dtype=None):
    R, E = x.shape
    if out_dtype is None:
        out_dtype = x.dtype
    tr = _ln_tiles(R, E)
    return pl.pallas_call(
        functools.partial(_layernorm_kernel, eps=eps),
        out_shape=jax.ShapeDtypeStruct((R, E), out_dtype),
        grid=(R // tr,),
        in_specs=[pl.BlockSpec((tr, E), lambda i: (i, 0)),
                  pl.BlockSpec((1, E), lambda i: (0, 0)),
                  pl.BlockSpec((1, E), lambda i: (0, 0))],
        out_specs=pl.BlockSpec((tr, E), lambda i: (i, 0)),
        compiler_params=pltpu.CompilerParams(
            dimension_semantics=("parallel",),
            vmem_limit_bytes=_VMEM_LIMIT),
    )(x, gamma, beta)


# ---------------------------------------------------------------------------
# Model wrappers
# ---------------------------------------------------------------------------
def phi_decoder_layer(x2, p, *, B, S, E, scale, ln_eps=1e-5):
    # fused q/k/v projection: (B*S, E) @ (E, 3E) + b
    qkv = matmul_bias(x2, p["wqkv"], p["bqkv"], out_dtype=jnp.bfloat16)
    ctx = flash_attention(qkv.reshape(B, S, 3 * E), scale=scale)      # (B, S, E)

    # dense projection + first residual + input_layernorm, all fused in the
    # matmul epilogue (the pre-LN sum never hits HBM). resid_dropout = identity.
    hn = matmul_bias_res_layernorm(ctx.reshape(B * S, E), p["wd"], p["bd"], x2,
                                   p["ln_g"], p["ln_b"], eps=ln_eps,
                                   out_dtype=jnp.bfloat16)

    # MLP: fc1 + exact-erf GELU fused; fc2 with the second residual (= hn) fused
    hm = matmul_bias(hn, p["w1"], p["b1"], act="gelu", out_dtype=jnp.bfloat16)
    out = matmul_bias(hm, p["w2"], p["b2"], residual=hn, out_dtype=jnp.bfloat16)
    return out


def phi_forward(input_ids, params, *, ln_eps=1e-5, logits_dtype=jnp.float32):
    B, S = input_ids.shape
    E = params["embed"].shape[-1]
    # TODO(synk): embedding gather is a data-dependent row lookup; left to XLA
    # (a Pallas version would use scalar-prefetch + per-row DMA). Table is bf16.
    x2 = jnp.take(params["embed"], input_ids, axis=0).reshape(B * S, E)
    x2 = x2.astype(jnp.bfloat16)

    scale = 1.0 / math.sqrt(float(E))          # = 1/sqrt(rotary_emb.dim)
    for layer in params["layers"]:
        x2 = phi_decoder_layer(x2, layer, B=B, S=S, E=E, scale=scale,
                               ln_eps=ln_eps)

    xn = layernorm(x2, params["final_ln_g"], params["final_ln_b"],
                   eps=ln_eps, out_dtype=jnp.bfloat16)
    logits = matmul_bias(xn, params["w_lm"], params["b_lm"],
                         out_dtype=logits_dtype)
    V = logits.shape[-1]
    return logits.reshape(B, S, V)


def init_params(key, vocab_size, embed_dim, mlp_dim, num_layers):
    """Deterministic synthetic parameters.  Linear weights are generated in
    PyTorch's (out, in) convention then transposed to (in, out) and cast to
    bf16; biases stay f32 and are added in the f32 epilogue."""
    E, M = embed_dim, mlp_dim
    keys = jax.random.split(key, num_layers + 2)

    def linear(k, in_dim, out_dim):
        kw, kb = jax.random.split(k)
        bound = 1.0 / math.sqrt(in_dim)
        w = jax.random.uniform(kw, (out_dim, in_dim), jnp.float32, -bound, bound)
        b = jax.random.uniform(kb, (out_dim,), jnp.float32, -bound, bound)
        return w.T, b.reshape(1, out_dim)     # pre-transpose to (in, out)

    layers = []
    for li in range(num_layers):
        lk = jax.random.split(keys[li], 6)
        wq, bq = linear(lk[0], E, E)
        wk, bk = linear(lk[1], E, E)
        wv, bv = linear(lk[2], E, E)
        wd, bd = linear(lk[3], E, E)
        w1, b1 = linear(lk[4], E, M)
        w2, b2 = linear(lk[5], M, E)
        layers.append(dict(
            wqkv=jnp.concatenate([wq, wk, wv], axis=1).astype(jnp.bfloat16),
            bqkv=jnp.concatenate([bq, bk, bv], axis=1),     # f32
            wd=wd.astype(jnp.bfloat16), bd=bd,
            ln_g=jnp.ones((1, E), jnp.float32),
            ln_b=jnp.zeros((1, E), jnp.float32),
            w1=w1.astype(jnp.bfloat16), b1=b1,
            w2=w2.astype(jnp.bfloat16), b2=b2,
        ))

    embed = jax.random.normal(keys[num_layers], (vocab_size, E), jnp.float32)
    w_lm, b_lm = linear(keys[num_layers + 1], E, vocab_size)
    return dict(
        embed=embed.astype(jnp.bfloat16),      # bf16 table: halves gather traffic
        layers=layers,
        final_ln_g=jnp.ones((1, E), jnp.float32),
        final_ln_b=jnp.zeros((1, E), jnp.float32),
        w_lm=w_lm.astype(jnp.bfloat16),
        b_lm=b_lm,
    )


if __name__ == "__main__":
    # Small but lane-aligned demo shapes (E, M, vocab multiples of 128).
    # NOTE: at these sizes every kernel is launch/overhead dominated; the tile
    # policy is designed for real Phi shapes (E=2560, mlp=10240, vocab=51200).
    VOCAB, E, M, LAYERS = 256, 128, 256, 2
    B, S = 2, 16

    key = jax.random.PRNGKey(0)
    kp, ki = jax.random.split(key)
    params = init_params(kp, VOCAB, E, M, LAYERS)
    input_ids = jax.random.randint(ki, (B, S), 0, VOCAB, dtype=jnp.int32)

    logits = jax.jit(phi_forward)(input_ids, params)
    jax.block_until_ready(logits)
    assert logits.shape == (B, S, VOCAB) and logits.dtype == jnp.float32
    print("KERNEL_OK")
</pallas_src>

<mosaic_0001>
module attributes {stable_mosaic.version = 11 : i64} {
  func.func @_matmul_bias_kernel(%arg0: i32, %arg1: i32, %arg2: i32, %arg3: memref<32x128xbf16, #tpu.memory_space<vmem>>, %arg4: memref<128x128xbf16, #tpu.memory_space<vmem>>, %arg5: memref<1x128xf32, #tpu.memory_space<vmem>>, %arg6: memref<32x128xbf16, #tpu.memory_space<vmem>>, %arg7: memref<32x128xf32, #tpu.memory_space<vmem>>) attributes {dimension_semantics = [#tpu.dimension_semantics<parallel>, #tpu.dimension_semantics<parallel>, #tpu.dimension_semantics<arbitrary>], iteration_bounds = array<i64: 1, 3, 1>, scalar_prefetch = 0 : i64, scratch_operands = 1 : i64, tpu.core_type = #tpu.core_type<tc>, window_params = [{transform_indices = @transform_0, window_bounds = array<i64: 32, 128>}, {transform_indices = @transform_1, window_bounds = array<i64: 128, 128>}, {transform_indices = @transform_2, window_bounds = array<i64: 1, 128>}, {transform_indices = @transform_3, window_bounds = array<i64: 32, 128>}]} {
    %c0_i32 = arith.constant 0 : i32
    %0 = arith.cmpi eq, %arg2, %c0_i32 : i32
    %1 = arith.extui %0 : i1 to i32
    %c0_i32_0 = arith.constant 0 : i32
    %2 = arith.cmpi ne, %1, %c0_i32_0 : i32
    scf.if %2 {
      %cst_10 = arith.constant 0.000000e+00 : f32
      %12 = vector.broadcast %cst_10 : f32 to vector<32x128xf32>
      %c0_11 = arith.constant 0 : index
      %c0_12 = arith.constant 0 : index
      %13 = vector.load %arg7[%c0_11, %c0_12] : memref<32x128xf32, #tpu.memory_space<vmem>>, vector<32x128xf32>
      tpu.vector_store %arg7[%c0_11, %c0_12], %12 {strides = array<i32>} : memref<32x128xf32, #tpu.memory_space<vmem>>, vector<32x128xf32>,
    } else {
    }
    %c0 = arith.constant 0 : index
    %c0_1 = arith.constant 0 : index
    %3 = vector.load %arg7[%c0, %c0_1] : memref<32x128xf32, #tpu.memory_space<vmem>>, vector<32x128xf32>
    %c0_2 = arith.constant 0 : index
    %c0_3 = arith.constant 0 : index
    %4 = vector.load %arg3[%c0_2, %c0_3] : memref<32x128xbf16, #tpu.memory_space<vmem>>, vector<32x128xbf16>
    %c0_4 = arith.constant 0 : index
    %c0_5 = arith.constant 0 : index
    %5 = vector.load %arg4[%c0_4, %c0_5] : memref<128x128xbf16, #tpu.memory_space<vmem>>, vector<128x128xbf16>
    %cst = arith.constant dense<0.000000e+00> : vector<32x128xf32>
    %6 = tpu.matmul %4, %5, %cst {dimension_numbers = #tpu.dot_dimension_numbers<[1], [0], [0], [1], [0, 0, 1, 1], [], []>} : vector<32x128xbf16>, vector<128x128xbf16>, vector<32x128xf32> -> vector<32x128xf32>
    %7 = arith.addf %3, %6 : vector<32x128xf32>
    %c0_6 = arith.constant 0 : index
    %c0_7 = arith.constant 0 : index
    %8 = vector.load %arg7[%c0_6, %c0_7] : memref<32x128xf32, #tpu.memory_space<vmem>>, vector<32x128xf32>
    tpu.vector_store %arg7[%c0_6, %c0_7], %7 {strides = array<i32>} : memref<32x128xf32, #tpu.memory_space<vmem>>, vector<32x128xf32>,
    %c0_i32_8 = arith.constant 0 : i32
    %9 = arith.cmpi eq, %arg2, %c0_i32_8 : i32
    %10 = arith.extui %9 : i1 to i32
    %c0_i32_9 = arith.constant 0 : i32
    %11 = arith.cmpi ne, %10, %c0_i32_9 : i32
    scf.if %11 {
      %c0_10 = arith.constant 0 : index
      %c0_11 = arith.constant 0 : index
      %12 = vector.load %arg7[%c0_10, %c0_11] : memref<32x128xf32, #tpu.memory_space<vmem>>, vector<32x128xf32>
      %c0_12 = arith.constant 0 : index
      %c0_13 = arith.constant 0 : index
      %13 = vector.load %arg5[%c0_12, %c0_13] : memref<1x128xf32, #tpu.memory_space<vmem>>, vector<1x128xf32>
      %14 = vector.broadcast %13 : vector<1x128xf32> to vector<32x128xf32>
      %15 = arith.addf %12, %14 : vector<32x128xf32>
      %16 = arith.truncf %15 : vector<32x128xf32> to vector<32x128xbf16>
      %c0_14 = arith.constant 0 : index
      %c0_15 = arith.constant 0 : index
      %17 = vector.load %arg6[%c0_14, %c0_15] : memref<32x128xbf16, #tpu.memory_space<vmem>>, vector<32x128xbf16>
      tpu.vector_store %arg6[%c0_14, %c0_15], %16 {strides = array<i32>} : memref<32x128xbf16, #tpu.memory_space<vmem>>, vector<32x128xbf16>,
    } else {
    }
    return
  }
  func.func @transform_0(%arg0: i32, %arg1: i32, %arg2: i32) -> (i32, i32) {
    %c0_i32 = arith.constant 0 : i32
    return %arg0, %arg2 : i32, i32
  }
  func.func @transform_1(%arg0: i32, %arg1: i32, %arg2: i32) -> (i32, i32) {
    %c0_i32 = arith.constant 0 : i32
    return %arg2, %arg1 : i32, i32
  }
  func.func @transform_2(%arg0: i32, %arg1: i32, %arg2: i32) -> (i32, i32) {
    %c0_i32 = arith.constant 0 : i32
    %c0_i32_0 = arith.constant 0 : i32
    return %c0_i32, %arg1 : i32, i32
  }
  func.func @transform_3(%arg0: i32, %arg1: i32, %arg2: i32) -> (i32, i32) {
    %c0_i32 = arith.constant 0 : i32
    return %arg0, %arg1 : i32, i32
  }
}

module attributes {stable_mosaic.version = 11 : i64} {
  func.func @_matmul_bias_res_ln_kernel(%arg0: i32, %arg1: i32, %arg2: memref<32x128xbf16, #tpu.memory_space<vmem>>, %arg3: memref<128x128xbf16, #tpu.memory_space<vmem>>, %arg4: memref<1x128xf32, #tpu.memory_space<vmem>>, %arg5: memref<32x128xbf16, #tpu.memory_space<vmem>>, %arg6: memref<1x128xf32, #tpu.memory_space<vmem>>, %arg7: memref<1x128xf32, #tpu.memory_space<vmem>>, %arg8: memref<32x128xbf16, #tpu.memory_space<vmem>>, %arg9: memref<32x128xf32, #tpu.memory_space<vmem>>) attributes {dimension_semantics = [#tpu.dimension_semantics<parallel>, #tpu.dimension_semantics<arbitrary>], iteration_bounds = array<i64: 1, 1>, scalar_prefetch = 0 : i64, scratch_operands = 1 : i64, tpu.core_type = #tpu.core_type<tc>, window_params = [{transform_indices = @transform_0, window_bounds = array<i64: 32, 128>}, {transform_indices = @transform_1, window_bounds = array<i64: 128, 128>}, {pipeline_mode = #tpu.pipeline_mode<synchronous>, transform_indices = @transform_2, window_bounds = array<i64: 1, 128>}, {transform_indices = @transform_3, window_bounds = array<i64: 32, 128>}, {pipeline_mode = #tpu.pipeline_mode<synchronous>, transform_indices = @transform_4, window_bounds = array<i64: 1, 128>}, {pipeline_mode = #tpu.pipeline_mode<synchronous>, transform_indices = @transform_5, window_bounds = array<i64: 1, 128>}, {transform_indices = @transform_6, window_bounds = array<i64: 32, 128>}]} {
    %c0_i32 = arith.constant 0 : i32
    %0 = arith.cmpi eq, %arg1, %c0_i32 : i32
    %1 = arith.extui %0 : i1 to i32
    %c0_i32_0 = arith.constant 0 : i32
    %2 = arith.cmpi ne, %1, %c0_i32_0 : i32
    scf.if %2 {
      %cst_10 = arith.constant 0.000000e+00 : f32
      %12 = vector.broadcast %cst_10 : f32 to vector<32x128xf32>
      %c0_11 = arith.constant 0 : index
      %c0_12 = arith.constant 0 : index
      %13 = vector.load %arg9[%c0_11, %c0_12] : memref<32x128xf32, #tpu.memory_space<vmem>>, vector<32x128xf32>
      tpu.vector_store %arg9[%c0_11, %c0_12], %12 {strides = array<i32>} : memref<32x128xf32, #tpu.memory_space<vmem>>, vector<32x128xf32>,
    } else {
    }
    %c0 = arith.constant 0 : index
    %c0_1 = arith.constant 0 : index
    %3 = vector.load %arg9[%c0, %c0_1] : memref<32x128xf32, #tpu.memory_space<vmem>>, vector<32x128xf32>
    %c0_2 = arith.constant 0 : index
    %c0_3 = arith.constant 0 : index
    %4 = vector.load %arg2[%c0_2, %c0_3] : memref<32x128xbf16, #tpu.memory_space<vmem>>, vector<32x128xbf16>
    %c0_4 = arith.constant 0 : index
    %c0_5 = arith.constant 0 : index
    %5 = vector.load %arg3[%c0_4, %c0_5] : memref<128x128xbf16, #tpu.memory_space<vmem>>, vector<128x128xbf16>
    %cst = arith.constant dense<0.000000e+00> : vector<32x128xf32>
    %6 = tpu.matmul %4, %5, %cst {dimension_numbers = #tpu.dot_dimension_numbers<[1], [0], [0], [1], [0, 0, 1, 1], [], []>} : vector<32x128xbf16>, vector<128x128xbf16>, vector<32x128xf32> -> vector<32x128xf32>
    %7 = arith.addf %3, %6 : vector<32x128xf32>
    %c0_6 = arith.constant 0 : index
    %c0_7 = arith.constant 0 : index
    %8 = vector.load %arg9[%c0_6, %c0_7] : memref<32x128xf32, #tpu.memory_space<vmem>>, vector<32x128xf32>
    tpu.vector_store %arg9[%c0_6, %c0_7], %7 {strides = array<i32>} : memref<32x128xf32, #tpu.memory_space<vmem>>, vector<32x128xf32>,
    %c0_i32_8 = arith.constant 0 : i32
    %9 = arith.cmpi eq, %arg1, %c0_i32_8 : i32
    %10 = arith.extui %9 : i1 to i32
    %c0_i32_9 = arith.constant 0 : i32
    %11 = arith.cmpi ne, %10, %c0_i32_9 : i32
    scf.if %11 {
      %c0_10 = arith.constant 0 : index
      %c0_11 = arith.constant 0 : index
      %12 = vector.load %arg9[%c0_10, %c0_11] : memref<32x128xf32, #tpu.memory_space<vmem>>, vector<32x128xf32>
      %c0_12 = arith.constant 0 : index
      %c0_13 = arith.constant 0 : index
      %13 = vector.load %arg4[%c0_12, %c0_13] : memref<1x128xf32, #tpu.memory_space<vmem>>, vector<1x128xf32>
      %14 = vector.broadcast %13 : vector<1x128xf32> to vector<32x128xf32>
      %15 = arith.addf %12, %14 : vector<32x128xf32>
      %c0_14 = arith.constant 0 : index
      %c0_15 = arith.constant 0 : index
      %16 = vector.load %arg5[%c0_14, %c0_15] : memref<32x128xbf16, #tpu.memory_space<vmem>>, vector<32x128xbf16>
      %17 = arith.extf %16 : vector<32x128xbf16> to vector<32x128xf32>
      %18 = arith.addf %15, %17 : vector<32x128xf32>
      %cst_16 = arith.constant dense<0.000000e+00> : vector<32xf32>
      %19 = vector.multi_reduction <add>, %18, %cst_16 [1] : vector<32x128xf32> to vector<32xf32>
      %20 = vector.shape_cast %19 : vector<32xf32> to vector<32x1xf32>
      %cst_17 = arith.constant 1.280000e+02 : f32
      %21 = vector.broadcast %cst_17 : f32 to vector<32x1xf32>
      %22 = arith.divf %20, %21 : vector<32x1xf32>
      %23 = vector.broadcast %22 : vector<32x1xf32> to vector<32x128xf32>
      %24 = arith.subf %18, %23 : vector<32x128xf32>
      %25 = arith.mulf %24, %24 : vector<32x128xf32>
      %cst_18 = arith.constant dense<0.000000e+00> : vector<32xf32>
      %26 = vector.multi_reduction <add>, %25, %cst_18 [1] : vector<32x128xf32> to vector<32xf32>
      %27 = vector.shape_cast %26 : vector<32xf32> to vector<32x1xf32>
      %cst_19 = arith.constant 1.280000e+02 : f32
      %28 = vector.broadcast %cst_19 : f32 to vector<32x1xf32>
      %29 = arith.divf %27, %28 : vector<32x1xf32>
      %cst_20 = arith.constant 9.99999974E-6 : f32
      %30 = vector.broadcast %cst_20 : f32 to vector<32x1xf32>
      %31 = arith.addf %29, %30 : vector<32x1xf32>
      %32 = math.rsqrt %31 : vector<32x1xf32>
      %33 = vector.broadcast %32 : vector<32x1xf32> to vector<32x128xf32>
      %34 = arith.mulf %24, %33 : vector<32x128xf32>
      %c0_21 = arith.constant 0 : index
      %c0_22 = arith.constant 0 : index
      %35 = vector.load %arg6[%c0_21, %c0_22] : memref<1x128xf32, #tpu.memory_space<vmem>>, vector<1x128xf32>
      %36 = vector.broadcast %35 : vector<1x128xf32> to vector<32x128xf32>
      %37 = arith.mulf %34, %36 : vector<32x128xf32>
      %c0_23 = arith.constant 0 : index
      %c0_24 = arith.constant 0 : index
      %38 = vector.load %arg7[%c0_23, %c0_24] : memref<1x128xf32, #tpu.memory_space<vmem>>, vector<1x128xf32>
      %39 = vector.broadcast %38 : vector<1x128xf32> to vector<32x128xf32>
      %40 = arith.addf %37, %39 : vector<32x128xf32>
      %41 = arith.truncf %40 : vector<32x128xf32> to vector<32x128xbf16>
      %c0_25 = arith.constant 0 : index
      %c0_26 = arith.constant 0 : index
      %42 = vector.load %arg8[%c0_25, %c0_26] : memref<32x128xbf16, #tpu.memory_space<vmem>>, vector<32x128xbf16>
      tpu.vector_store %arg8[%c0_25, %c0_26], %41 {strides = array<i32>} : memref<32x128xbf16, #tpu.memory_space<vmem>>, vector<32x128xbf16>,
    } else {
    }
    return
  }
  func.func @transform_0(%arg0: i32, %arg1: i32) -> (i32, i32) {
    %c0_i32 = arith.constant 0 : i32
    return %arg0, %arg1 : i32, i32
  }
  func.func @transform_1(%arg0: i32, %arg1: i32) -> (i32, i32) {
    %c0_i32 = arith.constant 0 : i32
    %c0_i32_0 = arith.constant 0 : i32
    return %arg1, %c0_i32 : i32, i32
  }
  func.func @transform_2(%arg0: i32, %arg1: i32) -> (i32, i32) {
    %c0_i32 = arith.constant 0 : i32
    %c0_i32_0 = arith.constant 0 : i32
    %c0_i32_1 = arith.constant 0 : i32
    return %c0_i32, %c0_i32_0 : i32, i32
  }
  func.func @transform_3(%arg0: i32, %arg1: i32) -> (i32, i32) {
    %c0_i32 = arith.constant 0 : i32
    %c0_i32_0 = arith.constant 0 : i32
    return %arg0, %c0_i32 : i32, i32
  }
  func.func @transform_4(%arg0: i32, %arg1: i32) -> (i32, i32) {
    %c0_i32 = arith.constant 0 : i32
    %c0_i32_0 = arith.constant 0 : i32
    %c0_i32_1 = arith.constant 0 : i32
    return %c0_i32, %c0_i32_0 : i32, i32
  }
  func.func @transform_5(%arg0: i32, %arg1: i32) -> (i32, i32) {
    %c0_i32 = arith.constant 0 : i32
    %c0_i32_0 = arith.constant 0 : i32
    %c0_i32_1 = arith.constant 0 : i32
    return %c0_i32, %c0_i32_0 : i32, i32
  }
  func.func @transform_6(%arg0: i32, %arg1: i32) -> (i32, i32) {
    %c0_i32 = arith.constant 0 : i32
    %c0_i32_0 = arith.constant 0 : i32
    return %arg0, %c0_i32 : i32, i32
  }
}

module attributes {stable_mosaic.version = 11 : i64} {
  func.func @_matmul_bias_kernel(%arg0: i32, %arg1: i32, %arg2: i32, %arg3: memref<32x128xbf16, #tpu.memory_space<vmem>>, %arg4: memref<128x256xbf16, #tpu.memory_space<vmem>>, %arg5: memref<1x256xf32, #tpu.memory_space<vmem>>, %arg6: memref<32x256xbf16, #tpu.memory_space<vmem>>, %arg7: memref<32x256xf32, #tpu.memory_space<vmem>>) attributes {dimension_semantics = [#tpu.dimension_semantics<parallel>, #tpu.dimension_semantics<parallel>, #tpu.dimension_semantics<arbitrary>], iteration_bounds = array<i64: 1, 1, 1>, scalar_prefetch = 0 : i64, scratch_operands = 1 : i64, tpu.core_type = #tpu.core_type<tc>, window_params = [{transform_indices = @transform_0, window_bounds = array<i64: 32, 128>}, {transform_indices = @transform_1, window_bounds = array<i64: 128, 256>}, {transform_indices = @transform_2, window_bounds = array<i64: 1, 256>}, {transform_indices = @transform_3, window_bounds = array<i64: 32, 256>}]} {
    %c0_i32 = arith.constant 0 : i32
    %0 = arith.cmpi eq, %arg2, %c0_i32 : i32
    %1 = arith.extui %0 : i1 to i32
    %c0_i32_0 = arith.constant 0 : i32
    %2 = arith.cmpi ne, %1, %c0_i32_0 : i32
    scf.if %2 {
      %cst_10 = arith.constant 0.000000e+00 : f32
      %12 = vector.broadcast %cst_10 : f32 to vector<32x256xf32>
      %c0_11 = arith.constant 0 : index
      %c0_12 = arith.constant 0 : index
      %13 = vector.load %arg7[%c0_11, %c0_12] : memref<32x256xf32, #tpu.memory_space<vmem>>, vector<32x256xf32>
      tpu.vector_store %arg7[%c0_11, %c0_12], %12 {strides = array<i32>} : memref<32x256xf32, #tpu.memory_space<vmem>>, vector<32x256xf32>,
    } else {
    }
    %c0 = arith.constant 0 : index
    %c0_1 = arith.constant 0 : index
    %3 = vector.load %arg7[%c0, %c0_1] : memref<32x256xf32, #tpu.memory_space<vmem>>, vector<32x256xf32>
    %c0_2 = arith.constant 0 : index
    %c0_3 = arith.constant 0 : index
    %4 = vector.load %arg3[%c0_2, %c0_3] : memref<32x128xbf16, #tpu.memory_space<vmem>>, vector<32x128xbf16>
    %c0_4 = arith.constant 0 : index
    %c0_5 = arith.constant 0 : index
    %5 = vector.load %arg4[%c0_4, %c0_5] : memref<128x256xbf16, #tpu.memory_space<vmem>>, vector<128x256xbf16>
    %cst = arith.constant dense<0.000000e+00> : vector<32x256xf32>
    %6 = tpu.matmul %4, %5, %cst {dimension_numbers = #tpu.dot_dimension_numbers<[1], [0], [0], [1], [0, 0, 1, 1], [], []>} : vector<32x128xbf16>, vector<128x256xbf16>, vector<32x256xf32> -> vector<32x256xf32>
    %7 = arith.addf %3, %6 : vector<32x256xf32>
    %c0_6 = arith.constant 0 : index
    %c0_7 = arith.constant 0 : index
    %8 = vector.load %arg7[%c0_6, %c0_7] : memref<32x256xf32, #tpu.memory_space<vmem>>, vector<32x256xf32>
    tpu.vector_store %arg7[%c0_6, %c0_7], %7 {strides = array<i32>} : memref<32x256xf32, #tpu.memory_space<vmem>>, vector<32x256xf32>,
    %c0_i32_8 = arith.constant 0 : i32
    %9 = arith.cmpi eq, %arg2, %c0_i32_8 : i32
    %10 = arith.extui %9 : i1 to i32
    %c0_i32_9 = arith.constant 0 : i32
    %11 = arith.cmpi ne, %10, %c0_i32_9 : i32
    scf.if %11 {
      %c0_10 = arith.constant 0 : index
      %c0_11 = arith.constant 0 : index
      %12 = vector.load %arg7[%c0_10, %c0_11] : memref<32x256xf32, #tpu.memory_space<vmem>>, vector<32x256xf32>
      %c0_12 = arith.constant 0 : index
      %c0_13 = arith.constant 0 : index
      %13 = vector.load %arg5[%c0_12, %c0_13] : memref<1x256xf32, #tpu.memory_space<vmem>>, vector<1x256xf32>
      %14 = vector.broadcast %13 : vector<1x256xf32> to vector<32x256xf32>
      %15 = arith.addf %12, %14 : vector<32x256xf32>
      %cst_14 = arith.constant 5.000000e-01 : f32
      %16 = vector.broadcast %cst_14 : f32 to vector<32x256xf32>
      %17 = arith.mulf %16, %15 : vector<32x256xf32>
      %cst_15 = arith.constant 0.707106769 : f32
      %18 = vector.broadcast %cst_15 : f32 to vector<32x256xf32>
      %19 = arith.mulf %15, %18 : vector<32x256xf32>
      %20 = math.erf %19 : vector<32x256xf32>
      %cst_16 = arith.constant 1.000000e+00 : f32
      %21 = vector.broadcast %cst_16 : f32 to vector<32x256xf32>
      %22 = arith.addf %21, %20 : vector<32x256xf32>
      %23 = arith.mulf %17, %22 : vector<32x256xf32>
      %24 = arith.truncf %23 : vector<32x256xf32> to vector<32x256xbf16>
      %c0_17 = arith.constant 0 : index
      %c0_18 = arith.constant 0 : index
      %25 = vector.load %arg6[%c0_17, %c0_18] : memref<32x256xbf16, #tpu.memory_space<vmem>>, vector<32x256xbf16>
      tpu.vector_store %arg6[%c0_17, %c0_18], %24 {strides = array<i32>} : memref<32x256xbf16, #tpu.memory_space<vmem>>, vector<32x256xbf16>,
    } else {
    }
    return
  }
  func.func @transform_0(%arg0: i32, %arg1: i32, %arg2: i32) -> (i32, i32) {
    %c0_i32 = arith.constant 0 : i32
    return %arg0, %arg2 : i32, i32
  }
  func.func @transform_1(%arg0: i32, %arg1: i32, %arg2: i32) -> (i32, i32) {
    %c0_i32 = arith.constant 0 : i32
    return %arg2, %arg1 : i32, i32
  }
  func.func @transform_2(%arg0: i32, %arg1: i32, %arg2: i32) -> (i32, i32) {
    %c0_i32 = arith.constant 0 : i32
    %c0_i32_0 = arith.constant 0 : i32
    return %c0_i32, %arg1 : i32, i32
  }
  func.func @transform_3(%arg0: i32, %arg1: i32, %arg2: i32) -> (i32, i32) {
    %c0_i32 = arith.constant 0 : i32
    return %arg0, %arg1 : i32, i32
  }
}

module attributes {stable_mosaic.version = 11 : i64} {
  func.func @_flash_attn_kernel(%arg0: i32, %arg1: i32, %arg2: i32, %arg3: memref<1x16x128xbf16, #tpu.memory_space<vmem>>, %arg4: memref<1x16x128xbf16, #tpu.memory_space<vmem>>, %arg5: memref<1x16x128xbf16, #tpu.memory_space<vmem>>, %arg6: memref<1x16x128xbf16, #tpu.memory_space<vmem>>, %arg7: memref<16x1xf32, #tpu.memory_space<vmem>>, %arg8: memref<16x1xf32, #tpu.memory_space<vmem>>, %arg9: memref<16x128xf32, #tpu.memory_space<vmem>>) attributes {dimension_semantics = [#tpu.dimension_semantics<parallel>, #tpu.dimension_semantics<parallel>, #tpu.dimension_semantics<arbitrary>], iteration_bounds = array<i64: 2, 1, 1>, scalar_prefetch = 0 : i64, scratch_operands = 3 : i64, tpu.core_type = #tpu.core_type<tc>, window_params = [{transform_indices = @transform_0, window_bounds = array<i64: 1, 16, 128>}, {transform_indices = @transform_1, window_bounds = array<i64: 1, 16, 128>}, {transform_indices = @transform_2, window_bounds = array<i64: 1, 16, 128>}, {transform_indices = @transform_3, window_bounds = array<i64: 1, 16, 128>}]} {
    %c0_i32 = arith.constant 0 : i32
    %0 = arith.cmpi eq, %arg2, %c0_i32 : i32
    %1 = arith.extui %0 : i1 to i32
    %c0_i32_0 = arith.constant 0 : i32
    %2 = arith.cmpi ne, %1, %c0_i32_0 : i32
    scf.if %2 {
      %cst_27 = arith.constant 0xFF800000 : f32
      %38 = vector.broadcast %cst_27 : f32 to vector<16x1xf32>
      %c0_28 = arith.constant 0 : index
      %c0_29 = arith.constant 0 : index
      %39 = vector.load %arg7[%c0_28, %c0_29] : memref<16x1xf32, #tpu.memory_space<vmem>>, vector<16x1xf32>
      tpu.vector_store %arg7[%c0_28, %c0_29], %38 {strides = array<i32>} : memref<16x1xf32, #tpu.memory_space<vmem>>, vector<16x1xf32>,
      %cst_30 = arith.constant 0.000000e+00 : f32
      %40 = vector.broadcast %cst_30 : f32 to vector<16x1xf32>
      %c0_31 = arith.constant 0 : index
      %c0_32 = arith.constant 0 : index
      %41 = vector.load %arg8[%c0_31, %c0_32] : memref<16x1xf32, #tpu.memory_space<vmem>>, vector<16x1xf32>
      tpu.vector_store %arg8[%c0_31, %c0_32], %40 {strides = array<i32>} : memref<16x1xf32, #tpu.memory_space<vmem>>, vector<16x1xf32>,
      %cst_33 = arith.constant 0.000000e+00 : f32
      %42 = vector.broadcast %cst_33 : f32 to vector<16x128xf32>
      %c0_34 = arith.constant 0 : index
      %c0_35 = arith.constant 0 : index
      %43 = vector.load %arg9[%c0_34, %c0_35] : memref<16x128xf32, #tpu.memory_space<vmem>>, vector<16x128xf32>
      tpu.vector_store %arg9[%c0_34, %c0_35], %42 {strides = array<i32>} : memref<16x128xf32, #tpu.memory_space<vmem>>, vector<16x128xf32>,
    } else {
    }
    %c0 = arith.constant 0 : index
    %c0_1 = arith.constant 0 : index
    %c0_2 = arith.constant 0 : index
    %3 = vector.load %arg3[%c0, %c0_1, %c0_2] : memref<1x16x128xbf16, #tpu.memory_space<vmem>>, vector<1x16x128xbf16>
    %4 = vector.shape_cast %3 : vector<1x16x128xbf16> to vector<16x128xbf16>
    %c0_3 = arith.constant 0 : index
    %c0_4 = arith.constant 0 : index
    %c0_5 = arith.constant 0 : index
    %5 = vector.load %arg4[%c0_3, %c0_4, %c0_5] : memref<1x16x128xbf16, #tpu.memory_space<vmem>>, vector<1x16x128xbf16>
    %6 = vector.shape_cast %5 : vector<1x16x128xbf16> to vector<16x128xbf16>
    %cst = arith.constant dense<0.000000e+00> : vector<16x16xf32>
    %7 = tpu.matmul %4, %6, %cst {dimension_numbers = #tpu.dot_dimension_numbers<[1], [1], [0], [0], [0, 0, 1, 0], [], []>} : vector<16x128xbf16>, vector<16x128xbf16>, vector<16x16xf32> -> vector<16x16xf32>
    %cst_6 = arith.constant 0.0883883461 : f32
    %8 = vector.broadcast %cst_6 : f32 to vector<16x16xf32>
    %9 = arith.mulf %7, %8 : vector<16x16xf32>
    %c0_7 = arith.constant 0 : index
    %c0_8 = arith.constant 0 : index
    %10 = vector.load %arg7[%c0_7, %c0_8] : memref<16x1xf32, #tpu.memory_space<vmem>>, vector<16x1xf32>
    %cst_9 = arith.constant dense<0xFF800000> : vector<16xf32>
    %11 = vector.multi_reduction <maximumf>, %9, %cst_9 [1] : vector<16x16xf32> to vector<16xf32>
    %12 = vector.shape_cast %11 : vector<16xf32> to vector<16x1xf32>
    %13 = arith.maximumf %10, %12 : vector<16x1xf32>
    %14 = arith.subf %10, %13 : vector<16x1xf32>
    %15 = math.exp %14 : vector<16x1xf32>
    %16 = vector.broadcast %13 : vector<16x1xf32> to vector<16x16xf32>
    %17 = arith.subf %9, %16 : vector<16x16xf32>
    %18 = math.exp %17 : vector<16x16xf32>
    %c0_10 = arith.constant 0 : index
    %c0_11 = arith.constant 0 : index
    %19 = vector.load %arg8[%c0_10, %c0_11] : memref<16x1xf32, #tpu.memory_space<vmem>>, vector<16x1xf32>
    %20 = arith.mulf %15, %19 : vector<16x1xf32>
    %cst_12 = arith.constant dense<0.000000e+00> : vector<16xf32>
    %21 = vector.multi_reduction <add>, %18, %cst_12 [1] : vector<16x16xf32> to vector<16xf32>
    %22 = vector.shape_cast %21 : vector<16xf32> to vector<16x1xf32>
    %23 = arith.addf %20, %22 : vector<16x1xf32>
    %c0_13 = arith.constant 0 : index
    %c0_14 = arith.constant 0 : index
    %24 = vector.load %arg8[%c0_13, %c0_14] : memref<16x1xf32, #tpu.memory_space<vmem>>, vector<16x1xf32>
    tpu.vector_store %arg8[%c0_13, %c0_14], %23 {strides = array<i32>} : memref<16x1xf32, #tpu.memory_space<vmem>>, vector<16x1xf32>,
    %c0_15 = arith.constant 0 : index
    %c0_16 = arith.constant 0 : index
    %25 = vector.load %arg9[%c0_15, %c0_16] : memref<16x128xf32, #tpu.memory_space<vmem>>, vector<16x128xf32>
    %26 = vector.broadcast %15 : vector<16x1xf32> to vector<16x128xf32>
    %27 = arith.mulf %26, %25 : vector<16x128xf32>
    %28 = arith.truncf %18 : vector<16x16xf32> to vector<16x16xbf16>
    %c0_17 = arith.constant 0 : index
    %c0_18 = arith.constant 0 : index
    %c0_19 = arith.constant 0 : index
    %29 = vector.load %arg5[%c0_17, %c0_18, %c0_19] : memref<1x16x128xbf16, #tpu.memory_space<vmem>>, vector<1x16x128xbf16>
    %30 = vector.shape_cast %29 : vector<1x16x128xbf16> to vector<16x128xbf16>
    %cst_20 = arith.constant dense<0.000000e+00> : vector<16x128xf32>
    %31 = tpu.matmul %28, %30, %cst_20 {dimension_numbers = #tpu.dot_dimension_numbers<[1], [0], [0], [1], [0, 0, 1, 1], [], []>} : vector<16x16xbf16>, vector<16x128xbf16>, vector<16x128xf32> -> vector<16x128xf32>
    %32 = arith.addf %27, %31 : vector<16x128xf32>
    %c0_21 = arith.constant 0 : index
    %c0_22 = arith.constant 0 : index
    %33 = vector.load %arg9[%c0_21, %c0_22] : memref<16x128xf32, #tpu.memory_space<vmem>>, vector<16x128xf32>
    tpu.vector_store %arg9[%c0_21, %c0_22], %32 {strides = array<i32>} : memref<16x128xf32, #tpu.memory_space<vmem>>, vector<16x128xf32>,
    %c0_23 = arith.constant 0 : index
    %c0_24 = arith.constant 0 : index
    %34 = vector.load %arg7[%c0_23, %c0_24] : memref<16x1xf32, #tpu.memory_space<vmem>>, vector<16x1xf32>
    tpu.vector_store %arg7[%c0_23, %c0_24], %13 {strides = array<i32>} : memref<16x1xf32, #tpu.memory_space<vmem>>, vector<16x1xf32>,
    %c0_i32_25 = arith.constant 0 : i32
    %35 = arith.cmpi eq, %arg2, %c0_i32_25 : i32
    %36 = arith.extui %35 : i1 to i32
    %c0_i32_26 = arith.constant 0 : i32
    %37 = arith.cmpi ne, %36, %c0_i32_26 : i32
    scf.if %37 {
      %c0_27 = arith.constant 0 : index
      %c0_28 = arith.constant 0 : index
      %38 = vector.load %arg8[%c0_27, %c0_28] : memref<16x1xf32, #tpu.memory_space<vmem>>, vector<16x1xf32>
      %39 = tpu.reciprocal %38 {approx = true} : vector<16x1xf32> -> vector<16x1xf32>
      %c0_29 = arith.constant 0 : index
      %c0_30 = arith.constant 0 : index
      %40 = vector.load %arg9[%c0_29, %c0_30] : memref<16x128xf32, #tpu.memory_space<vmem>>, vector<16x128xf32>
      %41 = vector.broadcast %39 : vector<16x1xf32> to vector<16x128xf32>
      %42 = arith.mulf %40, %41 : vector<16x128xf32>
      %43 = arith.truncf %42 : vector<16x128xf32> to vector<16x128xbf16>
      %c0_31 = arith.constant 0 : index
      %c0_32 = arith.constant 0 : index
      %c0_33 = arith.constant 0 : index
      %44 = vector.load %arg6[%c0_31, %c0_32, %c0_33] : memref<1x16x128xbf16, #tpu.memory_space<vmem>>, vector<1x16x128xbf16>
      %45 = vector.shape_cast %44 : vector<1x16x128xbf16> to vector<16x128xbf16>
      %46 = vector.shape_cast %43 : vector<16x128xbf16> to vector<1x16x128xbf16>
      tpu.vector_store %arg6[%c0_31, %c0_32, %c0_33], %46 {strides = array<i32>} : memref<1x16x128xbf16, #tpu.memory_space<vmem>>, vector<1x16x128xbf16>,
    } else {
    }
    return
  }
  func.func @transform_0(%arg0: i32, %arg1: i32, %arg2: i32) -> (i32, i32, i32) {
    %c0_i32 = arith.constant 0 : i32
    %c0_i32_0 = arith.constant 0 : i32
    return %arg0, %arg1, %c0_i32 : i32, i32, i32
  }
  func.func @transform_1(%arg0: i32, %arg1: i32, %arg2: i32) -> (i32, i32, i32) {
    %c1_i32 = arith.constant 1 : i32
    %c0_i32 = arith.constant 0 : i32
    return %arg0, %arg2, %c1_i32 : i32, i32, i32
  }
  func.func @transform_2(%arg0: i32, %arg1: i32, %arg2: i32) -> (i32, i32, i32) {
    %c2_i32 = arith.constant 2 : i32
    %c0_i32 = arith.constant 0 : i32
    return %arg0, %arg2, %c2_i32 : i32, i32, i32
  }
  func.func @transform_3(%arg0: i32, %arg1: i32, %arg2: i32) -> (i32, i32, i32) {
    %c0_i32 = arith.constant 0 : i32
    %c0_i32_0 = arith.constant 0 : i32
    return %arg0, %arg1, %c0_i32 : i32, i32, i32
  }
}

module attributes {stable_mosaic.version = 11 : i64} {
  func.func @_matmul_bias_res_kernel(%arg0: i32, %arg1: i32, %arg2: i32, %arg3: memref<32x256xbf16, #tpu.memory_space<vmem>>, %arg4: memref<256x128xbf16, #tpu.memory_space<vmem>>, %arg5: memref<1x128xf32, #tpu.memory_space<vmem>>, %arg6: memref<32x128xbf16, #tpu.memory_space<vmem>>, %arg7: memref<32x128xbf16, #tpu.memory_space<vmem>>, %arg8: memref<32x128xf32, #tpu.memory_space<vmem>>) attributes {dimension_semantics = [#tpu.dimension_semantics<parallel>, #tpu.dimension_semantics<parallel>, #tpu.dimension_semantics<arbitrary>], iteration_bounds = array<i64: 1, 1, 1>, scalar_prefetch = 0 : i64, scratch_operands = 1 : i64, tpu.core_type = #tpu.core_type<tc>, window_params = [{transform_indices = @transform_0, window_bounds = array<i64: 32, 256>}, {transform_indices = @transform_1, window_bounds = array<i64: 256, 128>}, {transform_indices = @transform_2, window_bounds = array<i64: 1, 128>}, {transform_indices = @transform_3, window_bounds = array<i64: 32, 128>}, {transform_indices = @transform_4, window_bounds = array<i64: 32, 128>}]} {
    %c0_i32 = arith.constant 0 : i32
    %0 = arith.cmpi eq, %arg2, %c0_i32 : i32
    %1 = arith.extui %0 : i1 to i32
    %c0_i32_0 = arith.constant 0 : i32
    %2 = arith.cmpi ne, %1, %c0_i32_0 : i32
    scf.if %2 {
      %cst_10 = arith.constant 0.000000e+00 : f32
      %12 = vector.broadcast %cst_10 : f32 to vector<32x128xf32>
      %c0_11 = arith.constant 0 : index
      %c0_12 = arith.constant 0 : index
      %13 = vector.load %arg8[%c0_11, %c0_12] : memref<32x128xf32, #tpu.memory_space<vmem>>, vector<32x128xf32>
      tpu.vector_store %arg8[%c0_11, %c0_12], %12 {strides = array<i32>} : memref<32x128xf32, #tpu.memory_space<vmem>>, vector<32x128xf32>,
    } else {
    }
    %c0 = arith.constant 0 : index
    %c0_1 = arith.constant 0 : index
    %3 = vector.load %arg8[%c0, %c0_1] : memref<32x128xf32, #tpu.memory_space<vmem>>, vector<32x128xf32>
    %c0_2 = arith.constant 0 : index
    %c0_3 = arith.constant 0 : index
    %4 = vector.load %arg3[%c0_2, %c0_3] : memref<32x256xbf16, #tpu.memory_space<vmem>>, vector<32x256xbf16>
    %c0_4 = arith.constant 0 : index
    %c0_5 = arith.constant 0 : index
    %5 = vector.load %arg4[%c0_4, %c0_5] : memref<256x128xbf16, #tpu.memory_space<vmem>>, vector<256x128xbf16>
    %cst = arith.constant dense<0.000000e+00> : vector<32x128xf32>
    %6 = tpu.matmul %4, %5, %cst {dimension_numbers = #tpu.dot_dimension_numbers<[1], [0], [0], [1], [0, 0, 1, 1], [], []>} : vector<32x256xbf16>, vector<256x128xbf16>, vector<32x128xf32> -> vector<32x128xf32>
    %7 = arith.addf %3, %6 : vector<32x128xf32>
    %c0_6 = arith.constant 0 : index
    %c0_7 = arith.constant 0 : index
    %8 = vector.load %arg8[%c0_6, %c0_7] : memref<32x128xf32, #tpu.memory_space<vmem>>, vector<32x128xf32>
    tpu.vector_store %arg8[%c0_6, %c0_7], %7 {strides = array<i32>} : memref<32x128xf32, #tpu.memory_space<vmem>>, vector<32x128xf32>,
    %c0_i32_8 = arith.constant 0 : i32
    %9 = arith.cmpi eq, %arg2, %c0_i32_8 : i32
    %10 = arith.extui %9 : i1 to i32
    %c0_i32_9 = arith.constant 0 : i32
    %11 = arith.cmpi ne, %10, %c0_i32_9 : i32
    scf.if %11 {
      %c0_10 = arith.constant 0 : index
      %c0_11 = arith.constant 0 : index
      %12 = vector.load %arg8[%c0_10, %c0_11] : memref<32x128xf32, #tpu.memory_space<vmem>>, vector<32x128xf32>
      %c0_12 = arith.constant 0 : index
      %c0_13 = arith.constant 0 : index
      %13 = vector.load %arg5[%c0_12, %c0_13] : memref<1x128xf32, #tpu.memory_space<vmem>>, vector<1x128xf32>
      %14 = vector.broadcast %13 : vector<1x128xf32> to vector<32x128xf32>
      %15 = arith.addf %12, %14 : vector<32x128xf32>
      %c0_14 = arith.constant 0 : index
      %c0_15 = arith.constant 0 : index
      %16 = vector.load %arg6[%c0_14, %c0_15] : memref<32x128xbf16, #tpu.memory_space<vmem>>, vector<32x128xbf16>
      %17 = arith.extf %16 : vector<32x128xbf16> to vector<32x128xf32>
      %18 = arith.addf %15, %17 : vector<32x128xf32>
      %19 = arith.truncf %18 : vector<32x128xf32> to vector<32x128xbf16>
      %c0_16 = arith.constant 0 : index
      %c0_17 = arith.constant 0 : index
      %20 = vector.load %arg7[%c0_16, %c0_17] : memref<32x128xbf16, #tpu.memory_space<vmem>>, vector<32x128xbf16>
      tpu.vector_store %arg7[%c0_16, %c0_17], %19 {strides = array<i32>} : memref<32x128xbf16, #tpu.memory_space<vmem>>, vector<32x128xbf16>,
    } else {
    }
    return
  }
  func.func @transform_0(%arg0: i32, %arg1: i32, %arg2: i32) -> (i32, i32) {
    %c0_i32 = arith.constant 0 : i32
    return %arg0, %arg2 : i32, i32
  }
  func.func @transform_1(%arg0: i32, %arg1: i32, %arg2: i32) -> (i32, i32) {
    %c0_i32 = arith.constant 0 : i32
    return %arg2, %arg1 : i32, i32
  }
  func.func @transform_2(%arg0: i32, %arg1: i32, %arg2: i32) -> (i32, i32) {
    %c0_i32 = arith.constant 0 : i32
    %c0_i32_0 = arith.constant 0 : i32
    return %c0_i32, %arg1 : i32, i32
  }
  func.func @transform_3(%arg0: i32, %arg1: i32, %arg2: i32) -> (i32, i32) {
    %c0_i32 = arith.constant 0 : i32
    return %arg0, %arg1 : i32, i32
  }
  func.func @transform_4(%arg0: i32, %arg1: i32, %arg2: i32) -> (i32, i32) {
    %c0_i32 = arith.constant 0 : i32
    return %arg0, %arg1 : i32, i32
  }
}

module attributes {stable_mosaic.version = 11 : i64} {
  func.func @_layernorm_kernel(%arg0: i32, %arg1: memref<32x128xbf16, #tpu.memory_space<vmem>>, %arg2: memref<1x128xf32, #tpu.memory_space<vmem>>, %arg3: memref<1x128xf32, #tpu.memory_space<vmem>>, %arg4: memref<32x128xbf16, #tpu.memory_space<vmem>>) attributes {dimension_semantics = [#tpu.dimension_semantics<parallel>], iteration_bounds = array<i64: 1>, scalar_prefetch = 0 : i64, scratch_operands = 0 : i64, tpu.core_type = #tpu.core_type<tc>, window_params = [{transform_indices = @transform_0, window_bounds = array<i64: 32, 128>}, {pipeline_mode = #tpu.pipeline_mode<synchronous>, transform_indices = @transform_1, window_bounds = array<i64: 1, 128>}, {pipeline_mode = #tpu.pipeline_mode<synchronous>, transform_indices = @transform_2, window_bounds = array<i64: 1, 128>}, {transform_indices = @transform_3, window_bounds = array<i64: 32, 128>}]} {
    %c0 = arith.constant 0 : index
    %c0_0 = arith.constant 0 : index
    %0 = vector.load %arg1[%c0, %c0_0] : memref<32x128xbf16, #tpu.memory_space<vmem>>, vector<32x128xbf16>
    %1 = arith.extf %0 : vector<32x128xbf16> to vector<32x128xf32>
    %cst = arith.constant dense<0.000000e+00> : vector<32xf32>
    %2 = vector.multi_reduction <add>, %1, %cst [1] : vector<32x128xf32> to vector<32xf32>
    %3 = vector.shape_cast %2 : vector<32xf32> to vector<32x1xf32>
    %cst_1 = arith.constant 1.280000e+02 : f32
    %4 = vector.broadcast %cst_1 : f32 to vector<32x1xf32>
    %5 = arith.divf %3, %4 : vector<32x1xf32>
    %6 = vector.broadcast %5 : vector<32x1xf32> to vector<32x128xf32>
    %7 = arith.subf %1, %6 : vector<32x128xf32>
    %8 = arith.mulf %7, %7 : vector<32x128xf32>
    %cst_2 = arith.constant dense<0.000000e+00> : vector<32xf32>
    %9 = vector.multi_reduction <add>, %8, %cst_2 [1] : vector<32x128xf32> to vector<32xf32>
    %10 = vector.shape_cast %9 : vector<32xf32> to vector<32x1xf32>
    %cst_3 = arith.constant 1.280000e+02 : f32
    %11 = vector.broadcast %cst_3 : f32 to vector<32x1xf32>
    %12 = arith.divf %10, %11 : vector<32x1xf32>
    %cst_4 = arith.constant 9.99999974E-6 : f32
    %13 = vector.broadcast %cst_4 : f32 to vector<32x1xf32>
    %14 = arith.addf %12, %13 : vector<32x1xf32>
    %15 = math.rsqrt %14 : vector<32x1xf32>
    %16 = vector.broadcast %15 : vector<32x1xf32> to vector<32x128xf32>
    %17 = arith.mulf %7, %16 : vector<32x128xf32>
    %c0_5 = arith.constant 0 : index
    %c0_6 = arith.constant 0 : index
    %18 = vector.load %arg2[%c0_5, %c0_6] : memref<1x128xf32, #tpu.memory_space<vmem>>, vector<1x128xf32>
    %19 = vector.broadcast %18 : vector<1x128xf32> to vector<32x128xf32>
    %20 = arith.mulf %17, %19 : vector<32x128xf32>
    %c0_7 = arith.constant 0 : index
    %c0_8 = arith.constant 0 : index
    %21 = vector.load %arg3[%c0_7, %c0_8] : memref<1x128xf32, #tpu.memory_space<vmem>>, vector<1x128xf32>
    %22 = vector.broadcast %21 : vector<1x128xf32> to vector<32x128xf32>
    %23 = arith.addf %20, %22 : vector<32x128xf32>
    %24 = arith.truncf %23 : vector<32x128xf32> to vector<32x128xbf16>
    %c0_9 = arith.constant 0 : index
    %c0_10 = arith.constant 0 : index
    %25 = vector.load %arg4[%c0_9, %c0_10] : memref<32x128xbf16, #tpu.memory_space<vmem>>, vector<32x128xbf16>
    tpu.vector_store %arg4[%c0_9, %c0_10], %24 {strides = array<i32>} : memref<32x128xbf16, #tpu.memory_space<vmem>>, vector<32x128xbf16>,
    return
  }
  func.func @transform_0(%arg0: i32) -> (i32, i32) {
    %c0_i32 = arith.constant 0 : i32
    %c0_i32_0 = arith.constant 0 : i32
    return %arg0, %c0_i32 : i32, i32
  }
  func.func @transform_1(%arg0: i32) -> (i32, i32) {
    %c0_i32 = arith.constant 0 : i32
    %c0_i32_0 = arith.constant 0 : i32
    %c0_i32_1 = arith.constant 0 : i32
    return %c0_i32, %c0_i32_0 : i32, i32
  }
  func.func @transform_2(%arg0: i32) -> (i32, i32) {
    %c0_i32 = arith.constant 0 : i32
    %c0_i32_0 = arith.constant 0 : i32
    %c0_i32_1 = arith.constant 0 : i32
    return %c0_i32, %c0_i32_0 : i32, i32
  }
  func.func @transform_3(%arg0: i32) -> (i32, i32) {
    %c0_i32 = arith.constant 0 : i32
    %c0_i32_0 = arith.constant 0 : i32
    return %arg0, %c0_i32 : i32, i32
  }
}

module attributes {stable_mosaic.version = 11 : i64} {
  func.func @_matmul_bias_kernel(%arg0: i32, %arg1: i32, %arg2: i32, %arg3: memref<32x128xbf16, #tpu.memory_space<vmem>>, %arg4: memref<128x256xbf16, #tpu.memory_space<vmem>>, %arg5: memref<1x256xf32, #tpu.memory_space<vmem>>, %arg6: memref<32x256xf32, #tpu.memory_space<vmem>>, %arg7: memref<32x256xf32, #tpu.memory_space<vmem>>) attributes {dimension_semantics = [#tpu.dimension_semantics<parallel>, #tpu.dimension_semantics<parallel>, #tpu.dimension_semantics<arbitrary>], iteration_bounds = array<i64: 1, 1, 1>, scalar_prefetch = 0 : i64, scratch_operands = 1 : i64, tpu.core_type = #tpu.core_type<tc>, window_params = [{transform_indices = @transform_0, window_bounds = array<i64: 32, 128>}, {transform_indices = @transform_1, window_bounds = array<i64: 128, 256>}, {transform_indices = @transform_2, window_bounds = array<i64: 1, 256>}, {transform_indices = @transform_3, window_bounds = array<i64: 32, 256>}]} {
    %c0_i32 = arith.constant 0 : i32
    %0 = arith.cmpi eq, %arg2, %c0_i32 : i32
    %1 = arith.extui %0 : i1 to i32
    %c0_i32_0 = arith.constant 0 : i32
    %2 = arith.cmpi ne, %1, %c0_i32_0 : i32
    scf.if %2 {
      %cst_10 = arith.constant 0.000000e+00 : f32
      %12 = vector.broadcast %cst_10 : f32 to vector<32x256xf32>
      %c0_11 = arith.constant 0 : index
      %c0_12 = arith.constant 0 : index
      %13 = vector.load %arg7[%c0_11, %c0_12] : memref<32x256xf32, #tpu.memory_space<vmem>>, vector<32x256xf32>
      tpu.vector_store %arg7[%c0_11, %c0_12], %12 {strides = array<i32>} : memref<32x256xf32, #tpu.memory_space<vmem>>, vector<32x256xf32>,
    } else {
    }
    %c0 = arith.constant 0 : index
    %c0_1 = arith.constant 0 : index
    %3 = vector.load %arg7[%c0, %c0_1] : memref<32x256xf32, #tpu.memory_space<vmem>>, vector<32x256xf32>
    %c0_2 = arith.constant 0 : index
    %c0_3 = arith.constant 0 : index
    %4 = vector.load %arg3[%c0_2, %c0_3] : memref<32x128xbf16, #tpu.memory_space<vmem>>, vector<32x128xbf16>
    %c0_4 = arith.constant 0 : index
    %c0_5 = arith.constant 0 : index
    %5 = vector.load %arg4[%c0_4, %c0_5] : memref<128x256xbf16, #tpu.memory_space<vmem>>, vector<128x256xbf16>
    %cst = arith.constant dense<0.000000e+00> : vector<32x256xf32>
    %6 = tpu.matmul %4, %5, %cst {dimension_numbers = #tpu.dot_dimension_numbers<[1], [0], [0], [1], [0, 0, 1, 1], [], []>} : vector<32x128xbf16>, vector<128x256xbf16>, vector<32x256xf32> -> vector<32x256xf32>
    %7 = arith.addf %3, %6 : vector<32x256xf32>
    %c0_6 = arith.constant 0 : index
    %c0_7 = arith.constant 0 : index
    %8 = vector.load %arg7[%c0_6, %c0_7] : memref<32x256xf32, #tpu.memory_space<vmem>>, vector<32x256xf32>
    tpu.vector_store %arg7[%c0_6, %c0_7], %7 {strides = array<i32>} : memref<32x256xf32, #tpu.memory_space<vmem>>, vector<32x256xf32>,
    %c0_i32_8 = arith.constant 0 : i32
    %9 = arith.cmpi eq, %arg2, %c0_i32_8 : i32
    %10 = arith.extui %9 : i1 to i32
    %c0_i32_9 = arith.constant 0 : i32
    %11 = arith.cmpi ne, %10, %c0_i32_9 : i32
    scf.if %11 {
      %c0_10 = arith.constant 0 : index
      %c0_11 = arith.constant 0 : index
      %12 = vector.load %arg7[%c0_10, %c0_11] : memref<32x256xf32, #tpu.memory_space<vmem>>, vector<32x256xf32>
      %c0_12 = arith.constant 0 : index
      %c0_13 = arith.constant 0 : index
      %13 = vector.load %arg5[%c0_12, %c0_13] : memref<1x256xf32, #tpu.memory_space<vmem>>, vector<1x256xf32>
      %14 = vector.broadcast %13 : vector<1x256xf32> to vector<32x256xf32>
      %15 = arith.addf %12, %14 : vector<32x256xf32>
      %c0_14 = arith.constant 0 : index
      %c0_15 = arith.constant 0 : index
      %16 = vector.load %arg6[%c0_14, %c0_15] : memref<32x256xf32, #tpu.memory_space<vmem>>, vector<32x256xf32>
      tpu.vector_store %arg6[%c0_14, %c0_15], %15 {strides = array<i32>} : memref<32x256xf32, #tpu.memory_space<vmem>>, vector<32x256xf32>,
    } else {
    }
    return
  }
  func.func @transform_0(%arg0: i32, %arg1: i32, %arg2: i32) -> (i32, i32) {
    %c0_i32 = arith.constant 0 : i32
    return %arg0, %arg2 : i32, i32
  }
  func.func @transform_1(%arg0: i32, %arg1: i32, %arg2: i32) -> (i32, i32) {
    %c0_i32 = arith.constant 0 : i32
    return %arg2, %arg1 : i32, i32
  }
  func.func @transform_2(%arg0: i32, %arg1: i32, %arg2: i32) -> (i32, i32) {
    %c0_i32 = arith.constant 0 : i32
    %c0_i32_0 = arith.constant 0 : i32
    return %c0_i32, %arg1 : i32, i32
  }
  func.func @transform_3(%arg0: i32, %arg1: i32, %arg2: i32) -> (i32, i32) {
    %c0_i32 = arith.constant 0 : i32
    return %arg0, %arg1 : i32, i32
  }
}

</mosaic_0001>

<llo_original>
// kernel: phi_forward.12
$region0: #{phi_forward.12}
  #allocation0 [shape = 'u32[]', space=smem, size = 0x4, offset = 0x4, fixed_abs, tag = 'smem constant byte address 0x4 - core index']
  #allocation1 [shape = 'u32[144,128]{1,0:T(1,128)}', space=vmem, size = 0x12000, scoped, tag = 'internal scratch']
  #allocation2 [shape = 'f32[32,128]{1,0:T(8,128)}', space=vmem, size = 0x4000, scoped, tag = 'scratch operand']
  %s0 = inlined_call_operand.vmem [shape: bf16[32,128], index: 0, kind: input, shape index: {}]
  %s1 = inlined_call_operand.vmem [shape: bf16[128,384], index: 1, kind: input, shape index: {}]
  %s2 = inlined_call_operand.vmem [shape: f32[1,384], index: 2, kind: input, shape index: {}]
  %s3 = inlined_call_operand.vmem [shape: bf16[32,384], index: 3, kind: output, shape index: {}]
  %s4 = sld [smem:[#allocation0]]
  $region131: #{phi_forward.12} parent=0
    _
  %s6 = ssub.s32 1, %s4
  %s7 = scalar_select 0, %s6, %s4
  $region1: #{phi_forward.12} parent=0
    #allocation3 [shape = 'u8[65536]{0}', space=vmem, size = 0x10000, scoped, tag = 'input window, operand 1']
    #allocation4 [shape = 'u8[16384]{0}', space=vmem, size = 0x4000, scoped, tag = 'output window, operand 0']
    loop: start=0, step=1, limit=5
    $region2: #{phi_forward.12} parent=1 // loop_pre_header
      _
    $region3: #{phi_forward.12} parent=1 // loop_header
      %s9 = sphi 0, %s13
      %p10 = scmp.ge.s32.totalorder %s9, 5
      %s16 = sphi 0, %s35
      %s17 = sphi 0, %s31
      %s18 = sphi 0, %s27
      %s19 = sphi 0, %s16
      %s20 = sphi 0, %s17
      %s21 = sphi 0, %s18
      %s22 = sphi 0, %s19
      %s23 = sphi 0, %s20
      %s24 = sphi 0, %s21
      %s40 = sphi 0, %s42
      %s43 = sphi 0, %s40
      %s44 = sphi 0, %s43
      %s60 = sphi 0, %s44
      %s68 = sphi 0, %s70
      %s71 = sphi 0, %s68
      %s72 = sphi 0, %s71
      %s88 = sphi 0, %s72
      %s94 = sphi 0, %s96
      %s97 = sphi 0, %s94
      %s98 = sphi 0, %s97
      %s114 = sphi 0, %s98
      %s122 = sphi 0, %s124
      %s125 = sphi 0, %s122
      %s126 = sphi 0, %s125
      %s142 = sphi 0, %s126
    $region4: #{phi_forward.12} parent=1 // loop_header_branch
      %12 = sbr.rel (%p10) target = $region8
    $region5: #{phi_forward.12} parent=1 // loop_body
      %s14 = ssub.s32 %s9, 1
      %s15 = ssub.s32 %s9, 2
      %s25 = sadd.s32 1, %s18
      %p26 = scmp.ge.s32.totalorder %s25, 1
      %s27 = scalar_select %p26, 0, %s25
      %s28 = sadd.s32 1, %s17
      %s29 = scalar_select %p26, %s28, %s17
      %p30 = scmp.ge.s32.totalorder %s29, 3
      %s31 = scalar_select %p30, 0, %s29
      %s32 = sadd.s32 1, %s16
      %s33 = scalar_select %p30, %s32, %s16
      %p34 = scmp.ge.s32.totalorder %s33, 1
      %s35 = scalar_select %p34, 0, %s33
      %s36 = ssub.s32 %s16, %s35
      %s37 = ssub.s32 %s18, %s27
      %s38 = sor.u32 %s36, %s37
      %p39 = scmp.eq.s32.totalorder %s38, 0
      %s41 = sadd.s32 %s40, 1
      %s42 = scalar_select %p39, %s40, %s41
      %p45 = pneg %p39
      %p46 = scmp.eq.s32.totalorder %s9, 2
      %p47 = por %p45, %p46
      %p48 = scmp.ne.s32.totalorder %s40, %s43
      %p49 = scmp.eq.s32.totalorder %s9, 0
      %p50 = por %p48, %p49
      %p51 = scmp.ne.s32.totalorder %s40, %s43
      %p52 = scmp.eq.s32.totalorder %s14, 2
      %p53 = por %p51, %p52
      %p54 = scmp.ne.s32.totalorder %s43, %s44
      %p55 = scmp.eq.s32.totalorder %s14, 0
      %p56 = por %p54, %p55
      %p57 = scmp.ne.s32.totalorder %s43, %s44
      %p58 = scmp.eq.s32.totalorder %s15, 2
      %p59 = por %p57, %p58
      %p61 = scmp.ne.s32.totalorder %s44, %s60
      %p62 = scmp.eq.s32.totalorder %s15, 0
      %p63 = por %p61, %p62
      %s64 = ssub.s32 %s18, %s27
      %s65 = ssub.s32 %s17, %s31
      %s66 = sor.u32 %s64, %s65
      %p67 = scmp.eq.s32.totalorder %s66, 0
      %s69 = sadd.s32 %s68, 1
      %s70 = scalar_select %p67, %s68, %s69
      %p73 = pneg %p67
      %p74 = scmp.eq.s32.totalorder %s9, 2
      %p75 = por %p73, %p74
      %p76 = scmp.ne.s32.totalorder %s68, %s71
      %p77 = scmp.eq.s32.totalorder %s9, 0
      %p78 = por %p76, %p77
      %p79 = scmp.ne.s32.totalorder %s68, %s71
      %p80 = scmp.eq.s32.totalorder %s14, 2
      %p81 = por %p79, %p80
      %p82 = scmp.ne.s32.totalorder %s71, %s72
      %p83 = scmp.eq.s32.totalorder %s14, 0
      %p84 = por %p82, %p83
      %p85 = scmp.ne.s32.totalorder %s71, %s72
      %p86 = scmp.eq.s32.totalorder %s15, 2
      %p87 = por %p85, %p86
      %p89 = scmp.ne.s32.totalorder %s72, %s88
      %p90 = scmp.eq.s32.totalorder %s15, 0
      %p91 = por %p89, %p90
      %s92 = ssub.s32 %s17, %s31
      %p93 = scmp.eq.s32.totalorder %s92, 0
      %s95 = sadd.s32 %s94, 1
      %s96 = scalar_select %p93, %s94, %s95
      %p99 = pneg %p93
      %p100 = scmp.eq.s32.totalorder %s9, 2
      %p101 = por %p99, %p100
      %p102 = scmp.ne.s32.totalorder %s94, %s97
      %p103 = scmp.eq.s32.totalorder %s9, 0
      %p104 = por %p102, %p103
      %p105 = scmp.ne.s32.totalorder %s94, %s97
      %p106 = scmp.eq.s32.totalorder %s14, 2
      %p107 = por %p105, %p106
      %p108 = scmp.ne.s32.totalorder %s97, %s98
      %p109 = scmp.eq.s32.totalorder %s14, 0
      %p110 = por %p108, %p109
      %p111 = scmp.ne.s32.totalorder %s97, %s98
      %p112 = scmp.eq.s32.totalorder %s15, 2
      %p113 = por %p111, %p112
      %p115 = scmp.ne.s32.totalorder %s98, %s114
      %p116 = scmp.eq.s32.totalorder %s15, 0
      %p117 = por %p115, %p116
      %s118 = ssub.s32 %s16, %s35
      %s119 = ssub.s32 %s17, %s31
      %s120 = sor.u32 %s118, %s119
      %p121 = scmp.eq.s32.totalorder %s120, 0
      %s123 = sadd.s32 %s122, 1
      %s124 = scalar_select %p121, %s122, %s123
      %p127 = pneg %p121
      %p128 = scmp.eq.s32.totalorder %s9, 2
      %p129 = por %p127, %p128
      %p130 = scmp.ne.s32.totalorder %s122, %s125
      %p131 = scmp.eq.s32.totalorder %s9, 0
      %p132 = por %p130, %p131
      %p133 = scmp.ne.s32.totalorder %s122, %s125
      %p134 = scmp.eq.s32.totalorder %s14, 2
      %p135 = por %p133, %p134
      %p136 = scmp.ne.s32.totalorder %s125, %s126
      %p137 = scmp.eq.s32.totalorder %s14, 0
      %p138 = por %p136, %p137
      %p139 = scmp.ne.s32.totalorder %s125, %s126
      %p140 = scmp.eq.s32.totalorder %s15, 2
      %p141 = por %p139, %p140
      %p143 = scmp.ne.s32.totalorder %s126, %s142
      %p144 = scmp.eq.s32.totalorder %s15, 0
      %p145 = por %p143, %p144
      %p146 = scmp.le.s32.totalorder 1, %s9
      %p147 = scmp.lt.s32.totalorder %s9, 4
      %p148 = pnand %p146, %p147
      %p149 = pneg %p148
      // Predicated region
      $region9: #{phi_forward.12} parent=5 // pred_check
        _
      $region10: #{phi_forward.12} parent=5 // pred_check_branch
        %151 = sbr.rel (%p148) target = $region12
      $region11: #{phi_forward.12} parent=5 // pred_region
        %s152 = ssub.s32 %s9, 1
        // Predicated region
        $region13: #{phi_forward.12} parent=11 // pred_check
          %p153 = pneg %p56
        $region14: #{phi_forward.12} parent=11 // pred_check_branch
          %155 = sbr.rel (%p153) target = $region16
        $region15: #{phi_forward.12} parent=11 // pred_region
          %s156 = smul.u32 4, %s19
          %p157 = scmp.lt.s32.totalorder %s156, 3
          %s158 = scalar_select %p157, %s156, 3
          %p159 = scmp.lt.s32.totalorder %s21, 0
          %s160 = scalar_select %p159, %s21, 0
          %s161 = sadd.s32 %s160, %s158
          %s162 = smul.addr %s161, 4
          %s163 = scalar_lea.vmem %s0, %s162
          %s164 = smul.u32 4, %s19
        $region16: #{phi_forward.12} parent=11 // pred_fallthru
          _
      $region12: #{phi_forward.12} parent=5 // pred_fallthru
        _
      %p165 = scmp.lt.s32.totalorder %s9, 3
      // Predicated region
      $region17: #{phi_forward.12} parent=5 // pred_check
        %p166 = pneg %p165
      $region18: #{phi_forward.12} parent=5 // pred_check_branch
        %168 = sbr.rel (%p166) target = $region20
      $region19: #{phi_forward.12} parent=5 // pred_region
        // Predicated region
        $region21: #{phi_forward.12} parent=19 // pred_check
          %p169 = pneg %p78
        $region22: #{phi_forward.12} parent=19 // pred_check_branch
          %171 = sbr.rel (%p169) target = $region24
        $region23: #{phi_forward.12} parent=19 // pred_region
          %s172 = sand.u32 %s68, 1
          %s173 = sand.u32 %s68, 1
          %s174 = smul.addr %s173, 64
          %s175 = scalar_lea.vmem [#allocation3], %s174
          %s176 = smul.u32 16, %s18
          %s177 = smul.addr %s176, 3
          %s178 = sadd.s32 %s17, %s177
          %s179 = smul.addr %s178, 4
          %s180 = scalar_lea.vmem %s1, %s179
          // Predicated region
          $region25: #{phi_forward.12} parent=23 // pred_check
            _
          $region26: #{phi_forward.12} parent=23 // pred_check_branch
            %182 = sbr.rel (0) target = $region28
          $region27: #{phi_forward.12} parent=23 // pred_region
            // Predicated region
            $region29: #{phi_forward.12} parent=27 // pred_check
              _
            $region30: #{phi_forward.12} parent=27 // pred_check_branch
              %184 = sbr.rel target = $region32
            $region31: #{phi_forward.12} parent=27 // pred_region
              // Predicated region
              $region44: #{phi_forward.12} parent=31 // pred_check
                _
              $region45: #{phi_forward.12} parent=31 // pred_check_branch
                %229 = sbr.rel (0) target = $region47
              $region46: #{phi_forward.12} parent=31 // pred_region
                loop: start=0, step=1, limit=1
                $region48: #{phi_forward.12} parent=46 // loop_pre_header
                  _
                $region49: #{phi_forward.12} parent=46 // loop_header
                  %s231 = sphi 0, %s235
                  %p232 = scmp.ge.s32.totalorder %s231, 1
                  %s236 = sphi %s180, %s180
                  %s237 = sphi %s175, %s175
                $region50: #{phi_forward.12} parent=46 // loop_header_branch
                  %234 = sbr.rel (%p232) target = $region54
                $region51: #{phi_forward.12} parent=46 // loop_body
                  _
                $region52: #{phi_forward.12} parent=46 // loop_footer
                  %s235 = sadd.s32 1, %s231
                $region53: #{phi_forward.12} parent=46 // loop_footer_branch
                  %230 = sbr.rel target = $region49
                $region54: #{phi_forward.12} parent=46 // loop_exit
                  _
                loop: start=0, step=1, limit=1
                $region55: #{phi_forward.12} parent=46 // loop_pre_header
                  _
                $region56: #{phi_forward.12} parent=46 // loop_header
                  %s240 = sphi 0, %s244
                  %p241 = scmp.ge.s32.totalorder %s240, 1
                  %s245 = sphi %s180, %s180
                  %s246 = sphi %s175, %s175
                $region57: #{phi_forward.12} parent=46 // loop_header_branch
                  %243 = sbr.rel (%p241) target = $region61
                $region58: #{phi_forward.12} parent=46 // loop_body
                  %v247 = vld [vmem:[%s245] sm:$0xf]
                  %248 = vst [vmem:[%s246] sm:$0xf] %v247
                  %v249 = vld [vmem:[%s245 + $0xc] sm:$0xf]
                  %250 = vst [vmem:[%s246 + $0x4] sm:$0xf] %v249
                  %v251 = vld [vmem:[%s245 + $0x18] sm:$0xf]
                  %252 = vst [vmem:[%s246 + $0x8] sm:$0xf] %v251
                  %v253 = vld [vmem:[%s245 + $0x24] sm:$0xf]
                  %254 = vst [vmem:[%s246 + $0xc] sm:$0xf] %v253
                  %v255 = vld [vmem:[%s245 + $0x30] sm:$0xf]
                  %256 = vst [vmem:[%s246 + $0x10] sm:$0xf] %v255
                  %v257 = vld [vmem:[%s245 + $0x3c] sm:$0xf]
                  %258 = vst [vmem:[%s246 + $0x14] sm:$0xf] %v257
                  %v259 = vld [vmem:[%s245 + $0x48] sm:$0xf]
                  %260 = vst [vmem:[%s246 + $0x18] sm:$0xf] %v259
                  %v261 = vld [vmem:[%s245 + $0x54] sm:$0xf]
                  %262 = vst [vmem:[%s246 + $0x1c] sm:$0xf] %v261
                  %v263 = vld [vmem:[%s245 + $0x60] sm:$0xf]
                  %264 = vst [vmem:[%s246 + $0x20] sm:$0xf] %v263
                  %v265 = vld [vmem:[%s245 + $0x6c] sm:$0xf]
                  %266 = vst [vmem:[%s246 + $0x24] sm:$0xf] %v265
                  %v267 = vld [vmem:[%s245 + $0x78] sm:$0xf]
                  %268 = vst [vmem:[%s246 + $0x28] sm:$0xf] %v267
                  %v269 = vld [vmem:[%s245 + $0x84] sm:$0xf]
                  %270 = vst [vmem:[%s246 + $0x2c] sm:$0xf] %v269
                  %v271 = vld [vmem:[%s245 + $0x90] sm:$0xf]
                  %272 = vst [vmem:[%s246 + $0x30] sm:$0xf] %v271
                  %v273 = vld [vmem:[%s245 + $0x9c] sm:$0xf]
                  %274 = vst [vmem:[%s246 + $0x34] sm:$0xf] %v273
                  %v275 = vld [vmem:[%s245 + $0xa8] sm:$0xf]
                  %276 = vst [vmem:[%s246 + $0x38] sm:$0xf] %v275
                  %v277 = vld [vmem:[%s245 + $0xb4] sm:$0xf]
                  %278 = vst [vmem:[%s246 + $0x3c] sm:$0xf] %v277
                $region59: #{phi_forward.12} parent=46 // loop_footer
                  %s244 = sadd.s32 1, %s240
                $region60: #{phi_forward.12} parent=46 // loop_footer_branch
                  %239 = sbr.rel target = $region56
                $region61: #{phi_forward.12} parent=46 // loop_exit
                  _
              $region47: #{phi_forward.12} parent=31 // pred_fallthru
                _
            $region32: #{phi_forward.12} parent=27 // pred_fallthru
              _
            // Predicated region
            $region33: #{phi_forward.12} parent=27 // pred_check
              _
            $region34: #{phi_forward.12} parent=27 // pred_check_branch
              %186 = sbr.rel (0) target = $region36
            $region35: #{phi_forward.12} parent=27 // pred_region
              loop: start=0, step=1, limit=1
              $region37: #{phi_forward.12} parent=35 // loop_pre_header
                _
              $region38: #{phi_forward.12} parent=35 // loop_header
                %s189 = sphi 0, %s193
                %p190 = scmp.ge.s32.totalorder %s189, 1
                %s194 = sphi %s180, %s180
                %s195 = sphi %s175, %s175
              $region39: #{phi_forward.12} parent=35 // loop_header_branch
                %192 = sbr.rel (%p190) target = $region43
              $region40: #{phi_forward.12} parent=35 // loop_body
                %v196 = vld [vmem:[%s194] sm:$0xf]
                %197 = vst [vmem:[%s195] sm:$0xf] %v196
                %v198 = vld [vmem:[%s194 + $0xc] sm:$0xf]
                %199 = vst [vmem:[%s195 + $0x4] sm:$0xf] %v198
                %v200 = vld [vmem:[%s194 + $0x18] sm:$0xf]
                %201 = vst [vmem:[%s195 + $0x8] sm:$0xf] %v200
                %v202 = vld [vmem:[%s194 + $0x24] sm:$0xf]
                %203 = vst [vmem:[%s195 + $0xc] sm:$0xf] %v202
                %v204 = vld [vmem:[%s194 + $0x30] sm:$0xf]
                %205 = vst [vmem:[%s195 + $0x10] sm:$0xf] %v204
                %v206 = vld [vmem:[%s194 + $0x3c] sm:$0xf]
                %207 = vst [vmem:[%s195 + $0x14] sm:$0xf] %v206
                %v208 = vld [vmem:[%s194 + $0x48] sm:$0xf]
                %209 = vst [vmem:[%s195 + $0x18] sm:$0xf] %v208
                %v210 = vld [vmem:[%s194 + $0x54] sm:$0xf]
                %211 = vst [vmem:[%s195 + $0x1c] sm:$0xf] %v210
                %v212 = vld [vmem:[%s194 + $0x60] sm:$0xf]
                %213 = vst [vmem:[%s195 + $0x20] sm:$0xf] %v212
                %v214 = vld [vmem:[%s194 + $0x6c] sm:$0xf]
                %215 = vst [vmem:[%s195 + $0x24] sm:$0xf] %v214
                %v216 = vld [vmem:[%s194 + $0x78] sm:$0xf]
                %217 = vst [vmem:[%s195 + $0x28] sm:$0xf] %v216
                %v218 = vld [vmem:[%s194 + $0x84] sm:$0xf]
                %219 = vst [vmem:[%s195 + $0x2c] sm:$0xf] %v218
                %v220 = vld [vmem:[%s194 + $0x90] sm:$0xf]
                %221 = vst [vmem:[%s195 + $0x30] sm:$0xf] %v220
                %v222 = vld [vmem:[%s194 + $0x9c] sm:$0xf]
                %223 = vst [vmem:[%s195 + $0x34] sm:$0xf] %v222
                %v224 = vld [vmem:[%s194 + $0xa8] sm:$0xf]
                %225 = vst [vmem:[%s195 + $0x38] sm:$0xf] %v224
                %v226 = vld [vmem:[%s194 + $0xb4] sm:$0xf]
                %227 = vst [vmem:[%s195 + $0x3c] sm:$0xf] %v226
              $region41: #{phi_forward.12} parent=35 // loop_footer
                %s193 = sadd.s32 1, %s189
              $region42: #{phi_forward.12} parent=35 // loop_footer_branch
                %188 = sbr.rel target = $region38
              $region43: #{phi_forward.12} parent=35 // loop_exit
                _
            $region36: #{phi_forward.12} parent=27 // pred_fallthru
              _
          $region28: #{phi_forward.12} parent=23 // pred_fallthru
            _
          %279 = vnop
        $region24: #{phi_forward.12} parent=19 // pred_fallthru
          _
        // Predicated region
        $region62: #{phi_forward.12} parent=19 // pred_check
          %p280 = pneg %p104
        $region63: #{phi_forward.12} parent=19 // pred_check_branch
          %282 = sbr.rel (%p280) target = $region65
        $region64: #{phi_forward.12} parent=19 // pred_region
          %p283 = scmp.lt.s32.totalorder %s17, 2
          %s284 = scalar_select %p283, %s17, 2
          %s285 = scalar_lea.vmem %s2, %s284
        $region65: #{phi_forward.12} parent=19 // pred_fallthru
          _
      $region20: #{phi_forward.12} parent=5 // pred_fallthru
        _
      %p286 = scmp.le.s32.totalorder 1, %s9
      %p287 = scmp.lt.s32.totalorder %s9, 4
      %p288 = pnand %p286, %p287
      %p289 = pneg %p288
      // Predicated region
      $region66: #{phi_forward.12} parent=5 // pred_check
        _
      $region67: #{phi_forward.12} parent=5 // pred_check_branch
        %291 = sbr.rel (%p288) target = $region69
      $region68: #{phi_forward.12} parent=5 // pred_region
        %s292 = ssub.s32 %s9, 1
        %s293 = sand.u32 %s71, 1
        %s294 = sand.u32 %s71, 1
        %s295 = smul.addr %s294, 64
        %s296 = scalar_lea.vmem [#allocation3], %s295
        // Predicated region
        $region70: #{phi_forward.12} parent=68 // pred_check
          %p297 = pneg %p84
        $region71: #{phi_forward.12} parent=68 // pred_check_branch
          %299 = sbr.rel (%p297) target = $region73
        $region72: #{phi_forward.12} parent=68 // pred_region
          _
        $region73: #{phi_forward.12} parent=68 // pred_fallthru
          _
        %s300 = smul.u32 4, %s19
        %p301 = scmp.lt.s32.totalorder %s300, 3
        %s302 = scalar_select %p301, %s300, 3
        %p303 = scmp.lt.s32.totalorder %s21, 0
        %s304 = scalar_select %p303, %s21, 0
        %s305 = sadd.s32 %s304, %s302
        %s306 = smul.addr %s305, 4
        %s307 = scalar_lea.vmem %s0, %s306
        %p308 = pneg %p56
        %p309 = pneg %p53
        %s310 = sand.u32 %s71, 1
        %s311 = sand.u32 %s71, 1
        %s312 = smul.addr %s311, 64
        %s313 = scalar_lea.vmem [#allocation3], %s312
        %p314 = pneg %p84
        %p315 = pneg %p81
        %p316 = scmp.lt.s32.totalorder %s20, 2
        %s317 = scalar_select %p316, %s20, 2
        %s318 = scalar_lea.vmem %s2, %s317
        %p319 = pneg %p110
        %p320 = pneg %p107
        %p321 = pneg %p138
        %p322 = pneg %p135
        %s323 = sand.u32 %s125, 1
        %s324 = sand.u32 %s125, 1
        %s325 = smul.addr %s324, 16
        %s326 = scalar_lea.vmem [#allocation4], %s325
        %s327 = smul.u32 4, %s19
        %p328 = scmp.lt.s32.totalorder %s327, 3
        %s329 = scalar_select %p328, %s327, 3
        %p330 = scmp.lt.s32.totalorder %s21, 0
        %s331 = scalar_select %p330, %s21, 0
        %s332 = sadd.s32 %s331, %s329
        %s333 = smul.addr %s332, 4
        %s334 = scalar_lea.vmem %s0, %s333
        %s335 = smul.u32 4, %s19
        %s336 = smul.u32 16, %s21
        %p337 = scmp.lt.s32.totalorder %s20, 2
        %s338 = scalar_select %p337, %s20, 2
        %s339 = scalar_lea.vmem %s2, %s338
        %s340 = smul.u32 4, %s19
        %p342 = scmp.eq.s32.totalorder %s21, 0
        // Predicated region
        $region74: #{phi_forward.12} parent=68 // pred_check
          %p343 = pneg %p342
        $region75: #{phi_forward.12} parent=68 // pred_check_branch
          %345 = sbr.rel (%p343) target = $region77
        $region76: #{phi_forward.12} parent=68 // pred_region
          %346 = vst [vmem:[#allocation2] sm:$0xff] 0.0
          %347 = vst [vmem:[#allocation2 + $0x8] sm:$0xff] 0.0
          %348 = vst [vmem:[#allocation2 + $0x10] sm:$0xff] 0.0
          %349 = vst [vmem:[#allocation2 + $0x18] sm:$0xff] 0.0
        $region77: #{phi_forward.12} parent=68 // pred_fallthru
          _
        %v350 = vld [vmem:[#allocation2] sm:$0xff]
        %v351 = vld [vmem:[#allocation2 + $0x8] sm:$0xff]
        %v352 = vld [vmem:[#allocation2 + $0x10] sm:$0xff]
        %v353 = vld [vmem:[#allocation2 + $0x18] sm:$0xff]
        %v354 = vld [vmem:[%s334] sm:$0xf]
        %v355 = vld [vmem:[%s334 + $0x4] sm:$0xf]
        %v356 = vld [vmem:[%s334 + $0x8] sm:$0xf]
        %v357 = vld [vmem:[%s334 + $0xc] sm:$0xf]
        %v358 = vld [vmem:[%s296] sm:$0xf]
        %v359 = vld [vmem:[%s296 + $0x4] sm:$0xf]
        %v360 = vld [vmem:[%s296 + $0x8] sm:$0xf]
        %v361 = vld [vmem:[%s296 + $0xc] sm:$0xf]
        %v362 = vld [vmem:[%s296 + $0x10] sm:$0xf]
        %v363 = vld [vmem:[%s296 + $0x14] sm:$0xf]
        %v364 = vld [vmem:[%s296 + $0x18] sm:$0xf]
        %v365 = vld [vmem:[%s296 + $0x1c] sm:$0xf]
        %v366 = vld [vmem:[%s296 + $0x20] sm:$0xf]
        %v367 = vld [vmem:[%s296 + $0x24] sm:$0xf]
        %v368 = vld [vmem:[%s296 + $0x28] sm:$0xf]
        %v369 = vld [vmem:[%s296 + $0x2c] sm:$0xf]
        %v370 = vld [vmem:[%s296 + $0x30] sm:$0xf]
        %v371 = vld [vmem:[%s296 + $0x34] sm:$0xf]
        %v372 = vld [vmem:[%s296 + $0x38] sm:$0xf]
        %v373 = vld [vmem:[%s296 + $0x3c] sm:$0xf]
        %v378 = vunpack.c.l.b16 %v354
        %v379 = vunpack.c.l.b16 %v355
        %v380 = vunpack.c.l.b16 %v356
        %v381 = vunpack.c.l.b16 %v357
        %v382 = vpack.c.b16 %v379, %v378
        %v383 = vpack.c.b16 %v381, %v380
        %v402 = vunpack.c.l.b16 %v358
        %v403 = vunpack.c.l.b16 %v359
        %v404 = vunpack.c.l.b16 %v360
        %v405 = vunpack.c.l.b16 %v361
        %v406 = vunpack.c.l.b16 %v362
        %v407 = vunpack.c.l.b16 %v363
        %v408 = vunpack.c.l.b16 %v364
        %v409 = vunpack.c.l.b16 %v365
        %v410 = vunpack.c.l.b16 %v366
        %v411 = vunpack.c.l.b16 %v367
        %v412 = vunpack.c.l.b16 %v368
        %v413 = vunpack.c.l.b16 %v369
        %v414 = vunpack.c.l.b16 %v370
        %v415 = vunpack.c.l.b16 %v371
        %v416 = vunpack.c.l.b16 %v372
        %v417 = vunpack.c.l.b16 %v373
        %v418 = vpack.c.b16 %v403, %v402
        %v419 = vpack.c.b16 %v405, %v404
        %v420 = vpack.c.b16 %v407, %v406
        %v421 = vpack.c.b16 %v409, %v408
        %v422 = vpack.c.b16 %v411, %v410
        %v423 = vpack.c.b16 %v413, %v412
        %v424 = vpack.c.b16 %v415, %v414
        %v425 = vpack.c.b16 %v417, %v416
        %434 = vmatprep.subr.bf16.mxu0 0
        %435 = vmatpush1.bf16.msra.mxu0 %v418
        %436 = vmatprep.subr.bf16.mxu0 0
        %437 = vmatpush1.bf16.msra.mxu0 %v419
        %438 = vmatprep.subr.bf16.mxu0 0
        %439 = vmatpush1.bf16.msra.mxu0 %v420
        %440 = vmatprep.subr.bf16.mxu0 0
        %441 = vmatpush1.bf16.msra.mxu0 %v421
        %442 = vmatprep.subr.bf16.mxu0 0
        %443 = vmatpush1.bf16.msra.mxu0 %v422
        %444 = vmatprep.subr.bf16.mxu0 0
        %445 = vmatpush1.bf16.msra.mxu0 %v423
        %446 = vmatprep.subr.bf16.mxu0 0
        %447 = vmatpush1.bf16.msra.mxu0 %v424
        %448 = vmatprep.subr.bf16.mxu0 0
        %449 = vmatpush1.bf16.msra.mxu0 %v425
        %450 = vmatprep.subr.bf16.mxu0 0
        %451 = vmatpush1.bf16.msra.mxu0 0
        %452 = vmatprep.subr.bf16.mxu0 0
        %453 = vmatpush1.bf16.msra.mxu0 0
        %454 = vmatprep.subr.bf16.mxu0 0
        %455 = vmatpush1.bf16.msra.mxu0 0
        %456 = vmatprep.subr.bf16.mxu0 0
        %457 = vmatpush1.bf16.msra.mxu0 0
        %458 = vmatprep.subr.bf16.mxu0 0
        %459 = vmatpush1.bf16.msra.mxu0 0
        %460 = vmatprep.subr.bf16.mxu0 0
        %461 = vmatpush1.bf16.msra.mxu0 0
        %462 = vmatprep.subr.bf16.mxu0 0
        %463 = vmatpush1.bf16.msra.mxu0 0
        %464 = vmatprep.subr.bf16.mxu0 0
        %465 = vmatpush1.bf16.msra.mxu0 0
        %466 = vmatprep.mubr.bf16.mxu0 0
        %467 = vmatmul.mubr.bf16.gmra.mrb[0].mxu0 %v382
        %v468 = vpop.f32.mrb[0].mxu0
        %v469 = vadd.f32 0.0, %v468
        %v470 = vpop.f32.mrb[0].mxu0
        %v471 = vpop.f32.mrb[0].mxu0
        %v472 = vadd.f32 0.0, %v471
        %v473 = vpop.f32.mrb[0].mxu0
        %474 = vmatprep.mubr.bf16.mxu0 0
        %475 = vmatmul.mubr.bf16.gmra.mrb[0].mxu0 %v383
        %v476 = vpop.f32.mrb[0].mxu0
        %v477 = vadd.f32 0.0, %v476
        %v478 = vpop.f32.mrb[0].mxu0
        %v479 = vpop.f32.mrb[0].mxu0
        %v480 = vadd.f32 0.0, %v479
        %v481 = vpop.f32.mrb[0].mxu0
        %482 = vdwg.mxu0
        %v483 = vadd.f32 %v350, %v469
        %v484 = vadd.f32 %v351, %v472
        %v485 = vadd.f32 %v352, %v477
        %v486 = vadd.f32 %v353, %v480
        %487 = vst [vmem:[#allocation2] sm:$0xff] %v483
        %488 = vst [vmem:[#allocation2 + $0x8] sm:$0xff] %v484
        %489 = vst [vmem:[#allocation2 + $0x10] sm:$0xff] %v485
        %490 = vst [vmem:[#allocation2 + $0x18] sm:$0xff] %v486
        // Predicated region
        $region78: #{phi_forward.12} parent=68 // pred_check
          %p491 = pneg %p342
        $region79: #{phi_forward.12} parent=68 // pred_check_branch
          %493 = sbr.rel (%p491) target = $region81
        $region80: #{phi_forward.12} parent=68 // pred_region
          %v494 = vld [vmem:[#allocation2] sm:$0xff]
          %v495 = vld [vmem:[#allocation2 + $0x8] sm:$0xff]
          %v496 = vld [vmem:[#allocation2 + $0x10] sm:$0xff]
          %v497 = vld [vmem:[#allocation2 + $0x18] sm:$0xff]
          %v498 = vld [vmem:[%s339] sm:$0x1]
          %v500 = vlaneseq
          %v501 = vshrl.u32 %v500, 7
          %v502 = vsub.s32 0, %v501
          %v503 = vrot.slane %v498, %v502
          %v505 = vadd.f32 %v494, %v503
          %v506 = vadd.f32 %v495, %v503
          %v507 = vadd.f32 %v496, %v503
          %v508 = vadd.f32 %v497, %v503
          %v509 = vpack.c.bf16 %v506, %v505
          %v510 = vpack.c.bf16 %v508, %v507
          %v513 = vunpack.c.l.b16 %v509
          %v514 = vunpack.c.h.b16 %v509
          %v515 = vunpack.c.l.b16 %v510
          %v516 = vunpack.c.h.b16 %v510
          %v517 = vpack.c.b16 %v513, %v513
          %v518 = vpack.c.b16 %v514, %v514
          %v519 = vpack.c.b16 %v515, %v515
          %v520 = vpack.c.b16 %v516, %v516
          %525 = vst [vmem:[%s326] sm:$0xf] %v517
          %526 = vst [vmem:[%s326 + $0x4] sm:$0xf] %v518
          %527 = vst [vmem:[%s326 + $0x8] sm:$0xf] %v519
          %528 = vst [vmem:[%s326 + $0xc] sm:$0xf] %v520
        $region81: #{phi_forward.12} parent=68 // pred_fallthru
          _
        %s529 = sand.u32 %s125, 1
        %s530 = sand.u32 %s125, 1
        %s531 = smul.addr %s530, 16
        %s532 = scalar_lea.vmem [#allocation4], %s531
        // Predicated region
        $region82: #{phi_forward.12} parent=68 // pred_check
          %p533 = pneg %p135
        $region83: #{phi_forward.12} parent=68 // pred_check_branch
          %535 = sbr.rel (%p533) target = $region85
        $region84: #{phi_forward.12} parent=68 // pred_region
          %s536 = smul.u32 4, %s19
          %s537 = smul.addr %s536, 3
          %s538 = sadd.s32 %s20, %s537
          %s539 = smul.addr %s538, 4
          %s540 = scalar_lea.vmem %s3, %s539
          // Predicated region
          $region86: #{phi_forward.12} parent=84 // pred_check
            _
          $region87: #{phi_forward.12} parent=84 // pred_check_branch
            %542 = sbr.rel (0) target = $region89
          $region88: #{phi_forward.12} parent=84 // pred_region
            // Predicated region
            $region90: #{phi_forward.12} parent=88 // pred_check
              _
            $region91: #{phi_forward.12} parent=88 // pred_check_branch
              %544 = sbr.rel target = $region93
            $region92: #{phi_forward.12} parent=88 // pred_region
              // Predicated region
              $region105: #{phi_forward.12} parent=92 // pred_check
                _
              $region106: #{phi_forward.12} parent=92 // pred_check_branch
                %565 = sbr.rel (0) target = $region108
              $region107: #{phi_forward.12} parent=92 // pred_region
                loop: start=0, step=1, limit=1
                $region109: #{phi_forward.12} parent=107 // loop_pre_header
                  _
                $region110: #{phi_forward.12} parent=107 // loop_header
                  %s567 = sphi 0, %s571
                  %p568 = scmp.ge.s32.totalorder %s567, 1
                  %s572 = sphi %s532, %s532
                  %s573 = sphi %s540, %s540
                $region111: #{phi_forward.12} parent=107 // loop_header_branch
                  %570 = sbr.rel (%p568) target = $region115
                $region112: #{phi_forward.12} parent=107 // loop_body
                  _
                $region113: #{phi_forward.12} parent=107 // loop_footer
                  %s571 = sadd.s32 1, %s567
                $region114: #{phi_forward.12} parent=107 // loop_footer_branch
                  %566 = sbr.rel target = $region110
                $region115: #{phi_forward.12} parent=107 // loop_exit
                  _
                loop: start=0, step=1, limit=1
                $region116: #{phi_forward.12} parent=107 // loop_pre_header
                  _
                $region117: #{phi_forward.12} parent=107 // loop_header
                  %s576 = sphi 0, %s580
                  %p577 = scmp.ge.s32.totalorder %s576, 1
                  %s581 = sphi %s532, %s532
                  %s582 = sphi %s540, %s540
                $region118: #{phi_forward.12} parent=107 // loop_header_branch
                  %579 = sbr.rel (%p577) target = $region122
                $region119: #{phi_forward.12} parent=107 // loop_body
                  %v583 = vld [vmem:[%s581] sm:$0xf]
                  %584 = vst [vmem:[%s582] sm:$0xf] %v583
                  %v585 = vld [vmem:[%s581 + $0x4] sm:$0xf]
                  %586 = vst [vmem:[%s582 + $0xc] sm:$0xf] %v585
                  %v587 = vld [vmem:[%s581 + $0x8] sm:$0xf]
                  %588 = vst [vmem:[%s582 + $0x18] sm:$0xf] %v587
                  %v589 = vld [vmem:[%s581 + $0xc] sm:$0xf]
                  %590 = vst [vmem:[%s582 + $0x24] sm:$0xf] %v589
                $region120: #{phi_forward.12} parent=107 // loop_footer
                  %s580 = sadd.s32 1, %s576
                $region121: #{phi_forward.12} parent=107 // loop_footer_branch
                  %575 = sbr.rel target = $region117
                $region122: #{phi_forward.12} parent=107 // loop_exit
                  _
              $region108: #{phi_forward.12} parent=92 // pred_fallthru
                _
            $region93: #{phi_forward.12} parent=88 // pred_fallthru
              _
            // Predicated region
            $region94: #{phi_forward.12} parent=88 // pred_check
              _
            $region95: #{phi_forward.12} parent=88 // pred_check_branch
              %546 = sbr.rel (0) target = $region97
            $region96: #{phi_forward.12} parent=88 // pred_region
              loop: start=0, step=1, limit=1
              $region98: #{phi_forward.12} parent=96 // loop_pre_header
                _
              $region99: #{phi_forward.12} parent=96 // loop_header
                %s549 = sphi 0, %s553
                %p550 = scmp.ge.s32.totalorder %s549, 1
                %s554 = sphi %s532, %s532
                %s555 = sphi %s540, %s540
              $region100: #{phi_forward.12} parent=96 // loop_header_branch
                %552 = sbr.rel (%p550) target = $region104
              $region101: #{phi_forward.12} parent=96 // loop_body
                %v556 = vld [vmem:[%s554] sm:$0xf]
                %557 = vst [vmem:[%s555] sm:$0xf] %v556
                %v558 = vld [vmem:[%s554 + $0x4] sm:$0xf]
                %559 = vst [vmem:[%s555 + $0xc] sm:$0xf] %v558
                %v560 = vld [vmem:[%s554 + $0x8] sm:$0xf]
                %561 = vst [vmem:[%s555 + $0x18] sm:$0xf] %v560
                %v562 = vld [vmem:[%s554 + $0xc] sm:$0xf]
                %563 = vst [vmem:[%s555 + $0x24] sm:$0xf] %v562
              $region102: #{phi_forward.12} parent=96 // loop_footer
                %s553 = sadd.s32 1, %s549
              $region103: #{phi_forward.12} parent=96 // loop_footer_branch
                %548 = sbr.rel target = $region99
              $region104: #{phi_forward.12} parent=96 // loop_exit
                _
            $region97: #{phi_forward.12} parent=88 // pred_fallthru
              _
          $region89: #{phi_forward.12} parent=84 // pred_fallthru
            _
          %591 = vnop
        $region85: #{phi_forward.12} parent=68 // pred_fallthru
          _
      $region69: #{phi_forward.12} parent=5 // pred_fallthru
        _
      %p592 = scmp.le.s32.totalorder 2, %s9
      // Predicated region
      $region123: #{phi_forward.12} parent=5 // pred_check
        %p593 = pneg %p592
      $region124: #{phi_forward.12} parent=5 // pred_check_branch
        %595 = sbr.rel (%p593) target = $region126
      $region125: #{phi_forward.12} parent=5 // pred_region
        %s596 = ssub.s32 %s9, 2
        // Predicated region
        $region127: #{phi_forward.12} parent=125 // pred_check
          %p597 = pneg %p141
        $region128: #{phi_forward.12} parent=125 // pred_check_branch
          %599 = sbr.rel (%p597) target = $region130
        $region129: #{phi_forward.12} parent=125 // pred_region
          %s600 = sand.u32 %s126, 1
          %s601 = sand.u32 %s126, 1
          %s602 = smul.addr %s601, 16
          %s603 = scalar_lea.vmem [#allocation4], %s602
        $region130: #{phi_forward.12} parent=125 // pred_fallthru
          _
      $region126: #{phi_forward.12} parent=5 // pred_fallthru
        _
    $region6: #{phi_forward.12} parent=1 // loop_footer
      %s13 = sadd.s32 1, %s9
    $region7: #{phi_forward.12} parent=1 // loop_footer_branch
      %8 = sbr.rel target = $region3
    $region8: #{phi_forward.12} parent=1 // loop_exit
      _

// kernel: phi_forward.14
$region0: #{phi_forward.14}
  #allocation0 [shape = 'u32[]', space=smem, size = 0x4, offset = 0x4, fixed_abs, tag = 'smem constant byte address 0x4 - core index']
  #allocation1 [shape = 'u32[144,128]{1,0:T(1,128)}', space=vmem, size = 0x12000, scoped, tag = 'internal scratch']
  #allocation2 [shape = 'f32[32,128]{1,0:T(8,128)}', space=vmem, size = 0x4000, scoped, tag = 'scratch operand']
  %s0 = inlined_call_operand.vmem [shape: bf16[32,128], index: 0, kind: input, shape index: {}]
  %s1 = inlined_call_operand.vmem [shape: bf16[128,128], index: 1, kind: input, shape index: {}]
  %s2 = inlined_call_operand.vmem [shape: f32[1,128], index: 2, kind: input, shape index: {}]
  %s3 = inlined_call_operand.vmem [shape: bf16[32,128], index: 3, kind: input, shape index: {}]
  %s4 = inlined_call_operand.vmem [shape: f32[1,128], index: 4, kind: input, shape index: {}]
  %s5 = inlined_call_operand.vmem [shape: f32[1,128], index: 5, kind: input, shape index: {}]
  %s6 = inlined_call_operand.vmem [shape: bf16[32,128], index: 6, kind: output, shape index: {}]
  %s7 = sld [smem:[#allocation0]]
  $region42: #{phi_forward.14} parent=0
    _
  %s9 = ssub.s32 1, %s7
  %s10 = scalar_select 0, %s9, %s7
  // Predicated region
  $region2: #{phi_forward.14} parent=0 // pred_check
    _
  $region3: #{phi_forward.14} parent=0 // pred_check_branch
    %12 = sbr.rel (0) target = $region5
  $region4: #{phi_forward.14} parent=0 // pred_region
    _
  $region5: #{phi_forward.14} parent=0 // pred_fallthru
    _
  // Predicated region
  $region6: #{phi_forward.14} parent=0 // pred_check
    _
  $region7: #{phi_forward.14} parent=0 // pred_check_branch
    %14 = sbr.rel (0) target = $region9
  $region8: #{phi_forward.14} parent=0 // pred_region
    _
  $region9: #{phi_forward.14} parent=0 // pred_fallthru
    _
  // Predicated region
  $region10: #{phi_forward.14} parent=0 // pred_check
    _
  $region11: #{phi_forward.14} parent=0 // pred_check_branch
    %16 = sbr.rel (0) target = $region13
  $region12: #{phi_forward.14} parent=0 // pred_region
    _
  $region13: #{phi_forward.14} parent=0 // pred_fallthru
    _
  // Predicated region
  $region14: #{phi_forward.14} parent=0 // pred_check
    _
  $region15: #{phi_forward.14} parent=0 // pred_check_branch
    %18 = sbr.rel (0) target = $region17
  $region16: #{phi_forward.14} parent=0 // pred_region
    _
  $region17: #{phi_forward.14} parent=0 // pred_fallthru
    _
  // Predicated region
  $region18: #{phi_forward.14} parent=0 // pred_check
    _
  $region19: #{phi_forward.14} parent=0 // pred_check_branch
    %20 = sbr.rel (0) target = $region21
  $region20: #{phi_forward.14} parent=0 // pred_region
    _
  $region21: #{phi_forward.14} parent=0 // pred_fallthru
    _
  // Predicated region
  $region22: #{phi_forward.14} parent=0 // pred_check
    _
  $region23: #{phi_forward.14} parent=0 // pred_check_branch
    %22 = sbr.rel (0) target = $region25
  $region24: #{phi_forward.14} parent=0 // pred_region
    _
  $region25: #{phi_forward.14} parent=0 // pred_fallthru
    _
  %p24 = scmp.eq.s32.totalorder 0, 0
  // Predicated region
  $region26: #{phi_forward.14} parent=0 // pred_check
    %p25 = pneg %p24
  $region27: #{phi_forward.14} parent=0 // pred_check_branch
    %27 = sbr.rel (%p25) target = $region29
  $region28: #{phi_forward.14} parent=0 // pred_region
    %28 = vst [vmem:[#allocation2] sm:$0xff] 0.0
    %29 = vst [vmem:[#allocation2 + $0x8] sm:$0xff] 0.0
    %30 = vst [vmem:[#allocation2 + $0x10] sm:$0xff] 0.0
    %31 = vst [vmem:[#allocation2 + $0x18] sm:$0xff] 0.0
  $region29: #{phi_forward.14} parent=0 // pred_fallthru
    _
  %v32 = vld [vmem:[#allocation2] sm:$0xff]
  %v33 = vld [vmem:[#allocation2 + $0x8] sm:$0xff]
  %v34 = vld [vmem:[#allocation2 + $0x10] sm:$0xff]
  %v35 = vld [vmem:[#allocation2 + $0x18] sm:$0xff]
  %v36 = vld [vmem:[%s0] sm:$0xf]
  %v37 = vld [vmem:[%s0 + $0x4] sm:$0xf]
  %v38 = vld [vmem:[%s0 + $0x8] sm:$0xf]
  %v39 = vld [vmem:[%s0 + $0xc] sm:$0xf]
  %v40 = vld [vmem:[%s1] sm:$0xf]
  %v41 = vld [vmem:[%s1 + $0x4] sm:$0xf]
  %v42 = vld [vmem:[%s1 + $0x8] sm:$0xf]
  %v43 = vld [vmem:[%s1 + $0xc] sm:$0xf]
  %v44 = vld [vmem:[%s1 + $0x10] sm:$0xf]
  %v45 = vld [vmem:[%s1 + $0x14] sm:$0xf]
  %v46 = vld [vmem:[%s1 + $0x18] sm:$0xf]
  %v47 = vld [vmem:[%s1 + $0x1c] sm:$0xf]
  %v48 = vld [vmem:[%s1 + $0x20] sm:$0xf]
  %v49 = vld [vmem:[%s1 + $0x24] sm:$0xf]
  %v50 = vld [vmem:[%s1 + $0x28] sm:$0xf]
  %v51 = vld [vmem:[%s1 + $0x2c] sm:$0xf]
  %v52 = vld [vmem:[%s1 + $0x30] sm:$0xf]
  %v53 = vld [vmem:[%s1 + $0x34] sm:$0xf]
  %v54 = vld [vmem:[%s1 + $0x38] sm:$0xf]
  %v55 = vld [vmem:[%s1 + $0x3c] sm:$0xf]
  %v60 = vunpack.c.l.b16 %v36
  %v61 = vunpack.c.l.b16 %v37
  %v62 = vunpack.c.l.b16 %v38
  %v63 = vunpack.c.l.b16 %v39
  %v64 = vpack.c.b16 %v61, %v60
  %v65 = vpack.c.b16 %v63, %v62
  %v84 = vunpack.c.l.b16 %v40
  %v85 = vunpack.c.l.b16 %v41
  %v86 = vunpack.c.l.b16 %v42
  %v87 = vunpack.c.l.b16 %v43
  %v88 = vunpack.c.l.b16 %v44
  %v89 = vunpack.c.l.b16 %v45
  %v90 = vunpack.c.l.b16 %v46
  %v91 = vunpack.c.l.b16 %v47
  %v92 = vunpack.c.l.b16 %v48
  %v93 = vunpack.c.l.b16 %v49
  %v94 = vunpack.c.l.b16 %v50
  %v95 = vunpack.c.l.b16 %v51
  %v96 = vunpack.c.l.b16 %v52
  %v97 = vunpack.c.l.b16 %v53
  %v98 = vunpack.c.l.b16 %v54
  %v99 = vunpack.c.l.b16 %v55
  %v100 = vpack.c.b16 %v85, %v84
  %v101 = vpack.c.b16 %v87, %v86
  %v102 = vpack.c.b16 %v89, %v88
  %v103 = vpack.c.b16 %v91, %v90
  %v104 = vpack.c.b16 %v93, %v92
  %v105 = vpack.c.b16 %v95, %v94
  %v106 = vpack.c.b16 %v97, %v96
  %v107 = vpack.c.b16 %v99, %v98
  %116 = vmatprep.subr.bf16.mxu0 0
  %117 = vmatpush1.bf16.msra.mxu0 %v100
  %118 = vmatprep.subr.bf16.mxu0 0
  %119 = vmatpush1.bf16.msra.mxu0 %v101
  %120 = vmatprep.subr.bf16.mxu0 0
  %121 = vmatpush1.bf16.msra.mxu0 %v102
  %122 = vmatprep.subr.bf16.mxu0 0
  %123 = vmatpush1.bf16.msra.mxu0 %v103
  %124 = vmatprep.subr.bf16.mxu0 0
  %125 = vmatpush1.bf16.msra.mxu0 %v104
  %126 = vmatprep.subr.bf16.mxu0 0
  %127 = vmatpush1.bf16.msra.mxu0 %v105
  %128 = vmatprep.subr.bf16.mxu0 0
  %129 = vmatpush1.bf16.msra.mxu0 %v106
  %130 = vmatprep.subr.bf16.mxu0 0
  %131 = vmatpush1.bf16.msra.mxu0 %v107
  %132 = vmatprep.subr.bf16.mxu0 0
  %133 = vmatpush1.bf16.msra.mxu0 0
  %134 = vmatprep.subr.bf16.mxu0 0
  %135 = vmatpush1.bf16.msra.mxu0 0
  %136 = vmatprep.subr.bf16.mxu0 0
  %137 = vmatpush1.bf16.msra.mxu0 0
  %138 = vmatprep.subr.bf16.mxu0 0
  %139 = vmatpush1.bf16.msra.mxu0 0
  %140 = vmatprep.subr.bf16.mxu0 0
  %141 = vmatpush1.bf16.msra.mxu0 0
  %142 = vmatprep.subr.bf16.mxu0 0
  %143 = vmatpush1.bf16.msra.mxu0 0
  %144 = vmatprep.subr.bf16.mxu0 0
  %145 = vmatpush1.bf16.msra.mxu0 0
  %146 = vmatprep.subr.bf16.mxu0 0
  %147 = vmatpush1.bf16.msra.mxu0 0
  %148 = vmatprep.mubr.bf16.mxu0 0
  %149 = vmatmul.mubr.bf16.gmra.mrb[0].mxu0 %v64
  %v150 = vpop.f32.mrb[0].mxu0
  %v151 = vadd.f32 0.0, %v150
  %v152 = vpop.f32.mrb[0].mxu0
  %v153 = vpop.f32.mrb[0].mxu0
  %v154 = vadd.f32 0.0, %v153
  %v155 = vpop.f32.mrb[0].mxu0
  %156 = vmatprep.mubr.bf16.mxu0 0
  %157 = vmatmul.mubr.bf16.gmra.mrb[0].mxu0 %v65
  %v158 = vpop.f32.mrb[0].mxu0
  %v159 = vadd.f32 0.0, %v158
  %v160 = vpop.f32.mrb[0].mxu0
  %v161 = vpop.f32.mrb[0].mxu0
  %v162 = vadd.f32 0.0, %v161
  %v163 = vpop.f32.mrb[0].mxu0
  %164 = vdwg.mxu0
  %v165 = vadd.f32 %v32, %v151
  %v166 = vadd.f32 %v33, %v154
  %v167 = vadd.f32 %v34, %v159
  %v168 = vadd.f32 %v35, %v162
  %169 = vst [vmem:[#allocation2] sm:$0xff] %v165
  %170 = vst [vmem:[#allocation2 + $0x8] sm:$0xff] %v166
  %171 = vst [vmem:[#allocation2 + $0x10] sm:$0xff] %v167
  %172 = vst [vmem:[#allocation2 + $0x18] sm:$0xff] %v168
  // Predicated region
  $region30: #{phi_forward.14} parent=0 // pred_check
    %p173 = pneg %p24
  $region31: #{phi_forward.14} parent=0 // pred_check_branch
    %175 = sbr.rel (%p173) target = $region33
  $region32: #{phi_forward.14} parent=0 // pred_region
    %v176 = vld [vmem:[#allocation2] sm:$0xff]
    %v177 = vld [vmem:[#allocation2 + $0x8] sm:$0xff]
    %v178 = vld [vmem:[#allocation2 + $0x10] sm:$0xff]
    %v179 = vld [vmem:[#allocation2 + $0x18] sm:$0xff]
    %v180 = vld [vmem:[%s2] sm:$0x1]
    %v182 = vlaneseq
    %v183 = vshrl.u32 %v182, 7
    %v184 = vsub.s32 0, %v183
    %v185 = vrot.slane %v180, %v184
    %v187 = vadd.f32 %v176, %v185
    %v188 = vadd.f32 %v177, %v185
    %v189 = vadd.f32 %v178, %v185
    %v190 = vadd.f32 %v179, %v185
    %v191 = vld [vmem:[%s3] sm:$0xf]
    %v192 = vld [vmem:[%s3 + $0x4] sm:$0xf]
    %v193 = vld [vmem:[%s3 + $0x8] sm:$0xf]
    %v194 = vld [vmem:[%s3 + $0xc] sm:$0xf]
    %v195 = vunpack.c.l.bf16 %v191
    %v196 = vunpack.c.l.bf16 %v192
    %v197 = vunpack.c.l.bf16 %v193
    %v198 = vunpack.c.l.bf16 %v194
    %v199 = vadd.f32 %v187, %v195
    %v200 = vadd.f32 %v188, %v196
    %v201 = vadd.f32 %v189, %v197
    %v202 = vadd.f32 %v190, %v198
    %203 = vadd.xlane.f32.xlu0 %v199
    %v204 = vpop.xlane.xlu0 %203
    %205 = vadd.xlane.f32.xlu0 %v200
    %v206 = vpop.xlane.xlu0 %205
    %207 = vadd.xlane.f32.xlu0 %v201
    %v208 = vpop.xlane.xlu0 %207
    %209 = vadd.xlane.f32.xlu0 %v202
    %v210 = vpop.xlane.xlu0 %209
    %v211 = vrcp.pop 128.0
    %v212 = vmul.f32 %v204, %v211
    %v213 = vmul.f32 %v206, %v211
    %v214 = vmul.f32 %v208, %v211
    %v215 = vmul.f32 %v210, %v211
    %v216 = vsub.f32 %v199, %v212
    %v217 = vsub.f32 %v200, %v213
    %v218 = vsub.f32 %v201, %v214
    %v219 = vsub.f32 %v202, %v215
    %v220 = vmul.f32 %v216, %v216
    %v221 = vmul.f32 %v217, %v217
    %v222 = vmul.f32 %v218, %v218
    %v223 = vmul.f32 %v219, %v219
    %224 = vadd.xlane.f32.xlu0 %v220
    %v225 = vpop.xlane.xlu0 %224
    %226 = vadd.xlane.f32.xlu0 %v221
    %v227 = vpop.xlane.xlu0 %226
    %228 = vadd.xlane.f32.xlu0 %v222
    %v229 = vpop.xlane.xlu0 %228
    %230 = vadd.xlane.f32.xlu0 %v223
    %v231 = vpop.xlane.xlu0 %230
    %v232 = vmul.f32 %v225, %v211
    %v233 = vmul.f32 %v227, %v211
    %v234 = vmul.f32 %v229, %v211
    %v235 = vmul.f32 %v231, %v211
    %v236 = vadd.f32 %v232, 1e-05
    %v237 = vadd.f32 %v233, 1e-05
    %v238 = vadd.f32 %v234, 1e-05
    %v239 = vadd.f32 %v235, 1e-05
    %v240 = vrsqrt.pop %v236
    %v241 = vrsqrt.pop %v237
    %v242 = vrsqrt.pop %v238
    %v243 = vrsqrt.pop %v239
    %v244 = vmul.f32 %v216, %v240
    %v245 = vmul.f32 %v217, %v241
    %v246 = vmul.f32 %v218, %v242
    %v247 = vmul.f32 %v219, %v243
    %v248 = vld [vmem:[%s4] sm:$0x1]
    %v250 = vlaneseq
    %v251 = vshrl.u32 %v250, 7
    %v252 = vsub.s32 0, %v251
    %v253 = vrot.slane %v248, %v252
    %v255 = vmul.f32 %v244, %v253
    %v256 = vmul.f32 %v245, %v253
    %v257 = vmul.f32 %v246, %v253
    %v258 = vmul.f32 %v247, %v253
    %v259 = vld [vmem:[%s5] sm:$0x1]
    %v261 = vlaneseq
    %v262 = vshrl.u32 %v261, 7
    %v263 = vsub.s32 0, %v262
    %v264 = vrot.slane %v259, %v263
    %v266 = vadd.f32 %v255, %v264
    %v267 = vadd.f32 %v256, %v264
    %v268 = vadd.f32 %v257, %v264
    %v269 = vadd.f32 %v258, %v264
    %v270 = vpack.c.bf16 %v267, %v266
    %v271 = vpack.c.bf16 %v269, %v268
    %v274 = vunpack.c.l.b16 %v270
    %v275 = vunpack.c.h.b16 %v270
    %v276 = vunpack.c.l.b16 %v271
    %v277 = vunpack.c.h.b16 %v271
    %v278 = vpack.c.b16 %v274, %v274
    %v279 = vpack.c.b16 %v275, %v275
    %v280 = vpack.c.b16 %v276, %v276
    %v281 = vpack.c.b16 %v277, %v277
    %286 = vst [vmem:[%s6] sm:$0xf] %v278
    %287 = vst [vmem:[%s6 + $0x4] sm:$0xf] %v279
    %288 = vst [vmem:[%s6 + $0x8] sm:$0xf] %v280
    %289 = vst [vmem:[%s6 + $0xc] sm:$0xf] %v281
  $region33: #{phi_forward.14} parent=0 // pred_fallthru
    _
  // Predicated region
  $region34: #{phi_forward.14} parent=0 // pred_check
    _
  $region35: #{phi_forward.14} parent=0 // pred_check_branch
    %291 = sbr.rel (0) target = $region37
  $region36: #{phi_forward.14} parent=0 // pred_region
    _
  $region37: #{phi_forward.14} parent=0 // pred_fallthru
    _
  // Predicated region
  $region38: #{phi_forward.14} parent=0 // pred_check
    _
  $region39: #{phi_forward.14} parent=0 // pred_check_branch
    %293 = sbr.rel (0) target = $region41
  $region40: #{phi_forward.14} parent=0 // pred_region
    _
  $region41: #{phi_forward.14} parent=0 // pred_fallthru
    _

// kernel: phi_forward.15
$region0: #{phi_forward.15}
  #allocation0 [shape = 'u32[]', space=smem, size = 0x4, offset = 0x4, fixed_abs, tag = 'smem constant byte address 0x4 - core index']
  #allocation1 [shape = 'u32[144,128]{1,0:T(1,128)}', space=vmem, size = 0x12000, scoped, tag = 'internal scratch']
  #allocation2 [shape = 'f32[32,256]{1,0:T(8,128)}', space=vmem, size = 0x8000, scoped, tag = 'scratch operand']
  %s0 = inlined_call_operand.vmem [shape: bf16[32,128], index: 0, kind: input, shape index: {}]
  %s1 = inlined_call_operand.vmem [shape: bf16[128,256], index: 1, kind: input, shape index: {}]
  %s2 = inlined_call_operand.vmem [shape: f32[1,256], index: 2, kind: input, shape index: {}]
  %s3 = inlined_call_operand.vmem [shape: bf16[32,256], index: 3, kind: output, shape index: {}]
  %s4 = sld [smem:[#allocation0]]
  $region30: #{phi_forward.15} parent=0
    _
  %s6 = ssub.s32 1, %s4
  %s7 = scalar_select 0, %s6, %s4
  // Predicated region
  $region2: #{phi_forward.15} parent=0 // pred_check
    _
  $region3: #{phi_forward.15} parent=0 // pred_check_branch
    %9 = sbr.rel (0) target = $region5
  $region4: #{phi_forward.15} parent=0 // pred_region
    _
  $region5: #{phi_forward.15} parent=0 // pred_fallthru
    _
  // Predicated region
  $region6: #{phi_forward.15} parent=0 // pred_check
    _
  $region7: #{phi_forward.15} parent=0 // pred_check_branch
    %11 = sbr.rel (0) target = $region9
  $region8: #{phi_forward.15} parent=0 // pred_region
    _
  $region9: #{phi_forward.15} parent=0 // pred_fallthru
    _
  // Predicated region
  $region10: #{phi_forward.15} parent=0 // pred_check
    _
  $region11: #{phi_forward.15} parent=0 // pred_check_branch
    %13 = sbr.rel (0) target = $region13
  $region12: #{phi_forward.15} parent=0 // pred_region
    _
  $region13: #{phi_forward.15} parent=0 // pred_fallthru
    _
  %p15 = scmp.eq.s32.totalorder 0, 0
  // Predicated region
  $region14: #{phi_forward.15} parent=0 // pred_check
    %p16 = pneg %p15
  $region15: #{phi_forward.15} parent=0 // pred_check_branch
    %18 = sbr.rel (%p16) target = $region17
  $region16: #{phi_forward.15} parent=0 // pred_region
    %19 = vst [vmem:[#allocation2] sm:$0xff] 0.0
    %20 = vst [vmem:[#allocation2 + $0x8] sm:$0xff] 0.0
    %21 = vst [vmem:[#allocation2 + $0x10] sm:$0xff] 0.0
    %22 = vst [vmem:[#allocation2 + $0x18] sm:$0xff] 0.0
    %23 = vst [vmem:[#allocation2 + $0x20] sm:$0xff] 0.0
    %24 = vst [vmem:[#allocation2 + $0x28] sm:$0xff] 0.0
    %25 = vst [vmem:[#allocation2 + $0x30] sm:$0xff] 0.0
    %26 = vst [vmem:[#allocation2 + $0x38] sm:$0xff] 0.0
  $region17: #{phi_forward.15} parent=0 // pred_fallthru
    _
  %v27 = vld [vmem:[#allocation2] sm:$0xff]
  %v28 = vld [vmem:[#allocation2 + $0x8] sm:$0xff]
  %v29 = vld [vmem:[#allocation2 + $0x10] sm:$0xff]
  %v30 = vld [vmem:[#allocation2 + $0x18] sm:$0xff]
  %v31 = vld [vmem:[#allocation2 + $0x20] sm:$0xff]
  %v32 = vld [vmem:[#allocation2 + $0x28] sm:$0xff]
  %v33 = vld [vmem:[#allocation2 + $0x30] sm:$0xff]
  %v34 = vld [vmem:[#allocation2 + $0x38] sm:$0xff]
  %v35 = vld [vmem:[%s0] sm:$0xf]
  %v36 = vld [vmem:[%s0 + $0x4] sm:$0xf]
  %v37 = vld [vmem:[%s0 + $0x8] sm:$0xf]
  %v38 = vld [vmem:[%s0 + $0xc] sm:$0xf]
  %v39 = vld [vmem:[%s1] sm:$0xff]
  %v40 = vld [vmem:[%s1 + $0x8] sm:$0xff]
  %v41 = vld [vmem:[%s1 + $0x10] sm:$0xff]
  %v42 = vld [vmem:[%s1 + $0x18] sm:$0xff]
  %v43 = vld [vmem:[%s1 + $0x20] sm:$0xff]
  %v44 = vld [vmem:[%s1 + $0x28] sm:$0xff]
  %v45 = vld [vmem:[%s1 + $0x30] sm:$0xff]
  %v46 = vld [vmem:[%s1 + $0x38] sm:$0xff]
  %v47 = vld [vmem:[%s1 + $0x40] sm:$0xff]
  %v48 = vld [vmem:[%s1 + $0x48] sm:$0xff]
  %v49 = vld [vmem:[%s1 + $0x50] sm:$0xff]
  %v50 = vld [vmem:[%s1 + $0x58] sm:$0xff]
  %v51 = vld [vmem:[%s1 + $0x60] sm:$0xff]
  %v52 = vld [vmem:[%s1 + $0x68] sm:$0xff]
  %v53 = vld [vmem:[%s1 + $0x70] sm:$0xff]
  %v54 = vld [vmem:[%s1 + $0x78] sm:$0xff]
  %v59 = vunpack.c.l.b16 %v35
  %v60 = vunpack.c.l.b16 %v36
  %v61 = vunpack.c.l.b16 %v37
  %v62 = vunpack.c.l.b16 %v38
  %v63 = vpack.c.b16 %v60, %v59
  %v64 = vpack.c.b16 %v62, %v61
  %v83 = vunpack.c.l.b16 %v39
  %v84 = vunpack.c.h.b16 %v39
  %v85 = vunpack.c.l.b16 %v40
  %v86 = vunpack.c.h.b16 %v40
  %v87 = vunpack.c.l.b16 %v41
  %v88 = vunpack.c.h.b16 %v41
  %v89 = vunpack.c.l.b16 %v42
  %v90 = vunpack.c.h.b16 %v42
  %v91 = vunpack.c.l.b16 %v43
  %v92 = vunpack.c.h.b16 %v43
  %v93 = vunpack.c.l.b16 %v44
  %v94 = vunpack.c.h.b16 %v44
  %v95 = vunpack.c.l.b16 %v45
  %v96 = vunpack.c.h.b16 %v45
  %v97 = vunpack.c.l.b16 %v46
  %v98 = vunpack.c.h.b16 %v46
  %v99 = vunpack.c.l.b16 %v47
  %v100 = vunpack.c.h.b16 %v47
  %v101 = vunpack.c.l.b16 %v48
  %v102 = vunpack.c.h.b16 %v48
  %v103 = vunpack.c.l.b16 %v49
  %v104 = vunpack.c.h.b16 %v49
  %v105 = vunpack.c.l.b16 %v50
  %v106 = vunpack.c.h.b16 %v50
  %v107 = vunpack.c.l.b16 %v51
  %v108 = vunpack.c.h.b16 %v51
  %v109 = vunpack.c.l.b16 %v52
  %v110 = vunpack.c.h.b16 %v52
  %v111 = vunpack.c.l.b16 %v53
  %v112 = vunpack.c.h.b16 %v53
  %v113 = vunpack.c.l.b16 %v54
  %v114 = vunpack.c.h.b16 %v54
  %v115 = vpack.c.b16 %v85, %v83
  %v116 = vpack.c.b16 %v86, %v84
  %v117 = vpack.c.b16 %v89, %v87
  %v118 = vpack.c.b16 %v90, %v88
  %v119 = vpack.c.b16 %v93, %v91
  %v120 = vpack.c.b16 %v94, %v92
  %v121 = vpack.c.b16 %v97, %v95
  %v122 = vpack.c.b16 %v98, %v96
  %v123 = vpack.c.b16 %v101, %v99
  %v124 = vpack.c.b16 %v102, %v100
  %v125 = vpack.c.b16 %v105, %v103
  %v126 = vpack.c.b16 %v106, %v104
  %v127 = vpack.c.b16 %v109, %v107
  %v128 = vpack.c.b16 %v110, %v108
  %v129 = vpack.c.b16 %v113, %v111
  %v130 = vpack.c.b16 %v114, %v112
  %147 = vmatprep.subr.bf16.mxu0 %v116
  %148 = vmatpush1.bf16.msra.mxu0 %v115
  %149 = vmatprep.subr.bf16.mxu0 %v118
  %150 = vmatpush1.bf16.msra.mxu0 %v117
  %151 = vmatprep.subr.bf16.mxu0 %v120
  %152 = vmatpush1.bf16.msra.mxu0 %v119
  %153 = vmatprep.subr.bf16.mxu0 %v122
  %154 = vmatpush1.bf16.msra.mxu0 %v121
  %155 = vmatprep.subr.bf16.mxu0 %v124
  %156 = vmatpush1.bf16.msra.mxu0 %v123
  %157 = vmatprep.subr.bf16.mxu0 %v126
  %158 = vmatpush1.bf16.msra.mxu0 %v125
  %159 = vmatprep.subr.bf16.mxu0 %v128
  %160 = vmatpush1.bf16.msra.mxu0 %v127
  %161 = vmatprep.subr.bf16.mxu0 %v130
  %162 = vmatpush1.bf16.msra.mxu0 %v129
  %163 = vmatprep.subr.bf16.mxu0 0
  %164 = vmatpush1.bf16.msra.mxu0 0
  %165 = vmatprep.subr.bf16.mxu0 0
  %166 = vmatpush1.bf16.msra.mxu0 0
  %167 = vmatprep.subr.bf16.mxu0 0
  %168 = vmatpush1.bf16.msra.mxu0 0
  %169 = vmatprep.subr.bf16.mxu0 0
  %170 = vmatpush1.bf16.msra.mxu0 0
  %171 = vmatprep.subr.bf16.mxu0 0
  %172 = vmatpush1.bf16.msra.mxu0 0
  %173 = vmatprep.subr.bf16.mxu0 0
  %174 = vmatpush1.bf16.msra.mxu0 0
  %175 = vmatprep.subr.bf16.mxu0 0
  %176 = vmatpush1.bf16.msra.mxu0 0
  %177 = vmatprep.subr.bf16.mxu0 0
  %178 = vmatpush1.bf16.msra.mxu0 0
  %179 = vmatprep.mubr.bf16.mxu0 0
  %180 = vmatmul.mubr.bf16.gmra.mrb[0].mxu0 %v63
  %v181 = vpop.f32.mrb[0].mxu0
  %v182 = vadd.f32 0.0, %v181
  %v183 = vpop.f32.mrb[0].mxu0
  %v184 = vadd.f32 0.0, %v183
  %v185 = vpop.f32.mrb[0].mxu0
  %v186 = vadd.f32 0.0, %v185
  %v187 = vpop.f32.mrb[0].mxu0
  %v188 = vadd.f32 0.0, %v187
  %189 = vmatprep.mubr.bf16.mxu0 0
  %190 = vmatmul.mubr.bf16.gmra.mrb[0].mxu0 %v64
  %v191 = vpop.f32.mrb[0].mxu0
  %v192 = vadd.f32 0.0, %v191
  %v193 = vpop.f32.mrb[0].mxu0
  %v194 = vadd.f32 0.0, %v193
  %v195 = vpop.f32.mrb[0].mxu0
  %v196 = vadd.f32 0.0, %v195
  %v197 = vpop.f32.mrb[0].mxu0
  %v198 = vadd.f32 0.0, %v197
  %199 = vdwg.mxu0
  %v200 = vadd.f32 %v27, %v182
  %v201 = vadd.f32 %v28, %v184
  %v202 = vadd.f32 %v29, %v186
  %v203 = vadd.f32 %v30, %v188
  %v204 = vadd.f32 %v31, %v192
  %v205 = vadd.f32 %v32, %v194
  %v206 = vadd.f32 %v33, %v196
  %v207 = vadd.f32 %v34, %v198
  %208 = vst [vmem:[#allocation2] sm:$0xff] %v200
  %209 = vst [vmem:[#allocation2 + $0x8] sm:$0xff] %v201
  %210 = vst [vmem:[#allocation2 + $0x10] sm:$0xff] %v202
  %211 = vst [vmem:[#allocation2 + $0x18] sm:$0xff] %v203
  %212 = vst [vmem:[#allocation2 + $0x20] sm:$0xff] %v204
  %213 = vst [vmem:[#allocation2 + $0x28] sm:$0xff] %v205
  %214 = vst [vmem:[#allocation2 + $0x30] sm:$0xff] %v206
  %215 = vst [vmem:[#allocation2 + $0x38] sm:$0xff] %v207
  // Predicated region
  $region18: #{phi_forward.15} parent=0 // pred_check
    %p216 = pneg %p15
  $region19: #{phi_forward.15} parent=0 // pred_check_branch
    %218 = sbr.rel (%p216) target = $region21
  $region20: #{phi_forward.15} parent=0 // pred_region
    %v219 = vld [vmem:[#allocation2] sm:$0xff]
    %v220 = vld [vmem:[#allocation2 + $0x8] sm:$0xff]
    %v221 = vld [vmem:[#allocation2 + $0x10] sm:$0xff]
    %v222 = vld [vmem:[#allocation2 + $0x18] sm:$0xff]
    %v223 = vld [vmem:[#allocation2 + $0x20] sm:$0xff]
    %v224 = vld [vmem:[#allocation2 + $0x28] sm:$0xff]
    %v225 = vld [vmem:[#allocation2 + $0x30] sm:$0xff]
    %v226 = vld [vmem:[#allocation2 + $0x38] sm:$0xff]
    %v227 = vld [vmem:[%s2] sm:$0x3]
    %v229 = vlaneseq
    %v230 = vshrl.u32 %v229, 7
    %v231 = vsub.s32 0, %v230
    %v232 = vrot.slane %v227, %v231
    %v233 = vlaneseq
    %v234 = vshrl.u32 %v233, 7
    %v235 = vsub.s32 1, %v234
    %v236 = vrot.slane %v227, %v235
    %v239 = vadd.f32 %v219, %v232
    %v240 = vadd.f32 %v220, %v236
    %v241 = vadd.f32 %v221, %v232
    %v242 = vadd.f32 %v222, %v236
    %v243 = vadd.f32 %v223, %v232
    %v244 = vadd.f32 %v224, %v236
    %v245 = vadd.f32 %v225, %v232
    %v246 = vadd.f32 %v226, %v236
    %v247 = vmul.f32 %v239, 0.5
    %v248 = vmul.f32 %v240, 0.5
    %v249 = vmul.f32 %v241, 0.5
    %v250 = vmul.f32 %v242, 0.5
    %v251 = vmul.f32 %v243, 0.5
    %v252 = vmul.f32 %v244, 0.5
    %v253 = vmul.f32 %v245, 0.5
    %v254 = vmul.f32 %v246, 0.5
    %v255 = vmul.f32 %v239, 0.70710677
    %v256 = vmul.f32 %v240, 0.70710677
    %v257 = vmul.f32 %v241, 0.70710677
    %v258 = vmul.f32 %v242, 0.70710677
    %v259 = vmul.f32 %v243, 0.70710677
    %v260 = vmul.f32 %v244, 0.70710677
    %v261 = vmul.f32 %v245, 0.70710677
    %v262 = vmul.f32 %v246, 0.70710677
    %v263 = verf.f32.pop %v255
    %v264 = verf.f32.pop %v256
    %v265 = verf.f32.pop %v257
    %v266 = verf.f32.pop %v258
    %v267 = verf.f32.pop %v259
    %v268 = verf.f32.pop %v260
    %v269 = verf.f32.pop %v261
    %v270 = verf.f32.pop %v262
    %v271 = vadd.f32 %v263, 1.0
    %v272 = vadd.f32 %v264, 1.0
    %v273 = vadd.f32 %v265, 1.0
    %v274 = vadd.f32 %v266, 1.0
    %v275 = vadd.f32 %v267, 1.0
    %v276 = vadd.f32 %v268, 1.0
    %v277 = vadd.f32 %v269, 1.0
    %v278 = vadd.f32 %v270, 1.0
    %v279 = vmul.f32 %v247, %v271
    %v280 = vmul.f32 %v248, %v272
    %v281 = vmul.f32 %v249, %v273
    %v282 = vmul.f32 %v250, %v274
    %v283 = vmul.f32 %v251, %v275
    %v284 = vmul.f32 %v252, %v276
    %v285 = vmul.f32 %v253, %v277
    %v286 = vmul.f32 %v254, %v278
    %v287 = vpack.c.bf16 %v281, %v279
    %v288 = vpack.c.bf16 %v282, %v280
    %v289 = vpack.c.bf16 %v285, %v283
    %v290 = vpack.c.bf16 %v286, %v284
    %v295 = vunpack.c.l.b16 %v287
    %v296 = vunpack.c.l.b16 %v288
    %v297 = vunpack.c.h.b16 %v287
    %v298 = vunpack.c.h.b16 %v288
    %v299 = vunpack.c.l.b16 %v289
    %v300 = vunpack.c.l.b16 %v290
    %v301 = vunpack.c.h.b16 %v289
    %v302 = vunpack.c.h.b16 %v290
    %v303 = vpack.c.b16 %v296, %v295
    %v304 = vpack.c.b16 %v298, %v297
    %v305 = vpack.c.b16 %v300, %v299
    %v306 = vpack.c.b16 %v302, %v301
    %311 = vst [vmem:[%s3] sm:$0xff] %v303
    %312 = vst [vmem:[%s3 + $0x8] sm:$0xff] %v304
    %313 = vst [vmem:[%s3 + $0x10] sm:$0xff] %v305
    %314 = vst [vmem:[%s3 + $0x18] sm:$0xff] %v306
  $region21: #{phi_forward.15} parent=0 // pred_fallthru
    _
  // Predicated region
  $region22: #{phi_forward.15} parent=0 // pred_check
    _
  $region23: #{phi_forward.15} parent=0 // pred_check_branch
    %316 = sbr.rel (0) target = $region25
  $region24: #{phi_forward.15} parent=0 // pred_region
    _
  $region25: #{phi_forward.15} parent=0 // pred_fallthru
    _
  // Predicated region
  $region26: #{phi_forward.15} parent=0 // pred_check
    _
  $region27: #{phi_forward.15} parent=0 // pred_check_branch
    %318 = sbr.rel (0) target = $region29
  $region28: #{phi_forward.15} parent=0 // pred_region
    _
  $region29: #{phi_forward.15} parent=0 // pred_fallthru
    _

// kernel: phi_forward.13
$region0: #{phi_forward.13}
  #allocation0 [shape = 'u32[]', space=smem, size = 0x4, offset = 0x4, fixed_abs, tag = 'smem constant byte address 0x4 - core index']
  #allocation1 [shape = 'u32[144,128]{1,0:T(1,128)}', space=vmem, size = 0x12000, scoped, tag = 'internal scratch']
  #allocation2 [shape = 'f32[16,1]{1,0:T(8,128)}', space=vmem, size = 0x2000, scoped, tag = 'scratch operand']
  #allocation3 [shape = 'f32[16,1]{1,0:T(8,128)}', space=vmem, size = 0x2000, scoped, tag = 'scratch operand']
  #allocation4 [shape = 'f32[16,128]{1,0:T(8,128)}', space=vmem, size = 0x2000, scoped, tag = 'scratch operand']
  %s0 = inlined_call_operand.vmem [shape: bf16[2,16,384], index: 0, kind: input, shape index: {}, may-alias: {0,1,2}]
  %s1 = inlined_call_operand.vmem [shape: bf16[2,16,384], index: 1, kind: input, shape index: {}, may-alias: {0,1,2}]
  %s2 = inlined_call_operand.vmem [shape: bf16[2,16,384], index: 2, kind: input, shape index: {}, may-alias: {0,1,2}]
  %s3 = inlined_call_operand.vmem [shape: bf16[2,16,128], index: 3, kind: output, shape index: {}]
  %s4 = sld [smem:[#allocation0]]
  $region176: #{phi_forward.13} parent=0
    _
  %s6 = ssub.s32 1, %s4
  %s7 = scalar_select 0, %s6, %s4
  $region1: #{phi_forward.13} parent=0
    #allocation5 [shape = 'u8[8192]{0}', space=vmem, size = 0x2000, scoped, tag = 'input window, operand 0']
    #allocation6 [shape = 'u8[8192]{0}', space=vmem, size = 0x2000, scoped, tag = 'input window, operand 1']
    #allocation7 [shape = 'u8[8192]{0}', space=vmem, size = 0x2000, scoped, tag = 'input window, operand 2']
    loop: start=0, step=1, limit=4
    $region2: #{phi_forward.13} parent=1 // loop_pre_header
      _
    $region3: #{phi_forward.13} parent=1 // loop_header
      %s9 = sphi 0, %s13
      %p10 = scmp.ge.s32.totalorder %s9, 4
      %s16 = sphi 0, %s35
      %s17 = sphi 0, %s31
      %s18 = sphi 0, %s27
      %s19 = sphi 0, %s16
      %s20 = sphi 0, %s17
      %s21 = sphi 0, %s18
      %s22 = sphi 0, %s19
      %s23 = sphi 0, %s20
      %s24 = sphi 0, %s21
      %s40 = sphi 0, %s42
      %s43 = sphi 0, %s40
      %s44 = sphi 0, %s43
      %s60 = sphi 0, %s44
      %s68 = sphi 0, %s70
      %s71 = sphi 0, %s68
      %s72 = sphi 0, %s71
      %s88 = sphi 0, %s72
      %s96 = sphi 0, %s98
      %s99 = sphi 0, %s96
      %s100 = sphi 0, %s99
      %s116 = sphi 0, %s100
      %s124 = sphi 0, %s126
      %s127 = sphi 0, %s124
      %s128 = sphi 0, %s127
      %s144 = sphi 0, %s128
    $region4: #{phi_forward.13} parent=1 // loop_header_branch
      %12 = sbr.rel (%p10) target = $region8
    $region5: #{phi_forward.13} parent=1 // loop_body
      %s14 = ssub.s32 %s9, 1
      %s15 = ssub.s32 %s9, 2
      %s25 = sadd.s32 1, %s18
      %p26 = scmp.ge.s32.totalorder %s25, 1
      %s27 = scalar_select %p26, 0, %s25
      %s28 = sadd.s32 1, %s17
      %s29 = scalar_select %p26, %s28, %s17
      %p30 = scmp.ge.s32.totalorder %s29, 1
      %s31 = scalar_select %p30, 0, %s29
      %s32 = sadd.s32 1, %s16
      %s33 = scalar_select %p30, %s32, %s16
      %p34 = scmp.ge.s32.totalorder %s33, 2
      %s35 = scalar_select %p34, 0, %s33
      %s36 = ssub.s32 %s16, %s35
      %s37 = ssub.s32 %s17, %s31
      %s38 = sor.u32 %s36, %s37
      %p39 = scmp.eq.s32.totalorder %s38, 0
      %s41 = sadd.s32 %s40, 1
      %s42 = scalar_select %p39, %s40, %s41
      %p45 = pneg %p39
      %p46 = scmp.eq.s32.totalorder %s9, 1
      %p47 = por %p45, %p46
      %p48 = scmp.ne.s32.totalorder %s40, %s43
      %p49 = scmp.eq.s32.totalorder %s9, 0
      %p50 = por %p48, %p49
      %p51 = scmp.ne.s32.totalorder %s40, %s43
      %p52 = scmp.eq.s32.totalorder %s14, 1
      %p53 = por %p51, %p52
      %p54 = scmp.ne.s32.totalorder %s43, %s44
      %p55 = scmp.eq.s32.totalorder %s14, 0
      %p56 = por %p54, %p55
      %p57 = scmp.ne.s32.totalorder %s43, %s44
      %p58 = scmp.eq.s32.totalorder %s15, 1
      %p59 = por %p57, %p58
      %p61 = scmp.ne.s32.totalorder %s44, %s60
      %p62 = scmp.eq.s32.totalorder %s15, 0
      %p63 = por %p61, %p62
      %s64 = ssub.s32 %s16, %s35
      %s65 = ssub.s32 %s18, %s27
      %s66 = sor.u32 %s64, %s65
      %p67 = scmp.eq.s32.totalorder %s66, 0
      %s69 = sadd.s32 %s68, 1
      %s70 = scalar_select %p67, %s68, %s69
      %p73 = pneg %p67
      %p74 = scmp.eq.s32.totalorder %s9, 1
      %p75 = por %p73, %p74
      %p76 = scmp.ne.s32.totalorder %s68, %s71
      %p77 = scmp.eq.s32.totalorder %s9, 0
      %p78 = por %p76, %p77
      %p79 = scmp.ne.s32.totalorder %s68, %s71
      %p80 = scmp.eq.s32.totalorder %s14, 1
      %p81 = por %p79, %p80
      %p82 = scmp.ne.s32.totalorder %s71, %s72
      %p83 = scmp.eq.s32.totalorder %s14, 0
      %p84 = por %p82, %p83
      %p85 = scmp.ne.s32.totalorder %s71, %s72
      %p86 = scmp.eq.s32.totalorder %s15, 1
      %p87 = por %p85, %p86
      %p89 = scmp.ne.s32.totalorder %s72, %s88
      %p90 = scmp.eq.s32.totalorder %s15, 0
      %p91 = por %p89, %p90
      %s92 = ssub.s32 %s16, %s35
      %s93 = ssub.s32 %s18, %s27
      %s94 = sor.u32 %s92, %s93
      %p95 = scmp.eq.s32.totalorder %s94, 0
      %s97 = sadd.s32 %s96, 1
      %s98 = scalar_select %p95, %s96, %s97
      %p101 = pneg %p95
      %p102 = scmp.eq.s32.totalorder %s9, 1
      %p103 = por %p101, %p102
      %p104 = scmp.ne.s32.totalorder %s96, %s99
      %p105 = scmp.eq.s32.totalorder %s9, 0
      %p106 = por %p104, %p105
      %p107 = scmp.ne.s32.totalorder %s96, %s99
      %p108 = scmp.eq.s32.totalorder %s14, 1
      %p109 = por %p107, %p108
      %p110 = scmp.ne.s32.totalorder %s99, %s100
      %p111 = scmp.eq.s32.totalorder %s14, 0
      %p112 = por %p110, %p111
      %p113 = scmp.ne.s32.totalorder %s99, %s100
      %p114 = scmp.eq.s32.totalorder %s15, 1
      %p115 = por %p113, %p114
      %p117 = scmp.ne.s32.totalorder %s100, %s116
      %p118 = scmp.eq.s32.totalorder %s15, 0
      %p119 = por %p117, %p118
      %s120 = ssub.s32 %s16, %s35
      %s121 = ssub.s32 %s17, %s31
      %s122 = sor.u32 %s120, %s121
      %p123 = scmp.eq.s32.totalorder %s122, 0
      %s125 = sadd.s32 %s124, 1
      %s126 = scalar_select %p123, %s124, %s125
      %p129 = pneg %p123
      %p130 = scmp.eq.s32.totalorder %s9, 1
      %p131 = por %p129, %p130
      %p132 = scmp.ne.s32.totalorder %s124, %s127
      %p133 = scmp.eq.s32.totalorder %s9, 0
      %p134 = por %p132, %p133
      %p135 = scmp.ne.s32.totalorder %s124, %s127
      %p136 = scmp.eq.s32.totalorder %s14, 1
      %p137 = por %p135, %p136
      %p138 = scmp.ne.s32.totalorder %s127, %s128
      %p139 = scmp.eq.s32.totalorder %s14, 0
      %p140 = por %p138, %p139
      %p141 = scmp.ne.s32.totalorder %s127, %s128
      %p142 = scmp.eq.s32.totalorder %s15, 1
      %p143 = por %p141, %p142
      %p145 = scmp.ne.s32.totalorder %s128, %s144
      %p146 = scmp.eq.s32.totalorder %s15, 0
      %p147 = por %p145, %p146
      %p148 = scmp.le.s32.totalorder 1, %s9
      %p149 = scmp.lt.s32.totalorder %s9, 3
      %p150 = pnand %p148, %p149
      %p151 = pneg %p150
      // Predicated region
      $region9: #{phi_forward.13} parent=5 // pred_check
        _
      $region10: #{phi_forward.13} parent=5 // pred_check_branch
        %153 = sbr.rel (%p150) target = $region12
      $region11: #{phi_forward.13} parent=5 // pred_region
        %s154 = ssub.s32 %s9, 1
      $region12: #{phi_forward.13} parent=5 // pred_fallthru
        _
      %p155 = scmp.lt.s32.totalorder %s9, 2
      // Predicated region
      $region13: #{phi_forward.13} parent=5 // pred_check
        %p156 = pneg %p155
      $region14: #{phi_forward.13} parent=5 // pred_check_branch
        %158 = sbr.rel (%p156) target = $region16
      $region15: #{phi_forward.13} parent=5 // pred_region
        // Predicated region
        $region17: #{phi_forward.13} parent=15 // pred_check
          %p159 = pneg %p50
        $region18: #{phi_forward.13} parent=15 // pred_check_branch
          %161 = sbr.rel (%p159) target = $region20
        $region19: #{phi_forward.13} parent=15 // pred_region
          %s162 = sand.u32 %s40, 1
          %s163 = sand.u32 %s40, 1
          %s164 = smul.addr %s163, 8
          %s165 = scalar_lea.vmem [#allocation5], %s164
          %s166 = smul.u32 2, %s17
          %s167 = smul.addr %s166, 3
          %s168 = smul.addr %s16, 6
          %s169 = sadd.s32 %s167, %s168
          %s170 = smul.addr %s169, 4
          %s171 = scalar_lea.vmem %s0, %s170
          // Predicated region
          $region21: #{phi_forward.13} parent=19 // pred_check
            _
          $region22: #{phi_forward.13} parent=19 // pred_check_branch
            %173 = sbr.rel (0) target = $region24
          $region23: #{phi_forward.13} parent=19 // pred_region
            // Predicated region
            $region25: #{phi_forward.13} parent=23 // pred_check
              _
            $region26: #{phi_forward.13} parent=23 // pred_check_branch
              %175 = sbr.rel target = $region28
            $region27: #{phi_forward.13} parent=23 // pred_region
              // Predicated region
              $region40: #{phi_forward.13} parent=27 // pred_check
                _
              $region41: #{phi_forward.13} parent=27 // pred_check_branch
                %192 = sbr.rel (0) target = $region43
              $region42: #{phi_forward.13} parent=27 // pred_region
                loop: start=0, step=1, limit=1
                $region44: #{phi_forward.13} parent=42 // loop_pre_header
                  _
                $region45: #{phi_forward.13} parent=42 // loop_header
                  %s194 = sphi 0, %s198
                  %p195 = scmp.ge.s32.totalorder %s194, 1
                  %s199 = sphi %s171, %s171
                  %s200 = sphi %s165, %s165
                $region46: #{phi_forward.13} parent=42 // loop_header_branch
                  %197 = sbr.rel (%p195) target = $region50
                $region47: #{phi_forward.13} parent=42 // loop_body
                  _
                $region48: #{phi_forward.13} parent=42 // loop_footer
                  %s198 = sadd.s32 1, %s194
                $region49: #{phi_forward.13} parent=42 // loop_footer_branch
                  %193 = sbr.rel target = $region45
                $region50: #{phi_forward.13} parent=42 // loop_exit
                  _
                loop: start=0, step=1, limit=1
                $region51: #{phi_forward.13} parent=42 // loop_pre_header
                  _
                $region52: #{phi_forward.13} parent=42 // loop_header
                  %s203 = sphi 0, %s207
                  %p204 = scmp.ge.s32.totalorder %s203, 1
                  %s208 = sphi %s171, %s171
                  %s209 = sphi %s165, %s165
                $region53: #{phi_forward.13} parent=42 // loop_header_branch
                  %206 = sbr.rel (%p204) target = $region57
                $region54: #{phi_forward.13} parent=42 // loop_body
                  %v210 = vld [vmem:[%s208] sm:$0xf]
                  %211 = vst [vmem:[%s209] sm:$0xf] %v210
                  %v212 = vld [vmem:[%s208 + $0xc] sm:$0xf]
                  %213 = vst [vmem:[%s209 + $0x4] sm:$0xf] %v212
                $region55: #{phi_forward.13} parent=42 // loop_footer
                  %s207 = sadd.s32 1, %s203
                $region56: #{phi_forward.13} parent=42 // loop_footer_branch
                  %202 = sbr.rel target = $region52
                $region57: #{phi_forward.13} parent=42 // loop_exit
                  _
              $region43: #{phi_forward.13} parent=27 // pred_fallthru
                _
            $region28: #{phi_forward.13} parent=23 // pred_fallthru
              _
            // Predicated region
            $region29: #{phi_forward.13} parent=23 // pred_check
              _
            $region30: #{phi_forward.13} parent=23 // pred_check_branch
              %177 = sbr.rel (0) target = $region32
            $region31: #{phi_forward.13} parent=23 // pred_region
              loop: start=0, step=1, limit=1
              $region33: #{phi_forward.13} parent=31 // loop_pre_header
                _
              $region34: #{phi_forward.13} parent=31 // loop_header
                %s180 = sphi 0, %s184
                %p181 = scmp.ge.s32.totalorder %s180, 1
                %s185 = sphi %s171, %s171
                %s186 = sphi %s165, %s165
              $region35: #{phi_forward.13} parent=31 // loop_header_branch
                %183 = sbr.rel (%p181) target = $region39
              $region36: #{phi_forward.13} parent=31 // loop_body
                %v187 = vld [vmem:[%s185] sm:$0xf]
                %188 = vst [vmem:[%s186] sm:$0xf] %v187
                %v189 = vld [vmem:[%s185 + $0xc] sm:$0xf]
                %190 = vst [vmem:[%s186 + $0x4] sm:$0xf] %v189
              $region37: #{phi_forward.13} parent=31 // loop_footer
                %s184 = sadd.s32 1, %s180
              $region38: #{phi_forward.13} parent=31 // loop_footer_branch
                %179 = sbr.rel target = $region34
              $region39: #{phi_forward.13} parent=31 // loop_exit
                _
            $region32: #{phi_forward.13} parent=23 // pred_fallthru
              _
          $region24: #{phi_forward.13} parent=19 // pred_fallthru
            _
          %214 = vnop
        $region20: #{phi_forward.13} parent=15 // pred_fallthru
          _
        // Predicated region
        $region58: #{phi_forward.13} parent=15 // pred_check
          %p215 = pneg %p78
        $region59: #{phi_forward.13} parent=15 // pred_check_branch
          %217 = sbr.rel (%p215) target = $region61
        $region60: #{phi_forward.13} parent=15 // pred_region
          %s218 = sand.u32 %s68, 1
          %s219 = sand.u32 %s68, 1
          %s220 = smul.addr %s219, 8
          %s221 = scalar_lea.vmem [#allocation6], %s220
          %s222 = smul.u32 2, %s18
          %s223 = smul.addr %s222, 3
          %s224 = sadd.s32 1, %s223
          %s225 = smul.addr %s16, 6
          %s226 = sadd.s32 %s224, %s225
          %s227 = smul.addr %s226, 4
          %s228 = scalar_lea.vmem %s1, %s227
          // Predicated region
          $region62: #{phi_forward.13} parent=60 // pred_check
            _
          $region63: #{phi_forward.13} parent=60 // pred_check_branch
            %230 = sbr.rel (0) target = $region65
          $region64: #{phi_forward.13} parent=60 // pred_region
            // Predicated region
            $region66: #{phi_forward.13} parent=64 // pred_check
              _
            $region67: #{phi_forward.13} parent=64 // pred_check_branch
              %232 = sbr.rel target = $region69
            $region68: #{phi_forward.13} parent=64 // pred_region
              // Predicated region
              $region81: #{phi_forward.13} parent=68 // pred_check
                _
              $region82: #{phi_forward.13} parent=68 // pred_check_branch
                %249 = sbr.rel (0) target = $region84
              $region83: #{phi_forward.13} parent=68 // pred_region
                loop: start=0, step=1, limit=1
                $region85: #{phi_forward.13} parent=83 // loop_pre_header
                  _
                $region86: #{phi_forward.13} parent=83 // loop_header
                  %s251 = sphi 0, %s255
                  %p252 = scmp.ge.s32.totalorder %s251, 1
                  %s256 = sphi %s228, %s228
                  %s257 = sphi %s221, %s221
                $region87: #{phi_forward.13} parent=83 // loop_header_branch
                  %254 = sbr.rel (%p252) target = $region91
                $region88: #{phi_forward.13} parent=83 // loop_body
                  _
                $region89: #{phi_forward.13} parent=83 // loop_footer
                  %s255 = sadd.s32 1, %s251
                $region90: #{phi_forward.13} parent=83 // loop_footer_branch
                  %250 = sbr.rel target = $region86
                $region91: #{phi_forward.13} parent=83 // loop_exit
                  _
                loop: start=0, step=1, limit=1
                $region92: #{phi_forward.13} parent=83 // loop_pre_header
                  _
                $region93: #{phi_forward.13} parent=83 // loop_header
                  %s260 = sphi 0, %s264
                  %p261 = scmp.ge.s32.totalorder %s260, 1
                  %s265 = sphi %s228, %s228
                  %s266 = sphi %s221, %s221
                $region94: #{phi_forward.13} parent=83 // loop_header_branch
                  %263 = sbr.rel (%p261) target = $region98
                $region95: #{phi_forward.13} parent=83 // loop_body
                  %v267 = vld [vmem:[%s265] sm:$0xf]
                  %268 = vst [vmem:[%s266] sm:$0xf] %v267
                  %v269 = vld [vmem:[%s265 + $0xc] sm:$0xf]
                  %270 = vst [vmem:[%s266 + $0x4] sm:$0xf] %v269
                $region96: #{phi_forward.13} parent=83 // loop_footer
                  %s264 = sadd.s32 1, %s260
                $region97: #{phi_forward.13} parent=83 // loop_footer_branch
                  %259 = sbr.rel target = $region93
                $region98: #{phi_forward.13} parent=83 // loop_exit
                  _
              $region84: #{phi_forward.13} parent=68 // pred_fallthru
                _
            $region69: #{phi_forward.13} parent=64 // pred_fallthru
              _
            // Predicated region
            $region70: #{phi_forward.13} parent=64 // pred_check
              _
            $region71: #{phi_forward.13} parent=64 // pred_check_branch
              %234 = sbr.rel (0) target = $region73
            $region72: #{phi_forward.13} parent=64 // pred_region
              loop: start=0, step=1, limit=1
              $region74: #{phi_forward.13} parent=72 // loop_pre_header
                _
              $region75: #{phi_forward.13} parent=72 // loop_header
                %s237 = sphi 0, %s241
                %p238 = scmp.ge.s32.totalorder %s237, 1
                %s242 = sphi %s228, %s228
                %s243 = sphi %s221, %s221
              $region76: #{phi_forward.13} parent=72 // loop_header_branch
                %240 = sbr.rel (%p238) target = $region80
              $region77: #{phi_forward.13} parent=72 // loop_body
                %v244 = vld [vmem:[%s242] sm:$0xf]
                %245 = vst [vmem:[%s243] sm:$0xf] %v244
                %v246 = vld [vmem:[%s242 + $0xc] sm:$0xf]
                %247 = vst [vmem:[%s243 + $0x4] sm:$0xf] %v246
              $region78: #{phi_forward.13} parent=72 // loop_footer
                %s241 = sadd.s32 1, %s237
              $region79: #{phi_forward.13} parent=72 // loop_footer_branch
                %236 = sbr.rel target = $region75
              $region80: #{phi_forward.13} parent=72 // loop_exit
                _
            $region73: #{phi_forward.13} parent=64 // pred_fallthru
              _
          $region65: #{phi_forward.13} parent=60 // pred_fallthru
            _
          %271 = vnop
        $region61: #{phi_forward.13} parent=15 // pred_fallthru
          _
        // Predicated region
        $region99: #{phi_forward.13} parent=15 // pred_check
          %p272 = pneg %p106
        $region100: #{phi_forward.13} parent=15 // pred_check_branch
          %274 = sbr.rel (%p272) target = $region102
        $region101: #{phi_forward.13} parent=15 // pred_region
          %s275 = sand.u32 %s96, 1
          %s276 = sand.u32 %s96, 1
          %s277 = smul.addr %s276, 8
          %s278 = scalar_lea.vmem [#allocation7], %s277
          %s279 = smul.u32 2, %s18
          %s280 = smul.addr %s279, 3
          %s281 = sadd.s32 2, %s280
          %s282 = smul.addr %s16, 6
          %s283 = sadd.s32 %s281, %s282
          %s284 = smul.addr %s283, 4
          %s285 = scalar_lea.vmem %s2, %s284
          // Predicated region
          $region103: #{phi_forward.13} parent=101 // pred_check
            _
          $region104: #{phi_forward.13} parent=101 // pred_check_branch
            %287 = sbr.rel (0) target = $region106
          $region105: #{phi_forward.13} parent=101 // pred_region
            // Predicated region
            $region107: #{phi_forward.13} parent=105 // pred_check
              _
            $region108: #{phi_forward.13} parent=105 // pred_check_branch
              %289 = sbr.rel target = $region110
            $region109: #{phi_forward.13} parent=105 // pred_region
              // Predicated region
              $region122: #{phi_forward.13} parent=109 // pred_check
                _
              $region123: #{phi_forward.13} parent=109 // pred_check_branch
                %306 = sbr.rel (0) target = $region125
              $region124: #{phi_forward.13} parent=109 // pred_region
                loop: start=0, step=1, limit=1
                $region126: #{phi_forward.13} parent=124 // loop_pre_header
                  _
                $region127: #{phi_forward.13} parent=124 // loop_header
                  %s308 = sphi 0, %s312
                  %p309 = scmp.ge.s32.totalorder %s308, 1
                  %s313 = sphi %s285, %s285
                  %s314 = sphi %s278, %s278
                $region128: #{phi_forward.13} parent=124 // loop_header_branch
                  %311 = sbr.rel (%p309) target = $region132
                $region129: #{phi_forward.13} parent=124 // loop_body
                  _
                $region130: #{phi_forward.13} parent=124 // loop_footer
                  %s312 = sadd.s32 1, %s308
                $region131: #{phi_forward.13} parent=124 // loop_footer_branch
                  %307 = sbr.rel target = $region127
                $region132: #{phi_forward.13} parent=124 // loop_exit
                  _
                loop: start=0, step=1, limit=1
                $region133: #{phi_forward.13} parent=124 // loop_pre_header
                  _
                $region134: #{phi_forward.13} parent=124 // loop_header
                  %s317 = sphi 0, %s321
                  %p318 = scmp.ge.s32.totalorder %s317, 1
                  %s322 = sphi %s285, %s285
                  %s323 = sphi %s278, %s278
                $region135: #{phi_forward.13} parent=124 // loop_header_branch
                  %320 = sbr.rel (%p318) target = $region139
                $region136: #{phi_forward.13} parent=124 // loop_body
                  %v324 = vld [vmem:[%s322] sm:$0xf]
                  %325 = vst [vmem:[%s323] sm:$0xf] %v324
                  %v326 = vld [vmem:[%s322 + $0xc] sm:$0xf]
                  %327 = vst [vmem:[%s323 + $0x4] sm:$0xf] %v326
                $region137: #{phi_forward.13} parent=124 // loop_footer
                  %s321 = sadd.s32 1, %s317
                $region138: #{phi_forward.13} parent=124 // loop_footer_branch
                  %316 = sbr.rel target = $region134
                $region139: #{phi_forward.13} parent=124 // loop_exit
                  _
              $region125: #{phi_forward.13} parent=109 // pred_fallthru
                _
            $region110: #{phi_forward.13} parent=105 // pred_fallthru
              _
            // Predicated region
            $region111: #{phi_forward.13} parent=105 // pred_check
              _
            $region112: #{phi_forward.13} parent=105 // pred_check_branch
              %291 = sbr.rel (0) target = $region114
            $region113: #{phi_forward.13} parent=105 // pred_region
              loop: start=0, step=1, limit=1
              $region115: #{phi_forward.13} parent=113 // loop_pre_header
                _
              $region116: #{phi_forward.13} parent=113 // loop_header
                %s294 = sphi 0, %s298
                %p295 = scmp.ge.s32.totalorder %s294, 1
                %s299 = sphi %s285, %s285
                %s300 = sphi %s278, %s278
              $region117: #{phi_forward.13} parent=113 // loop_header_branch
                %297 = sbr.rel (%p295) target = $region121
              $region118: #{phi_forward.13} parent=113 // loop_body
                %v301 = vld [vmem:[%s299] sm:$0xf]
                %302 = vst [vmem:[%s300] sm:$0xf] %v301
                %v303 = vld [vmem:[%s299 + $0xc] sm:$0xf]
                %304 = vst [vmem:[%s300 + $0x4] sm:$0xf] %v303
              $region119: #{phi_forward.13} parent=113 // loop_footer
                %s298 = sadd.s32 1, %s294
              $region120: #{phi_forward.13} parent=113 // loop_footer_branch
                %293 = sbr.rel target = $region116
              $region121: #{phi_forward.13} parent=113 // loop_exit
                _
            $region114: #{phi_forward.13} parent=105 // pred_fallthru
              _
          $region106: #{phi_forward.13} parent=101 // pred_fallthru
            _
          %328 = vnop
        $region102: #{phi_forward.13} parent=15 // pred_fallthru
          _
      $region16: #{phi_forward.13} parent=5 // pred_fallthru
        _
      %p329 = scmp.le.s32.totalorder 1, %s9
      %p330 = scmp.lt.s32.totalorder %s9, 3
      %p331 = pnand %p329, %p330
      %p332 = pneg %p331
      // Predicated region
      $region140: #{phi_forward.13} parent=5 // pred_check
        _
      $region141: #{phi_forward.13} parent=5 // pred_check_branch
        %334 = sbr.rel (%p331) target = $region143
      $region142: #{phi_forward.13} parent=5 // pred_region
        %s335 = ssub.s32 %s9, 1
        %s336 = sand.u32 %s43, 1
        %s337 = sand.u32 %s43, 1
        %s338 = smul.addr %s337, 8
        %s339 = scalar_lea.vmem [#allocation5], %s338
        // Predicated region
        $region144: #{phi_forward.13} parent=142 // pred_check
          %p340 = pneg %p56
        $region145: #{phi_forward.13} parent=142 // pred_check_branch
          %342 = sbr.rel (%p340) target = $region147
        $region146: #{phi_forward.13} parent=142 // pred_region
          _
        $region147: #{phi_forward.13} parent=142 // pred_fallthru
          _
        %s343 = sand.u32 %s71, 1
        %s344 = sand.u32 %s71, 1
        %s345 = smul.addr %s344, 8
        %s346 = scalar_lea.vmem [#allocation6], %s345
        // Predicated region
        $region148: #{phi_forward.13} parent=142 // pred_check
          %p347 = pneg %p84
        $region149: #{phi_forward.13} parent=142 // pred_check_branch
          %349 = sbr.rel (%p347) target = $region151
        $region150: #{phi_forward.13} parent=142 // pred_region
          _
        $region151: #{phi_forward.13} parent=142 // pred_fallthru
          _
        %s350 = sand.u32 %s99, 1
        %s351 = sand.u32 %s99, 1
        %s352 = smul.addr %s351, 8
        %s353 = scalar_lea.vmem [#allocation7], %s352
        // Predicated region
        $region152: #{phi_forward.13} parent=142 // pred_check
          %p354 = pneg %p112
        $region153: #{phi_forward.13} parent=142 // pred_check_branch
          %356 = sbr.rel (%p354) target = $region155
        $region154: #{phi_forward.13} parent=142 // pred_region
          _
        $region155: #{phi_forward.13} parent=142 // pred_fallthru
          _
        %s357 = sand.u32 %s43, 1
        %s358 = sand.u32 %s43, 1
        %s359 = smul.addr %s358, 8
        %s360 = scalar_lea.vmem [#allocation5], %s359
        %p361 = pneg %p56
        %p362 = pneg %p53
        %s363 = sand.u32 %s71, 1
        %s364 = sand.u32 %s71, 1
        %s365 = smul.addr %s364, 8
        %s366 = scalar_lea.vmem [#allocation6], %s365
        %p367 = pneg %p84
        %p368 = pneg %p81
        %s369 = sand.u32 %s99, 1
        %s370 = sand.u32 %s99, 1
        %s371 = smul.addr %s370, 8
        %s372 = scalar_lea.vmem [#allocation7], %s371
        %p373 = pneg %p112
        %p374 = pneg %p109
        %p375 = pneg %p140
        %p376 = pneg %p137
        %s377 = smul.u32 2, %s20
        %p378 = scmp.lt.s32.totalorder %s19, 1
        %s379 = scalar_select %p378, %s19, 1
        %p380 = scmp.lt.s32.totalorder %s377, 1
        %s381 = scalar_select %p380, %s377, 1
        %s382 = smul.addr %s379, 2
        %s383 = sadd.s32 %s381, %s382
        %s384 = smul.addr %s383, 4
        %s385 = scalar_lea.vmem %s3, %s384
        %s386 = smul.u32 2, %s20
        %s387 = smul.u32 2, %s21
        %s388 = smul.u32 2, %s21
        %s389 = smul.u32 2, %s20
        %p390 = scmp.lt.s32.totalorder %s19, 1
        %s391 = scalar_select %p390, %s19, 1
        %p392 = scmp.lt.s32.totalorder %s389, 1
        %s393 = scalar_select %p392, %s389, 1
        %s394 = smul.addr %s391, 2
        %s395 = sadd.s32 %s393, %s394
        %s396 = smul.addr %s395, 4
        %s397 = scalar_lea.vmem %s3, %s396
        %s398 = smul.u32 2, %s20
        %p400 = scmp.eq.s32.totalorder %s21, 0
        // Predicated region
        $region156: #{phi_forward.13} parent=142 // pred_check
          %p401 = pneg %p400
        $region157: #{phi_forward.13} parent=142 // pred_check_branch
          %403 = sbr.rel (%p401) target = $region159
        $region158: #{phi_forward.13} parent=142 // pred_region
          %vm404 = vcmask 7168
          %405 = vst.msk [vmem:[#allocation2] sm:$0xff] %vm404, -inf
          %406 = vst.msk [vmem:[#allocation2 + $0x8] sm:$0xff] %vm404, -inf
          %407 = vst.msk [vmem:[#allocation3] sm:$0xff] %vm404, 0.0
          %408 = vst.msk [vmem:[#allocation3 + $0x8] sm:$0xff] %vm404, 0.0
          %409 = vst [vmem:[#allocation4] sm:$0xff] 0.0
          %410 = vst [vmem:[#allocation4 + $0x8] sm:$0xff] 0.0
        $region159: #{phi_forward.13} parent=142 // pred_fallthru
          _
        %v411 = vld [vmem:[%s339] sm:$0xf]
        %v412 = vld [vmem:[%s339 + $0x4] sm:$0xf]
        %v413 = vld [vmem:[%s346] sm:$0xf]
        %v414 = vld [vmem:[%s346 + $0x4] sm:$0xf]
        %v417 = vunpack.c.l.b16 %v411
        %v418 = vunpack.c.l.b16 %v412
        %v419 = vpack.c.b16 %v418, %v417
        %v423 = vunpack.c.l.b16 %v413
        %v424 = vunpack.c.l.b16 %v414
        %v425 = vpack.c.b16 %v424, %v423
        %427 = vmatprep.subr.bf16.mxu0 0
        %428 = vmatpush1.bf16.xpose.msra.mxu0 %v425
        %429 = vmatprep.subr.bf16.mxu0 0
        %430 = vmatpush1.bf16.xpose.msra.mxu0 0
        %431 = vmatprep.subr.bf16.mxu0 0
        %432 = vmatpush1.bf16.xpose.msra.mxu0 0
        %433 = vmatprep.subr.bf16.mxu0 0
        %434 = vmatpush1.bf16.xpose.msra.mxu0 0
        %435 = vmatprep.subr.bf16.mxu0 0
        %436 = vmatpush1.bf16.xpose.msra.mxu0 0
        %437 = vmatprep.subr.bf16.mxu0 0
        %438 = vmatpush1.bf16.xpose.msra.mxu0 0
        %439 = vmatprep.subr.bf16.mxu0 0
        %440 = vmatpush1.bf16.xpose.msra.mxu0 0
        %441 = vmatprep.subr.bf16.mxu0 0
        %442 = vmatpush1.bf16.xpose.msra.mxu0 0
        %443 = vmatprep.subr.bf16.mxu0 0
        %444 = vmatpush1.bf16.xpose.msra.mxu0 0
        %445 = vmatprep.subr.bf16.mxu0 0
        %446 = vmatpush1.bf16.xpose.msra.mxu0 0
        %447 = vmatprep.subr.bf16.mxu0 0
        %448 = vmatpush1.bf16.xpose.msra.mxu0 0
        %449 = vmatprep.subr.bf16.mxu0 0
        %450 = vmatpush1.bf16.xpose.msra.mxu0 0
        %451 = vmatprep.subr.bf16.mxu0 0
        %452 = vmatpush1.bf16.xpose.msra.mxu0 0
        %453 = vmatprep.subr.bf16.mxu0 0
        %454 = vmatpush1.bf16.xpose.msra.mxu0 0
        %455 = vmatprep.subr.bf16.mxu0 0
        %456 = vmatpush1.bf16.xpose.msra.mxu0 0
        %457 = vmatprep.subr.bf16.mxu0 0
        %458 = vmatpush1.bf16.xpose.msra.mxu0 0
        %459 = vmatprep.mubr.bf16.mxu0 0
        %460 = vmatmul.mubr.bf16.gmra.mrb[0].mxu0 %v419
        %v461 = vpop.f32.mrb[0].mxu0
        %v462 = vadd.f32 0.0, %v461
        %v463 = vpop.f32.mrb[0].mxu0
        %v464 = vpop.f32.mrb[0].mxu0
        %v465 = vadd.f32 0.0, %v464
        %v466 = vpop.f32.mrb[0].mxu0
        %467 = vdwg.mxu0
        %v468 = vmul.f32 %v462, 0.088388346
        %v469 = vmul.f32 %v465, 0.088388346
        %v470 = vld [vmem:[#allocation2] sm:$0xff]
        %v471 = vld [vmem:[#allocation2 + $0x8] sm:$0xff]
        %vm472 = vcmask 130048
        %v473 = vsel %vm472, %v468, -inf
        %474 = vmax.xlane.f32.xlu0 %v473
        %v475 = vpop.xlane.xlu0 %474
        %v476 = vsel %vm472, %v469, -inf
        %477 = vmax.xlane.f32.xlu0 %v476
        %v478 = vpop.xlane.xlu0 %477
        %v479 = vmax.f32 %v470, %v475
        %v480 = vmax.f32 %v471, %v478
        %v481 = vsub.f32 %v470, %v479
        %v482 = vsub.f32 %v471, %v480
        %v483 = vmul.f32 %v481, 1.442695
        %v484 = vpow.pop %v483
        %v485 = vmul.f32 %v482, 1.442695
        %v486 = vpow.pop %v485
        %488 = vset.pattern.permute.xlu0 0
        %489 = vperm.xlu0 %488, %v479
        %v490 = vpop.permute.xlu0 %489
        %493 = vset.pattern.permute.xlu0 0
        %494 = vperm.xlu0 %493, %v480
        %v495 = vpop.permute.xlu0 %494
        %v497 = vsub.f32 %v468, %v490
        %v498 = vsub.f32 %v469, %v495
        %v499 = vmul.f32 %v497, 1.442695
        %v500 = vpow.pop %v499
        %v501 = vmul.f32 %v498, 1.442695
        %v502 = vpow.pop %v501
        %v503 = vld [vmem:[#allocation3] sm:$0xff]
        %v504 = vld [vmem:[#allocation3 + $0x8] sm:$0xff]
        %v505 = vmul.f32 %v484, %v503
        %v506 = vmul.f32 %v486, %v504
        %v507 = vsel %vm472, %v500, 0.0
        %508 = vadd.xlane.f32.xlu0 %v507
        %v509 = vpop.xlane.xlu0 %508
        %v510 = vsel %vm472, %v502, 0.0
        %511 = vadd.xlane.f32.xlu0 %v510
        %v512 = vpop.xlane.xlu0 %511
        %v513 = vadd.f32 %v505, %v509
        %v514 = vadd.f32 %v506, %v512
        %vm515 = vcmask 7168
        %516 = vst.msk [vmem:[#allocation3] sm:$0xff] %vm515, %v513
        %517 = vst.msk [vmem:[#allocation3 + $0x8] sm:$0xff] %vm515, %v514
        %v518 = vld [vmem:[#allocation4] sm:$0xff]
        %v519 = vld [vmem:[#allocation4 + $0x8] sm:$0xff]
        %521 = vset.pattern.permute.xlu0 0
        %522 = vperm.xlu0 %521, %v484
        %v523 = vpop.permute.xlu0 %522
        %526 = vset.pattern.permute.xlu0 0
        %527 = vperm.xlu0 %526, %v486
        %v528 = vpop.permute.xlu0 %527
        %v530 = vmul.f32 %v523, %v518
        %v531 = vmul.f32 %v528, %v519
        %v532 = vpack.c.bf16 %v502, %v500
        %v533 = vld [vmem:[%s353] sm:$0xf]
        %v534 = vld [vmem:[%s353 + $0x4] sm:$0xf]
        %v537 = vunpack.c.l.b16 %v533
        %v538 = vunpack.c.l.b16 %v534
        %v539 = vpack.c.b16 %v538, %v537
        %v542 = vsel %vm472, %v532, 0
        %544 = vmatprep.subr.bf16.mxu0 0
        %545 = vmatpush1.bf16.msra.mxu0 %v539
        %546 = vmatprep.subr.bf16.mxu0 0
        %547 = vmatpush1.bf16.msra.mxu0 0
        %548 = vmatprep.subr.bf16.mxu0 0
        %549 = vmatpush1.bf16.msra.mxu0 0
        %550 = vmatprep.subr.bf16.mxu0 0
        %551 = vmatpush1.bf16.msra.mxu0 0
        %552 = vmatprep.subr.bf16.mxu0 0
        %553 = vmatpush1.bf16.msra.mxu0 0
        %554 = vmatprep.subr.bf16.mxu0 0
        %555 = vmatpush1.bf16.msra.mxu0 0
        %556 = vmatprep.subr.bf16.mxu0 0
        %557 = vmatpush1.bf16.msra.mxu0 0
        %558 = vmatprep.subr.bf16.mxu0 0
        %559 = vmatpush1.bf16.msra.mxu0 0
        %560 = vmatprep.subr.bf16.mxu0 0
        %561 = vmatpush1.bf16.msra.mxu0 0
        %562 = vmatprep.subr.bf16.mxu0 0
        %563 = vmatpush1.bf16.msra.mxu0 0
        %564 = vmatprep.subr.bf16.mxu0 0
        %565 = vmatpush1.bf16.msra.mxu0 0
        %566 = vmatprep.subr.bf16.mxu0 0
        %567 = vmatpush1.bf16.msra.mxu0 0
        %568 = vmatprep.subr.bf16.mxu0 0
        %569 = vmatpush1.bf16.msra.mxu0 0
        %570 = vmatprep.subr.bf16.mxu0 0
        %571 = vmatpush1.bf16.msra.mxu0 0
        %572 = vmatprep.subr.bf16.mxu0 0
        %573 = vmatpush1.bf16.msra.mxu0 0
        %574 = vmatprep.subr.bf16.mxu0 0
        %575 = vmatpush1.bf16.msra.mxu0 0
        %576 = vmatprep.mubr.bf16.mxu0 0
        %577 = vmatmul.mubr.bf16.gmra.mrb[0].mxu0 %v542
        %v578 = vpop.f32.mrb[0].mxu0
        %v579 = vadd.f32 0.0, %v578
        %v580 = vpop.f32.mrb[0].mxu0
        %v581 = vpop.f32.mrb[0].mxu0
        %v582 = vadd.f32 0.0, %v581
        %v583 = vpop.f32.mrb[0].mxu0
        %584 = vdwg.mxu0
        %v585 = vadd.f32 %v530, %v579
        %v586 = vadd.f32 %v531, %v582
        %587 = vst [vmem:[#allocation4] sm:$0xff] %v585
        %588 = vst [vmem:[#allocation4 + $0x8] sm:$0xff] %v586
        %589 = vst.msk [vmem:[#allocation2] sm:$0xff] %vm515, %v479
        %590 = vst.msk [vmem:[#allocation2 + $0x8] sm:$0xff] %vm515, %v480
        // Predicated region
        $region160: #{phi_forward.13} parent=142 // pred_check
          %p591 = pneg %p400
        $region161: #{phi_forward.13} parent=142 // pred_check_branch
          %593 = sbr.rel (%p591) target = $region163
        $region162: #{phi_forward.13} parent=142 // pred_region
          %v594 = vld [vmem:[#allocation3] sm:$0xff]
          %v595 = vld [vmem:[#allocation3 + $0x8] sm:$0xff]
          %v596 = vrcp.pop %v594
          %v597 = vrcp.pop %v595
          %v598 = vld [vmem:[#allocation4] sm:$0xff]
          %v599 = vld [vmem:[#allocation4 + $0x8] sm:$0xff]
          %601 = vset.pattern.permute.xlu0 0
          %602 = vperm.xlu0 %601, %v596
          %v603 = vpop.permute.xlu0 %602
          %606 = vset.pattern.permute.xlu0 0
          %607 = vperm.xlu0 %606, %v597
          %v608 = vpop.permute.xlu0 %607
          %v610 = vmul.f32 %v598, %v603
          %v611 = vmul.f32 %v599, %v608
          %v612 = vpack.c.bf16 %v611, %v610
          %v614 = vunpack.c.l.b16 %v612
          %v615 = vunpack.c.h.b16 %v612
          %v616 = vpack.c.b16 %v614, %v614
          %v617 = vpack.c.b16 %v615, %v615
          %620 = vst [vmem:[%s397] sm:$0xf] %v616
          %621 = vst [vmem:[%s397 + $0x4] sm:$0xf] %v617
        $region163: #{phi_forward.13} parent=142 // pred_fallthru
          _
        %s622 = smul.u32 2, %s20
        %p623 = scmp.lt.s32.totalorder %s19, 1
        %s624 = scalar_select %p623, %s19, 1
        %p625 = scmp.lt.s32.totalorder %s622, 1
        %s626 = scalar_select %p625, %s622, 1
        %s627 = smul.addr %s624, 2
        %s628 = sadd.s32 %s626, %s627
        %s629 = smul.addr %s628, 4
        %s630 = scalar_lea.vmem %s3, %s629
        // Predicated region
        $region164: #{phi_forward.13} parent=142 // pred_check
          %p631 = pneg %p137
        $region165: #{phi_forward.13} parent=142 // pred_check_branch
          %633 = sbr.rel (%p631) target = $region167
        $region166: #{phi_forward.13} parent=142 // pred_region
          %s634 = smul.u32 2, %s20
        $region167: #{phi_forward.13} parent=142 // pred_fallthru
          _
      $region143: #{phi_forward.13} parent=5 // pred_fallthru
        _
      %p635 = scmp.le.s32.totalorder 2, %s9
      // Predicated region
      $region168: #{phi_forward.13} parent=5 // pred_check
        %p636 = pneg %p635
      $region169: #{phi_forward.13} parent=5 // pred_check_branch
        %638 = sbr.rel (%p636) target = $region171
      $region170: #{phi_forward.13} parent=5 // pred_region
        %s639 = ssub.s32 %s9, 2
        // Predicated region
        $region172: #{phi_forward.13} parent=170 // pred_check
          %p640 = pneg %p143
        $region173: #{phi_forward.13} parent=170 // pred_check_branch
          %642 = sbr.rel (%p640) target = $region175
        $region174: #{phi_forward.13} parent=170 // pred_region
          %s643 = smul.u32 2, %s23
          %p644 = scmp.lt.s32.totalorder %s22, 1
          %s645 = scalar_select %p644, %s22, 1
          %p646 = scmp.lt.s32.totalorder %s643, 1
          %s647 = scalar_select %p646, %s643, 1
          %s648 = smul.addr %s645, 2
          %s649 = sadd.s32 %s647, %s648
          %s650 = smul.addr %s649, 4
          %s651 = scalar_lea.vmem %s3, %s650
        $region175: #{phi_forward.13} parent=170 // pred_fallthru
          _
      $region171: #{phi_forward.13} parent=5 // pred_fallthru
        _
    $region6: #{phi_forward.13} parent=1 // loop_footer
      %s13 = sadd.s32 1, %s9
    $region7: #{phi_forward.13} parent=1 // loop_footer_branch
      %8 = sbr.rel target = $region3
    $region8: #{phi_forward.13} parent=1 // loop_exit
      _

// kernel: phi_forward.22
$region0: #{phi_forward.22}
  #allocation0 [shape = 'u32[]', space=smem, size = 0x4, offset = 0x4, fixed_abs, tag = 'smem constant byte address 0x4 - core index']
  #allocation1 [shape = 'u32[144,128]{1,0:T(1,128)}', space=vmem, size = 0x12000, scoped, tag = 'internal scratch']
  %s0 = inlined_call_operand.vmem [shape: bf16[32,128], index: 0, kind: input, shape index: {}]
  %s1 = inlined_call_operand.vmem [shape: f32[1,128], index: 1, kind: input, shape index: {}]
  %s2 = inlined_call_operand.vmem [shape: f32[1,128], index: 2, kind: input, shape index: {}]
  %s3 = inlined_call_operand.vmem [shape: bf16[32,128], index: 3, kind: output, shape index: {}]
  %s4 = sld [smem:[#allocation0]]
  $region22: #{phi_forward.22} parent=0
    _
  %s6 = ssub.s32 1, %s4
  %s7 = scalar_select 0, %s6, %s4
  // Predicated region
  $region2: #{phi_forward.22} parent=0 // pred_check
    _
  $region3: #{phi_forward.22} parent=0 // pred_check_branch
    %9 = sbr.rel (0) target = $region5
  $region4: #{phi_forward.22} parent=0 // pred_region
    _
  $region5: #{phi_forward.22} parent=0 // pred_fallthru
    _
  // Predicated region
  $region6: #{phi_forward.22} parent=0 // pred_check
    _
  $region7: #{phi_forward.22} parent=0 // pred_check_branch
    %11 = sbr.rel (0) target = $region9
  $region8: #{phi_forward.22} parent=0 // pred_region
    _
  $region9: #{phi_forward.22} parent=0 // pred_fallthru
    _
  // Predicated region
  $region10: #{phi_forward.22} parent=0 // pred_check
    _
  $region11: #{phi_forward.22} parent=0 // pred_check_branch
    %13 = sbr.rel (0) target = $region13
  $region12: #{phi_forward.22} parent=0 // pred_region
    _
  $region13: #{phi_forward.22} parent=0 // pred_fallthru
    _
  %v14 = vld [vmem:[%s0] sm:$0xf]
  %v15 = vld [vmem:[%s0 + $0x4] sm:$0xf]
  %v16 = vld [vmem:[%s0 + $0x8] sm:$0xf]
  %v17 = vld [vmem:[%s0 + $0xc] sm:$0xf]
  %v18 = vunpack.c.l.bf16 %v14
  %v19 = vunpack.c.l.bf16 %v15
  %v20 = vunpack.c.l.bf16 %v16
  %v21 = vunpack.c.l.bf16 %v17
  %22 = vadd.xlane.f32.xlu0 %v18
  %v23 = vpop.xlane.xlu0 %22
  %24 = vadd.xlane.f32.xlu0 %v19
  %v25 = vpop.xlane.xlu0 %24
  %26 = vadd.xlane.f32.xlu0 %v20
  %v27 = vpop.xlane.xlu0 %26
  %28 = vadd.xlane.f32.xlu0 %v21
  %v29 = vpop.xlane.xlu0 %28
  %v30 = vrcp.pop 128.0
  %v31 = vmul.f32 %v23, %v30
  %v32 = vmul.f32 %v25, %v30
  %v33 = vmul.f32 %v27, %v30
  %v34 = vmul.f32 %v29, %v30
  %v35 = vsub.f32 %v18, %v31
  %v36 = vsub.f32 %v19, %v32
  %v37 = vsub.f32 %v20, %v33
  %v38 = vsub.f32 %v21, %v34
  %v39 = vmul.f32 %v35, %v35
  %v40 = vmul.f32 %v36, %v36
  %v41 = vmul.f32 %v37, %v37
  %v42 = vmul.f32 %v38, %v38
  %43 = vadd.xlane.f32.xlu0 %v39
  %v44 = vpop.xlane.xlu0 %43
  %45 = vadd.xlane.f32.xlu0 %v40
  %v46 = vpop.xlane.xlu0 %45
  %47 = vadd.xlane.f32.xlu0 %v41
  %v48 = vpop.xlane.xlu0 %47
  %49 = vadd.xlane.f32.xlu0 %v42
  %v50 = vpop.xlane.xlu0 %49
  %v51 = vmul.f32 %v44, %v30
  %v52 = vmul.f32 %v46, %v30
  %v53 = vmul.f32 %v48, %v30
  %v54 = vmul.f32 %v50, %v30
  %v55 = vadd.f32 %v51, 1e-05
  %v56 = vadd.f32 %v52, 1e-05
  %v57 = vadd.f32 %v53, 1e-05
  %v58 = vadd.f32 %v54, 1e-05
  %v59 = vrsqrt.pop %v55
  %v60 = vrsqrt.pop %v56
  %v61 = vrsqrt.pop %v57
  %v62 = vrsqrt.pop %v58
  %v63 = vmul.f32 %v35, %v59
  %v64 = vmul.f32 %v36, %v60
  %v65 = vmul.f32 %v37, %v61
  %v66 = vmul.f32 %v38, %v62
  %v67 = vld [vmem:[%s1] sm:$0x1]
  %v69 = vlaneseq
  %v70 = vshrl.u32 %v69, 7
  %v71 = vsub.s32 0, %v70
  %v72 = vrot.slane %v67, %v71
  %v74 = vmul.f32 %v63, %v72
  %v75 = vmul.f32 %v64, %v72
  %v76 = vmul.f32 %v65, %v72
  %v77 = vmul.f32 %v66, %v72
  %v78 = vld [vmem:[%s2] sm:$0x1]
  %v80 = vlaneseq
  %v81 = vshrl.u32 %v80, 7
  %v82 = vsub.s32 0, %v81
  %v83 = vrot.slane %v78, %v82
  %v85 = vadd.f32 %v74, %v83
  %v86 = vadd.f32 %v75, %v83
  %v87 = vadd.f32 %v76, %v83
  %v88 = vadd.f32 %v77, %v83
  %v89 = vpack.c.bf16 %v86, %v85
  %v90 = vpack.c.bf16 %v88, %v87
  %v93 = vunpack.c.l.b16 %v89
  %v94 = vunpack.c.h.b16 %v89
  %v95 = vunpack.c.l.b16 %v90
  %v96 = vunpack.c.h.b16 %v90
  %v97 = vpack.c.b16 %v93, %v93
  %v98 = vpack.c.b16 %v94, %v94
  %v99 = vpack.c.b16 %v95, %v95
  %v100 = vpack.c.b16 %v96, %v96
  %105 = vst [vmem:[%s3] sm:$0xf] %v97
  %106 = vst [vmem:[%s3 + $0x4] sm:$0xf] %v98
  %107 = vst [vmem:[%s3 + $0x8] sm:$0xf] %v99
  %108 = vst [vmem:[%s3 + $0xc] sm:$0xf] %v100
  // Predicated region
  $region14: #{phi_forward.22} parent=0 // pred_check
    _
  $region15: #{phi_forward.22} parent=0 // pred_check_branch
    %110 = sbr.rel (0) target = $region17
  $region16: #{phi_forward.22} parent=0 // pred_region
    _
  $region17: #{phi_forward.22} parent=0 // pred_fallthru
    _
  // Predicated region
  $region18: #{phi_forward.22} parent=0 // pred_check
    _
  $region19: #{phi_forward.22} parent=0 // pred_check_branch
    %112 = sbr.rel (0) target = $region21
  $region20: #{phi_forward.22} parent=0 // pred_region
    _
  $region21: #{phi_forward.22} parent=0 // pred_fallthru
    _

// kernel: phi_forward.16
$region0: #{phi_forward.16}
  #allocation0 [shape = 'u32[]', space=smem, size = 0x4, offset = 0x4, fixed_abs, tag = 'smem constant byte address 0x4 - core index']
  #allocation1 [shape = 'u32[144,128]{1,0:T(1,128)}', space=vmem, size = 0x12000, scoped, tag = 'internal scratch']
  #allocation2 [shape = 'f32[32,128]{1,0:T(8,128)}', space=vmem, size = 0x4000, scoped, tag = 'scratch operand']
  %s0 = inlined_call_operand.vmem [shape: bf16[32,256], index: 0, kind: input, shape index: {}]
  %s1 = inlined_call_operand.vmem [shape: bf16[256,128], index: 1, kind: input, shape index: {}]
  %s2 = inlined_call_operand.vmem [shape: f32[1,128], index: 2, kind: input, shape index: {}]
  %s3 = inlined_call_operand.vmem [shape: bf16[32,128], index: 3, kind: input, shape index: {}]
  %s4 = inlined_call_operand.vmem [shape: bf16[32,128], index: 4, kind: output, shape index: {}]
  %s5 = sld [smem:[#allocation0]]
  $region34: #{phi_forward.16} parent=0
    _
  %s7 = ssub.s32 1, %s5
  %s8 = scalar_select 0, %s7, %s5
  // Predicated region
  $region2: #{phi_forward.16} parent=0 // pred_check
    _
  $region3: #{phi_forward.16} parent=0 // pred_check_branch
    %10 = sbr.rel (0) target = $region5
  $region4: #{phi_forward.16} parent=0 // pred_region
    _
  $region5: #{phi_forward.16} parent=0 // pred_fallthru
    _
  // Predicated region
  $region6: #{phi_forward.16} parent=0 // pred_check
    _
  $region7: #{phi_forward.16} parent=0 // pred_check_branch
    %12 = sbr.rel (0) target = $region9
  $region8: #{phi_forward.16} parent=0 // pred_region
    _
  $region9: #{phi_forward.16} parent=0 // pred_fallthru
    _
  // Predicated region
  $region10: #{phi_forward.16} parent=0 // pred_check
    _
  $region11: #{phi_forward.16} parent=0 // pred_check_branch
    %14 = sbr.rel (0) target = $region13
  $region12: #{phi_forward.16} parent=0 // pred_region
    _
  $region13: #{phi_forward.16} parent=0 // pred_fallthru
    _
  // Predicated region
  $region14: #{phi_forward.16} parent=0 // pred_check
    _
  $region15: #{phi_forward.16} parent=0 // pred_check_branch
    %16 = sbr.rel (0) target = $region17
  $region16: #{phi_forward.16} parent=0 // pred_region
    _
  $region17: #{phi_forward.16} parent=0 // pred_fallthru
    _
  %p18 = scmp.eq.s32.totalorder 0, 0
  // Predicated region
  $region18: #{phi_forward.16} parent=0 // pred_check
    %p19 = pneg %p18
  $region19: #{phi_forward.16} parent=0 // pred_check_branch
    %21 = sbr.rel (%p19) target = $region21
  $region20: #{phi_forward.16} parent=0 // pred_region
    %22 = vst [vmem:[#allocation2] sm:$0xff] 0.0
    %23 = vst [vmem:[#allocation2 + $0x8] sm:$0xff] 0.0
    %24 = vst [vmem:[#allocation2 + $0x10] sm:$0xff] 0.0
    %25 = vst [vmem:[#allocation2 + $0x18] sm:$0xff] 0.0
  $region21: #{phi_forward.16} parent=0 // pred_fallthru
    _
  %v26 = vld [vmem:[#allocation2] sm:$0xff]
  %v27 = vld [vmem:[#allocation2 + $0x8] sm:$0xff]
  %v28 = vld [vmem:[#allocation2 + $0x10] sm:$0xff]
  %v29 = vld [vmem:[#allocation2 + $0x18] sm:$0xff]
  %v30 = vld [vmem:[%s0] sm:$0xff]
  %v31 = vld [vmem:[%s0 + $0x8] sm:$0xff]
  %v32 = vld [vmem:[%s0 + $0x10] sm:$0xff]
  %v33 = vld [vmem:[%s0 + $0x18] sm:$0xff]
  %v34 = vld [vmem:[%s1] sm:$0xf]
  %v35 = vld [vmem:[%s1 + $0x4] sm:$0xf]
  %v36 = vld [vmem:[%s1 + $0x8] sm:$0xf]
  %v37 = vld [vmem:[%s1 + $0xc] sm:$0xf]
  %v38 = vld [vmem:[%s1 + $0x10] sm:$0xf]
  %v39 = vld [vmem:[%s1 + $0x14] sm:$0xf]
  %v40 = vld [vmem:[%s1 + $0x18] sm:$0xf]
  %v41 = vld [vmem:[%s1 + $0x1c] sm:$0xf]
  %v42 = vld [vmem:[%s1 + $0x20] sm:$0xf]
  %v43 = vld [vmem:[%s1 + $0x24] sm:$0xf]
  %v44 = vld [vmem:[%s1 + $0x28] sm:$0xf]
  %v45 = vld [vmem:[%s1 + $0x2c] sm:$0xf]
  %v46 = vld [vmem:[%s1 + $0x30] sm:$0xf]
  %v47 = vld [vmem:[%s1 + $0x34] sm:$0xf]
  %v48 = vld [vmem:[%s1 + $0x38] sm:$0xf]
  %v49 = vld [vmem:[%s1 + $0x3c] sm:$0xf]
  %v50 = vld [vmem:[%s1 + $0x40] sm:$0xf]
  %v51 = vld [vmem:[%s1 + $0x44] sm:$0xf]
  %v52 = vld [vmem:[%s1 + $0x48] sm:$0xf]
  %v53 = vld [vmem:[%s1 + $0x4c] sm:$0xf]
  %v54 = vld [vmem:[%s1 + $0x50] sm:$0xf]
  %v55 = vld [vmem:[%s1 + $0x54] sm:$0xf]
  %v56 = vld [vmem:[%s1 + $0x58] sm:$0xf]
  %v57 = vld [vmem:[%s1 + $0x5c] sm:$0xf]
  %v58 = vld [vmem:[%s1 + $0x60] sm:$0xf]
  %v59 = vld [vmem:[%s1 + $0x64] sm:$0xf]
  %v60 = vld [vmem:[%s1 + $0x68] sm:$0xf]
  %v61 = vld [vmem:[%s1 + $0x6c] sm:$0xf]
  %v62 = vld [vmem:[%s1 + $0x70] sm:$0xf]
  %v63 = vld [vmem:[%s1 + $0x74] sm:$0xf]
  %v64 = vld [vmem:[%s1 + $0x78] sm:$0xf]
  %v65 = vld [vmem:[%s1 + $0x7c] sm:$0xf]
  %v70 = vunpack.c.l.b16 %v30
  %v71 = vunpack.c.h.b16 %v30
  %v72 = vunpack.c.l.b16 %v31
  %v73 = vunpack.c.h.b16 %v31
  %v74 = vunpack.c.l.b16 %v32
  %v75 = vunpack.c.h.b16 %v32
  %v76 = vunpack.c.l.b16 %v33
  %v77 = vunpack.c.h.b16 %v33
  %v78 = vpack.c.b16 %v72, %v70
  %v79 = vpack.c.b16 %v73, %v71
  %v80 = vpack.c.b16 %v76, %v74
  %v81 = vpack.c.b16 %v77, %v75
  %v118 = vunpack.c.l.b16 %v34
  %v119 = vunpack.c.l.b16 %v35
  %v120 = vunpack.c.l.b16 %v36
  %v121 = vunpack.c.l.b16 %v37
  %v122 = vunpack.c.l.b16 %v38
  %v123 = vunpack.c.l.b16 %v39
  %v124 = vunpack.c.l.b16 %v40
  %v125 = vunpack.c.l.b16 %v41
  %v126 = vunpack.c.l.b16 %v42
  %v127 = vunpack.c.l.b16 %v43
  %v128 = vunpack.c.l.b16 %v44
  %v129 = vunpack.c.l.b16 %v45
  %v130 = vunpack.c.l.b16 %v46
  %v131 = vunpack.c.l.b16 %v47
  %v132 = vunpack.c.l.b16 %v48
  %v133 = vunpack.c.l.b16 %v49
  %v134 = vunpack.c.l.b16 %v50
  %v135 = vunpack.c.l.b16 %v51
  %v136 = vunpack.c.l.b16 %v52
  %v137 = vunpack.c.l.b16 %v53
  %v138 = vunpack.c.l.b16 %v54
  %v139 = vunpack.c.l.b16 %v55
  %v140 = vunpack.c.l.b16 %v56
  %v141 = vunpack.c.l.b16 %v57
  %v142 = vunpack.c.l.b16 %v58
  %v143 = vunpack.c.l.b16 %v59
  %v144 = vunpack.c.l.b16 %v60
  %v145 = vunpack.c.l.b16 %v61
  %v146 = vunpack.c.l.b16 %v62
  %v147 = vunpack.c.l.b16 %v63
  %v148 = vunpack.c.l.b16 %v64
  %v149 = vunpack.c.l.b16 %v65
  %v150 = vpack.c.b16 %v119, %v118
  %v151 = vpack.c.b16 %v121, %v120
  %v152 = vpack.c.b16 %v123, %v122
  %v153 = vpack.c.b16 %v125, %v124
  %v154 = vpack.c.b16 %v127, %v126
  %v155 = vpack.c.b16 %v129, %v128
  %v156 = vpack.c.b16 %v131, %v130
  %v157 = vpack.c.b16 %v133, %v132
  %v158 = vpack.c.b16 %v135, %v134
  %v159 = vpack.c.b16 %v137, %v136
  %v160 = vpack.c.b16 %v139, %v138
  %v161 = vpack.c.b16 %v141, %v140
  %v162 = vpack.c.b16 %v143, %v142
  %v163 = vpack.c.b16 %v145, %v144
  %v164 = vpack.c.b16 %v147, %v146
  %v165 = vpack.c.b16 %v149, %v148
  %182 = vmatprep.subr.bf16.mxu0 0
  %183 = vmatpush1.bf16.msra.mxu0 %v150
  %184 = vmatprep.subr.bf16.mxu0 0
  %185 = vmatpush1.bf16.msra.mxu0 %v151
  %186 = vmatprep.subr.bf16.mxu0 0
  %187 = vmatpush1.bf16.msra.mxu0 %v152
  %188 = vmatprep.subr.bf16.mxu0 0
  %189 = vmatpush1.bf16.msra.mxu0 %v153
  %190 = vmatprep.subr.bf16.mxu0 0
  %191 = vmatpush1.bf16.msra.mxu0 %v154
  %192 = vmatprep.subr.bf16.mxu0 0
  %193 = vmatpush1.bf16.msra.mxu0 %v155
  %194 = vmatprep.subr.bf16.mxu0 0
  %195 = vmatpush1.bf16.msra.mxu0 %v156
  %196 = vmatprep.subr.bf16.mxu0 0
  %197 = vmatpush1.bf16.msra.mxu0 %v157
  %198 = vmatprep.subr.bf16.mxu0 0
  %199 = vmatpush1.bf16.msra.mxu0 %v158
  %200 = vmatprep.subr.bf16.mxu0 0
  %201 = vmatpush1.bf16.msra.mxu0 %v159
  %202 = vmatprep.subr.bf16.mxu0 0
  %203 = vmatpush1.bf16.msra.mxu0 %v160
  %204 = vmatprep.subr.bf16.mxu0 0
  %205 = vmatpush1.bf16.msra.mxu0 %v161
  %206 = vmatprep.subr.bf16.mxu0 0
  %207 = vmatpush1.bf16.msra.mxu0 %v162
  %208 = vmatprep.subr.bf16.mxu0 0
  %209 = vmatpush1.bf16.msra.mxu0 %v163
  %210 = vmatprep.subr.bf16.mxu0 0
  %211 = vmatpush1.bf16.msra.mxu0 %v164
  %212 = vmatprep.subr.bf16.mxu0 0
  %213 = vmatpush1.bf16.msra.mxu0 %v165
  %214 = vmatprep.mubr.bf16.mxu0 %v79
  %215 = vmatmul.mubr.bf16.gmra.mrb[0].mxu0 %v78
  %v216 = vpop.f32.mrb[0].mxu0
  %v217 = vadd.f32 0.0, %v216
  %v218 = vpop.f32.mrb[0].mxu0
  %v219 = vpop.f32.mrb[0].mxu0
  %v220 = vadd.f32 0.0, %v219
  %v221 = vpop.f32.mrb[0].mxu0
  %222 = vmatprep.mubr.bf16.mxu0 %v81
  %223 = vmatmul.mubr.bf16.gmra.mrb[0].mxu0 %v80
  %v224 = vpop.f32.mrb[0].mxu0
  %v225 = vadd.f32 0.0, %v224
  %v226 = vpop.f32.mrb[0].mxu0
  %v227 = vpop.f32.mrb[0].mxu0
  %v228 = vadd.f32 0.0, %v227
  %v229 = vpop.f32.mrb[0].mxu0
  %230 = vdwg.mxu0
  %v231 = vadd.f32 %v26, %v217
  %v232 = vadd.f32 %v27, %v220
  %v233 = vadd.f32 %v28, %v225
  %v234 = vadd.f32 %v29, %v228
  %235 = vst [vmem:[#allocation2] sm:$0xff] %v231
  %236 = vst [vmem:[#allocation2 + $0x8] sm:$0xff] %v232
  %237 = vst [vmem:[#allocation2 + $0x10] sm:$0xff] %v233
  %238 = vst [vmem:[#allocation2 + $0x18] sm:$0xff] %v234
  // Predicated region
  $region22: #{phi_forward.16} parent=0 // pred_check
    %p239 = pneg %p18
  $region23: #{phi_forward.16} parent=0 // pred_check_branch
    %241 = sbr.rel (%p239) target = $region25
  $region24: #{phi_forward.16} parent=0 // pred_region
    %v242 = vld [vmem:[#allocation2] sm:$0xff]
    %v243 = vld [vmem:[#allocation2 + $0x8] sm:$0xff]
    %v244 = vld [vmem:[#allocation2 + $0x10] sm:$0xff]
    %v245 = vld [vmem:[#allocation2 + $0x18] sm:$0xff]
    %v246 = vld [vmem:[%s2] sm:$0x1]
    %v248 = vlaneseq
    %v249 = vshrl.u32 %v248, 7
    %v250 = vsub.s32 0, %v249
    %v251 = vrot.slane %v246, %v250
    %v253 = vadd.f32 %v242, %v251
    %v254 = vadd.f32 %v243, %v251
    %v255 = vadd.f32 %v244, %v251
    %v256 = vadd.f32 %v245, %v251
    %v257 = vld [vmem:[%s3] sm:$0xf]
    %v258 = vld [vmem:[%s3 + $0x4] sm:$0xf]
    %v259 = vld [vmem:[%s3 + $0x8] sm:$0xf]
    %v260 = vld [vmem:[%s3 + $0xc] sm:$0xf]
    %v261 = vunpack.c.l.bf16 %v257
    %v262 = vunpack.c.l.bf16 %v258
    %v263 = vunpack.c.l.bf16 %v259
    %v264 = vunpack.c.l.bf16 %v260
    %v265 = vadd.f32 %v253, %v261
    %v266 = vadd.f32 %v254, %v262
    %v267 = vadd.f32 %v255, %v263
    %v268 = vadd.f32 %v256, %v264
    %v269 = vpack.c.bf16 %v266, %v265
    %v270 = vpack.c.bf16 %v268, %v267
    %v273 = vunpack.c.l.b16 %v269
    %v274 = vunpack.c.h.b16 %v269
    %v275 = vunpack.c.l.b16 %v270
    %v276 = vunpack.c.h.b16 %v270
    %v277 = vpack.c.b16 %v273, %v273
    %v278 = vpack.c.b16 %v274, %v274
    %v279 = vpack.c.b16 %v275, %v275
    %v280 = vpack.c.b16 %v276, %v276
    %285 = vst [vmem:[%s4] sm:$0xf] %v277
    %286 = vst [vmem:[%s4 + $0x4] sm:$0xf] %v278
    %287 = vst [vmem:[%s4 + $0x8] sm:$0xf] %v279
    %288 = vst [vmem:[%s4 + $0xc] sm:$0xf] %v280
  $region25: #{phi_forward.16} parent=0 // pred_fallthru
    _
  // Predicated region
  $region26: #{phi_forward.16} parent=0 // pred_check
    _
  $region27: #{phi_forward.16} parent=0 // pred_check_branch
    %290 = sbr.rel (0) target = $region29
  $region28: #{phi_forward.16} parent=0 // pred_region
    _
  $region29: #{phi_forward.16} parent=0 // pred_fallthru
    _
  // Predicated region
  $region30: #{phi_forward.16} parent=0 // pred_check
    _
  $region31: #{phi_forward.16} parent=0 // pred_check_branch
    %292 = sbr.rel (0) target = $region33
  $region32: #{phi_forward.16} parent=0 // pred_region
    _
  $region33: #{phi_forward.16} parent=0 // pred_fallthru
    _

// kernel: phi_forward.23
$region0: #{phi_forward.23}
  #allocation0 [shape = 'u32[]', space=smem, size = 0x4, offset = 0x4, fixed_abs, tag = 'smem constant byte address 0x4 - core index']
  #allocation1 [shape = 'u32[144,128]{1,0:T(1,128)}', space=vmem, size = 0x12000, scoped, tag = 'internal scratch']
  #allocation2 [shape = 'f32[32,256]{1,0:T(8,128)}', space=vmem, size = 0x8000, scoped, tag = 'scratch operand']
  %s0 = inlined_call_operand.vmem [shape: bf16[32,128], index: 0, kind: input, shape index: {}]
  %s1 = inlined_call_operand.vmem [shape: bf16[128,256], index: 1, kind: input, shape index: {}]
  %s2 = inlined_call_operand.vmem [shape: f32[1,256], index: 2, kind: input, shape index: {}]
  %s3 = inlined_call_operand.hbm [shape: f32[32,256], index: 3, kind: output, shape index: {}]
  %s4 = sld [smem:[#allocation0]]
  $region30: #{phi_forward.23} parent=0
    _
  %s6 = ssub.s32 1, %s4
  %s7 = scalar_select 0, %s6, %s4
  $region1: #{phi_forward.23} parent=0
    #allocation3 [shape = 'u8[32768]{0}', space=vmem, size = 0x8000, scoped, tag = 'output window, operand 0, single buffered']
    #allocation4 [shape = 's32[1]{0}', space=sflag, size = 0x4, scoped, tag = 'scoped memory for phi_forward.23']
    %8 = vsyncpa [#allocation4], 0
    // Predicated region
    $region2: #{phi_forward.23} parent=1 // pred_check
      _
    $region3: #{phi_forward.23} parent=1 // pred_check_branch
      %10 = sbr.rel (0) target = $region5
    $region4: #{phi_forward.23} parent=1 // pred_region
      _
    $region5: #{phi_forward.23} parent=1 // pred_fallthru
      _
    // Predicated region
    $region6: #{phi_forward.23} parent=1 // pred_check
      _
    $region7: #{phi_forward.23} parent=1 // pred_check_branch
      %12 = sbr.rel (0) target = $region9
    $region8: #{phi_forward.23} parent=1 // pred_region
      _
    $region9: #{phi_forward.23} parent=1 // pred_fallthru
      _
    // Predicated region
    $region10: #{phi_forward.23} parent=1 // pred_check
      _
    $region11: #{phi_forward.23} parent=1 // pred_check_branch
      %14 = sbr.rel (0) target = $region13
    $region12: #{phi_forward.23} parent=1 // pred_region
      _
    $region13: #{phi_forward.23} parent=1 // pred_fallthru
      _
    %p16 = scmp.eq.s32.totalorder 0, 0
    // Predicated region
    $region14: #{phi_forward.23} parent=1 // pred_check
      %p17 = pneg %p16
    $region15: #{phi_forward.23} parent=1 // pred_check_branch
      %19 = sbr.rel (%p17) target = $region17
    $region16: #{phi_forward.23} parent=1 // pred_region
      %20 = vst [vmem:[#allocation2] sm:$0xff] 0.0
      %21 = vst [vmem:[#allocation2 + $0x8] sm:$0xff] 0.0
      %22 = vst [vmem:[#allocation2 + $0x10] sm:$0xff] 0.0
      %23 = vst [vmem:[#allocation2 + $0x18] sm:$0xff] 0.0
      %24 = vst [vmem:[#allocation2 + $0x20] sm:$0xff] 0.0
      %25 = vst [vmem:[#allocation2 + $0x28] sm:$0xff] 0.0
      %26 = vst [vmem:[#allocation2 + $0x30] sm:$0xff] 0.0
      %27 = vst [vmem:[#allocation2 + $0x38] sm:$0xff] 0.0
    $region17: #{phi_forward.23} parent=1 // pred_fallthru
      _
    %v28 = vld [vmem:[#allocation2] sm:$0xff]
    %v29 = vld [vmem:[#allocation2 + $0x8] sm:$0xff]
    %v30 = vld [vmem:[#allocation2 + $0x10] sm:$0xff]
    %v31 = vld [vmem:[#allocation2 + $0x18] sm:$0xff]
    %v32 = vld [vmem:[#allocation2 + $0x20] sm:$0xff]
    %v33 = vld [vmem:[#allocation2 + $0x28] sm:$0xff]
    %v34 = vld [vmem:[#allocation2 + $0x30] sm:$0xff]
    %v35 = vld [vmem:[#allocation2 + $0x38] sm:$0xff]
    %v36 = vld [vmem:[%s0] sm:$0xf]
    %v37 = vld [vmem:[%s0 + $0x4] sm:$0xf]
    %v38 = vld [vmem:[%s0 + $0x8] sm:$0xf]
    %v39 = vld [vmem:[%s0 + $0xc] sm:$0xf]
    %v40 = vld [vmem:[%s1] sm:$0xff]
    %v41 = vld [vmem:[%s1 + $0x8] sm:$0xff]
    %v42 = vld [vmem:[%s1 + $0x10] sm:$0xff]
    %v43 = vld [vmem:[%s1 + $0x18] sm:$0xff]
    %v44 = vld [vmem:[%s1 + $0x20] sm:$0xff]
    %v45 = vld [vmem:[%s1 + $0x28] sm:$0xff]
    %v46 = vld [vmem:[%s1 + $0x30] sm:$0xff]
    %v47 = vld [vmem:[%s1 + $0x38] sm:$0xff]
    %v48 = vld [vmem:[%s1 + $0x40] sm:$0xff]
    %v49 = vld [vmem:[%s1 + $0x48] sm:$0xff]
    %v50 = vld [vmem:[%s1 + $0x50] sm:$0xff]
    %v51 = vld [vmem:[%s1 + $0x58] sm:$0xff]
    %v52 = vld [vmem:[%s1 + $0x60] sm:$0xff]
    %v53 = vld [vmem:[%s1 + $0x68] sm:$0xff]
    %v54 = vld [vmem:[%s1 + $0x70] sm:$0xff]
    %v55 = vld [vmem:[%s1 + $0x78] sm:$0xff]
    %v60 = vunpack.c.l.b16 %v36
    %v61 = vunpack.c.l.b16 %v37
    %v62 = vunpack.c.l.b16 %v38
    %v63 = vunpack.c.l.b16 %v39
    %v64 = vpack.c.b16 %v61, %v60
    %v65 = vpack.c.b16 %v63, %v62
    %v84 = vunpack.c.l.b16 %v40
    %v85 = vunpack.c.h.b16 %v40
    %v86 = vunpack.c.l.b16 %v41
    %v87 = vunpack.c.h.b16 %v41
    %v88 = vunpack.c.l.b16 %v42
    %v89 = vunpack.c.h.b16 %v42
    %v90 = vunpack.c.l.b16 %v43
    %v91 = vunpack.c.h.b16 %v43
    %v92 = vunpack.c.l.b16 %v44
    %v93 = vunpack.c.h.b16 %v44
    %v94 = vunpack.c.l.b16 %v45
    %v95 = vunpack.c.h.b16 %v45
    %v96 = vunpack.c.l.b16 %v46
    %v97 = vunpack.c.h.b16 %v46
    %v98 = vunpack.c.l.b16 %v47
    %v99 = vunpack.c.h.b16 %v47
    %v100 = vunpack.c.l.b16 %v48
    %v101 = vunpack.c.h.b16 %v48
    %v102 = vunpack.c.l.b16 %v49
    %v103 = vunpack.c.h.b16 %v49
    %v104 = vunpack.c.l.b16 %v50
    %v105 = vunpack.c.h.b16 %v50
    %v106 = vunpack.c.l.b16 %v51
    %v107 = vunpack.c.h.b16 %v51
    %v108 = vunpack.c.l.b16 %v52
    %v109 = vunpack.c.h.b16 %v52
    %v110 = vunpack.c.l.b16 %v53
    %v111 = vunpack.c.h.b16 %v53
    %v112 = vunpack.c.l.b16 %v54
    %v113 = vunpack.c.h.b16 %v54
    %v114 = vunpack.c.l.b16 %v55
    %v115 = vunpack.c.h.b16 %v55
    %v116 = vpack.c.b16 %v86, %v84
    %v117 = vpack.c.b16 %v87, %v85
    %v118 = vpack.c.b16 %v90, %v88
    %v119 = vpack.c.b16 %v91, %v89
    %v120 = vpack.c.b16 %v94, %v92
    %v121 = vpack.c.b16 %v95, %v93
    %v122 = vpack.c.b16 %v98, %v96
    %v123 = vpack.c.b16 %v99, %v97
    %v124 = vpack.c.b16 %v102, %v100
    %v125 = vpack.c.b16 %v103, %v101
    %v126 = vpack.c.b16 %v106, %v104
    %v127 = vpack.c.b16 %v107, %v105
    %v128 = vpack.c.b16 %v110, %v108
    %v129 = vpack.c.b16 %v111, %v109
    %v130 = vpack.c.b16 %v114, %v112
    %v131 = vpack.c.b16 %v115, %v113
    %148 = vmatprep.subr.bf16.mxu0 %v117
    %149 = vmatpush1.bf16.msra.mxu0 %v116
    %150 = vmatprep.subr.bf16.mxu0 %v119
    %151 = vmatpush1.bf16.msra.mxu0 %v118
    %152 = vmatprep.subr.bf16.mxu0 %v121
    %153 = vmatpush1.bf16.msra.mxu0 %v120
    %154 = vmatprep.subr.bf16.mxu0 %v123
    %155 = vmatpush1.bf16.msra.mxu0 %v122
    %156 = vmatprep.subr.bf16.mxu0 %v125
    %157 = vmatpush1.bf16.msra.mxu0 %v124
    %158 = vmatprep.subr.bf16.mxu0 %v127
    %159 = vmatpush1.bf16.msra.mxu0 %v126
    %160 = vmatprep.subr.bf16.mxu0 %v129
    %161 = vmatpush1.bf16.msra.mxu0 %v128
    %162 = vmatprep.subr.bf16.mxu0 %v131
    %163 = vmatpush1.bf16.msra.mxu0 %v130
    %164 = vmatprep.subr.bf16.mxu0 0
    %165 = vmatpush1.bf16.msra.mxu0 0
    %166 = vmatprep.subr.bf16.mxu0 0
    %167 = vmatpush1.bf16.msra.mxu0 0
    %168 = vmatprep.subr.bf16.mxu0 0
    %169 = vmatpush1.bf16.msra.mxu0 0
    %170 = vmatprep.subr.bf16.mxu0 0
    %171 = vmatpush1.bf16.msra.mxu0 0
    %172 = vmatprep.subr.bf16.mxu0 0
    %173 = vmatpush1.bf16.msra.mxu0 0
    %174 = vmatprep.subr.bf16.mxu0 0
    %175 = vmatpush1.bf16.msra.mxu0 0
    %176 = vmatprep.subr.bf16.mxu0 0
    %177 = vmatpush1.bf16.msra.mxu0 0
    %178 = vmatprep.subr.bf16.mxu0 0
    %179 = vmatpush1.bf16.msra.mxu0 0
    %180 = vmatprep.mubr.bf16.mxu0 0
    %181 = vmatmul.mubr.bf16.gmra.mrb[0].mxu0 %v64
    %v182 = vpop.f32.mrb[0].mxu0
    %v183 = vadd.f32 0.0, %v182
    %v184 = vpop.f32.mrb[0].mxu0
    %v185 = vadd.f32 0.0, %v184
    %v186 = vpop.f32.mrb[0].mxu0
    %v187 = vadd.f32 0.0, %v186
    %v188 = vpop.f32.mrb[0].mxu0
    %v189 = vadd.f32 0.0, %v188
    %190 = vmatprep.mubr.bf16.mxu0 0
    %191 = vmatmul.mubr.bf16.gmra.mrb[0].mxu0 %v65
    %v192 = vpop.f32.mrb[0].mxu0
    %v193 = vadd.f32 0.0, %v192
    %v194 = vpop.f32.mrb[0].mxu0
    %v195 = vadd.f32 0.0, %v194
    %v196 = vpop.f32.mrb[0].mxu0
    %v197 = vadd.f32 0.0, %v196
    %v198 = vpop.f32.mrb[0].mxu0
    %v199 = vadd.f32 0.0, %v198
    %200 = vdwg.mxu0
    %v201 = vadd.f32 %v28, %v183
    %v202 = vadd.f32 %v29, %v185
    %v203 = vadd.f32 %v30, %v187
    %v204 = vadd.f32 %v31, %v189
    %v205 = vadd.f32 %v32, %v193
    %v206 = vadd.f32 %v33, %v195
    %v207 = vadd.f32 %v34, %v197
    %v208 = vadd.f32 %v35, %v199
    %209 = vst [vmem:[#allocation2] sm:$0xff] %v201
    %210 = vst [vmem:[#allocation2 + $0x8] sm:$0xff] %v202
    %211 = vst [vmem:[#allocation2 + $0x10] sm:$0xff] %v203
    %212 = vst [vmem:[#allocation2 + $0x18] sm:$0xff] %v204
    %213 = vst [vmem:[#allocation2 + $0x20] sm:$0xff] %v205
    %214 = vst [vmem:[#allocation2 + $0x28] sm:$0xff] %v206
    %215 = vst [vmem:[#allocation2 + $0x30] sm:$0xff] %v207
    %216 = vst [vmem:[#allocation2 + $0x38] sm:$0xff] %v208
    // Predicated region
    $region18: #{phi_forward.23} parent=1 // pred_check
      %p217 = pneg %p16
    $region19: #{phi_forward.23} parent=1 // pred_check_branch
      %219 = sbr.rel (%p217) target = $region21
    $region20: #{phi_forward.23} parent=1 // pred_region
      %v220 = vld [vmem:[#allocation2] sm:$0xff]
      %v221 = vld [vmem:[#allocation2 + $0x8] sm:$0xff]
      %v222 = vld [vmem:[#allocation2 + $0x10] sm:$0xff]
      %v223 = vld [vmem:[#allocation2 + $0x18] sm:$0xff]
      %v224 = vld [vmem:[#allocation2 + $0x20] sm:$0xff]
      %v225 = vld [vmem:[#allocation2 + $0x28] sm:$0xff]
      %v226 = vld [vmem:[#allocation2 + $0x30] sm:$0xff]
      %v227 = vld [vmem:[#allocation2 + $0x38] sm:$0xff]
      %v228 = vld [vmem:[%s2] sm:$0x3]
      %v230 = vlaneseq
      %v231 = vshrl.u32 %v230, 7
      %v232 = vsub.s32 0, %v231
      %v233 = vrot.slane %v228, %v232
      %v234 = vlaneseq
      %v235 = vshrl.u32 %v234, 7
      %v236 = vsub.s32 1, %v235
      %v237 = vrot.slane %v228, %v236
      %v240 = vadd.f32 %v220, %v233
      %v241 = vadd.f32 %v221, %v237
      %v242 = vadd.f32 %v222, %v233
      %v243 = vadd.f32 %v223, %v237
      %v244 = vadd.f32 %v224, %v233
      %v245 = vadd.f32 %v225, %v237
      %v246 = vadd.f32 %v226, %v233
      %v247 = vadd.f32 %v227, %v237
      %248 = vst [vmem:[#allocation3] sm:$0xff] %v240
      %249 = vst [vmem:[#allocation3 + $0x8] sm:$0xff] %v241
      %250 = vst [vmem:[#allocation3 + $0x10] sm:$0xff] %v242
      %251 = vst [vmem:[#allocation3 + $0x18] sm:$0xff] %v243
      %252 = vst [vmem:[#allocation3 + $0x20] sm:$0xff] %v244
      %253 = vst [vmem:[#allocation3 + $0x28] sm:$0xff] %v245
      %254 = vst [vmem:[#allocation3 + $0x30] sm:$0xff] %v246
      %255 = vst [vmem:[#allocation3 + $0x38] sm:$0xff] %v247
    $region21: #{phi_forward.23} parent=1 // pred_fallthru
      _
    // Predicated region
    $region22: #{phi_forward.23} parent=1 // pred_check
      _
    $region23: #{phi_forward.23} parent=1 // pred_check_branch
      %257 = sbr.rel (0) target = $region25
    $region24: #{phi_forward.23} parent=1 // pred_region
      %s259 = ssub.s32 1024, 1024
      %260 = vsyncadd [#allocation4], %s259
      %s261 = sshll.u32 [#allocation3], 4
      %s262 = int_to_ptr.vmem [resolvable:$true] %s261
      %267 = dma.vmem_to_hbm [thread:$0]  %s262, 1024, %s3, [#allocation4], 256, 256, 16
    $region25: #{phi_forward.23} parent=1 // pred_fallthru
      _
    // Predicated region
    $region26: #{phi_forward.23} parent=1 // pred_check
      _
    $region27: #{phi_forward.23} parent=1 // pred_check_branch
      %269 = sbr.rel (0) target = $region29
    $region28: #{phi_forward.23} parent=1 // pred_region
      %270 = dma.done [#allocation4], 1024
    $region29: #{phi_forward.23} parent=1 // pred_fallthru
      _
    %271 = vsyncpa [#allocation4], 1

</llo_original>
